<compile_context>
chip_gen: v6e
topology: v6e:2x2x1
jax: 0.10.0
libtpu: 0.0.40
codegen_flags: <defaults>
</compile_context>

<pallas_src>
import jax
import jax.numpy as jnp
from jax.experimental import pallas as pl
from jax.experimental.pallas import tpu as pltpu


# ------------------------------- fused kernel -------------------------------

def fused_msf_kernel(x1_ref, x2_ref, x3_ref, x4_ref,
                     wd1_ref, bd1_ref, wd2_ref, bd2_ref, wd3_ref, bd3_ref,
                     wc1_ref, bc1_ref, wc2_ref, bc2_ref, wc34_ref, bc34_ref,
                     out_ref):
    """One tile of `m` packed rows (each row = 2 adjacent final output pixels).

    Activation layout: (P, m, C) — P = quadtree-ordered footprint position,
    m = packed final-pixel pairs, C = pixel-packed channels on the lane axis.
    """
    f32, bf16 = jnp.float32, jnp.bfloat16

    def down_pool(x_bf16, w_ref, b_ref):
        # 1x1 conv as ONE stacked matmul (f32 MXU accumulation) fused with the
        # 2x2/2 maxpool: quadtree ordering makes each pooled cell 4 consecutive
        # leading-axis slices -> single grouped max, no stack / lane movement.
        p, m, k = x_bf16.shape
        n = w_ref.shape[-1]
        y = jnp.dot(x_bf16.reshape(p * m, k), w_ref[...],
                    preferred_element_type=f32) + b_ref[...]
        return jnp.max(y.reshape(p // 4, 4, m, n), axis=1)      # (p//4, m, n) f32

    def patch_conv(x_f32, w_ref, b_ref):
        # kxk / stride-k conv: contract the footprint axis with an unrolled
        # chain of MXU dots into ONE f32 accumulator (no (P, m, N) f32 blob).
        p = x_f32.shape[0]
        acc = jnp.dot(x_f32[0].astype(bf16), w_ref[0], preferred_element_type=f32)
        for q in range(1, p):
            acc = acc + jnp.dot(x_f32[q].astype(bf16), w_ref[q],
                                preferred_element_type=f32)
        return acc + b_ref[...]

    # d1 = down1(x1);  w1*conv1(d1)   (w1 folded into wc1/bc1 in the wrapper)
    d1 = down_pool(x1_ref[...], wd1_ref, bd1_ref)               # (16, m, 128) f32
    o1 = patch_conv(d1, wc1_ref, bc1_ref)                       # (m, 256)     f32

    # d2 = down2(x2 + d1);  w2*conv2(d2)
    s2 = (x2_ref[...].astype(f32) + d1).astype(bf16)
    d2 = down_pool(s2, wd2_ref, bd2_ref)                        # (4, m, 256)  f32
    o2 = patch_conv(d2, wc2_ref, bc2_ref)                       # (m, 256)     f32

    # d3 = down3(x3 + d2)
    s3 = (x3_ref[...].astype(f32) + d2).astype(bf16)
    d3 = down_pool(s3, wd3_ref, bd3_ref)[0]                     # (m, 256)     f32

    # w3*conv3(d3) + w4*conv4(x4 + d3) fused into ONE K=512 matmul.
    s4 = x4_ref[...].astype(f32) + d3
    lhs34 = jnp.concatenate([d3.astype(bf16), s4.astype(bf16)], axis=-1)
    o34 = jnp.dot(lhs34, wc34_ref[...], preferred_element_type=f32) + bc34_ref[...]

    out_ref[...] = (o1 + o2 + o34).astype(out_ref.dtype)


# ------------------------------ wrapper / glue -------------------------------

def _round_up(x, m):
    return ((x + m - 1) // m) * m


def _footprint(x_nchw, fp, dtype):
    """(B,C,H,W) -> (fp*fp, B*Ho*Wo, C).  Footprint positions are emitted in
    quadtree (nested 2x2) order so every 2x2/2 maxpool down the chain is a max
    over 4 *consecutive* leading slices."""
    b, c, h, w = x_nchw.shape
    lvl = fp.bit_length() - 1                        # fp = 2**lvl
    ho, wo = h // fp, w // fp
    x = x_nchw.astype(dtype).transpose(0, 2, 3, 1)   # cast first: half the bytes
    x = x.reshape((b, ho) + (2,) * lvl + (wo,) + (2,) * lvl + (c,))
    perm = []
    for k in range(lvl):                             # (r_k, c_k), most significant first
        perm += [2 + k, lvl + 3 + k]
    perm += [0, 1, lvl + 2, x.ndim - 1]
    x = x.transpose(perm)
    return x.reshape(fp * fp, b * ho * wo, c)


def _pack_pairs(x, m_pad):
    """(P, M, C) -> (P, m_pad//2, 2C): zero-pad pixel axis to m_pad, then pack
    adjacent final pixels into the lane axis (free row-major reshape)."""
    p, m, c = x.shape
    if m != m_pad:
        x = jnp.pad(x, ((0, 0), (0, m_pad - m), (0, 0)))
    return x.reshape(p, m_pad // 2, 2 * c)


def _pw(w):                        # (Cout, Cin, 1, 1) -> (Cin, Cout)  f32
    return w.reshape(w.shape[0], w.shape[1]).T


def _quad_patch(w):                # (Cout, Cin, k, k) -> (k*k, Cin, Cout), quadtree order
    co, ci, kh, kw = w.shape
    if kh == 4:
        w = w.reshape(co, ci, 2, 2, 2, 2)            # (co, ci, rA, rB, cA, cB): r = 2*rA+rB
        w = w.transpose(2, 4, 3, 5, 1, 0)            # (rA, cA, rB, cB, ci, co)
        return w.reshape(kh * kw, ci, co)
    return w.transpose(2, 3, 1, 0).reshape(kh * kw, ci, co)   # 2x2: quad == row-major


def _bd2(w):                       # (..., K, N) -> (..., 2K, 2N) block-diag (pixel packing)
    k, n = w.shape[-2:]
    z = jnp.zeros(w.shape[:-2] + (k, n), w.dtype)
    top = jnp.concatenate([w, z], axis=-1)
    bot = jnp.concatenate([z, w], axis=-1)
    return jnp.concatenate([top, bot], axis=-2)


def _b2(b):                        # (C,) -> (1, 2C) f32 pixel-packed bias row
    return jnp.concatenate([b, b]).reshape(1, -1).astype(jnp.float32)


def fussion_forward(params, x1, x2, x3, x4):
    cdt = jnp.bfloat16             # matmul-operand dtype (f32 accumulation in-kernel)
    B, _, H, W = x1.shape
    hf, wf = H // 8, W // 8
    mf = B * hf * wf               # number of final output pixels

    # --- tile policy: packed rows (2 pixels/row), multiple of 16, capped at 128
    mp = _round_up(mf, 2) // 2
    tmh = min(128, _round_up(mp, 16))       # 128 packed rows = 256 pixels (v7x-safe)
    mp_pad = _round_up(mp, tmh)
    m_pad = 2 * mp_pad
    grid = (mp_pad // tmh,)

    # --- activations: quadtree footprint, bf16, pixel pairs packed on lanes ---
    x1a = _pack_pairs(_footprint(x1, 8, cdt), m_pad)            # (64, Mp, 128)
    x2a = _pack_pairs(_footprint(x2, 4, cdt), m_pad)            # (16, Mp, 128)
    x3a = _pack_pairs(_footprint(x3, 2, cdt), m_pad)            # (4,  Mp, 256)
    x4a = x4.astype(cdt).transpose(0, 2, 3, 1).reshape(mf, 128)
    if mf != m_pad:
        x4a = jnp.pad(x4a, ((0, m_pad - mf), (0, 0)))
    x4a = x4a.reshape(mp_pad, 256)                              # (Mp, 256)

    # --- weights: block-diagonal (pixel packing); w1..w4 folded in ------------
    wd1 = _bd2(_pw(params['down1_w'])).astype(cdt)              # (128, 128)
    wd2 = _bd2(_pw(params['down2_w'])).astype(cdt)              # (128, 256)
    wd3 = _bd2(_pw(params['down3_w'])).astype(cdt)              # (256, 256)
    bd1, bd2, bd3 = (_b2(params['down1_b']), _b2(params['down2_b']),
                     _b2(params['down3_b']))
    wc1 = _bd2(_quad_patch(params['conv1_w'] * params['w1'])).astype(cdt)   # (16,128,256)
    bc1 = _b2(params['conv1_b'] * params['w1'])
    wc2 = _bd2(_quad_patch(params['conv2_w'] * params['w2'])).astype(cdt)   # (4,256,256)
    bc2 = _b2(params['conv2_b'] * params['w2'])
    wc34 = jnp.concatenate([_bd2(_pw(params['conv3_w'] * params['w3'])),
                            _bd2(_pw(params['conv4_w'] * params['w4']))],
                           axis=0).astype(cdt)                              # (512, 256)
    bc34 = _b2(params['w3'] * params['conv3_b'] + params['w4'] * params['conv4_b'])

    vmem = pl.BlockSpec(memory_space=pltpu.MemorySpace.VMEM)    # whole array, resident

    out_flat = pl.pallas_call(
        fused_msf_kernel,
        out_shape=jax.ShapeDtypeStruct((mp_pad, 256), jnp.float32),
        grid=grid,
        in_specs=[pl.BlockSpec((64, tmh, 128), lambda i: (0, i, 0)),   # x1
                  pl.BlockSpec((16, tmh, 128), lambda i: (0, i, 0)),   # x2
                  pl.BlockSpec((4, tmh, 256), lambda i: (0, i, 0)),    # x3
                  pl.BlockSpec((tmh, 256), lambda i: (i, 0))]          # x4
                 + [vmem] * 12,                                        # weights/biases
        out_specs=pl.BlockSpec((tmh, 256), lambda i: (i, 0)),
        compiler_params=pltpu.CompilerParams(
            dimension_semantics=("parallel",),
            vmem_limit_bytes=48 * 1024 * 1024),
    )(x1a, x2a, x3a, x4a,
      wd1, bd1, wd2, bd2, wd3, bd3, wc1, bc1, wc2, bc2, wc34, bc34)

    # un-pack the pixel pairs (free reshape), drop padding, and match torch's
    # out.view(B, -1) on NCHW.
    out = out_flat.reshape(m_pad, 128)[:mf]
    out = out.reshape(B, hf, wf, 128).transpose(0, 3, 1, 2).reshape(B, -1)
    return out


# ----------------------------- reference (plain JAX) -------------------------

def ref_forward(params, x1, x2, x3, x4):
    def conv(x, w, bb, stride):
        y = jax.lax.conv_general_dilated(
            x, w, (stride, stride), 'VALID',
            dimension_numbers=('NCHW', 'OIHW', 'NCHW'),
            precision=jax.lax.Precision.HIGHEST)
        return y + bb[None, :, None, None]

    def maxpool(x):
        return jax.lax.reduce_window(x, -jnp.inf, jax.lax.max,
                                     (1, 1, 2, 2), (1, 1, 2, 2), 'VALID')

    def down(x, w, bb):
        return maxpool(conv(x, w, bb, 1))

    d1 = down(x1, params['down1_w'], params['down1_b'])
    o1 = conv(d1, params['conv1_w'], params['conv1_b'], 4)
    d2 = down(x2 + d1, params['down2_w'], params['down2_b'])
    o2 = conv(d2, params['conv2_w'], params['conv2_b'], 2)
    d3 = down(x3 + d2, params['down3_w'], params['down3_b'])
    o3 = conv(d3, params['conv3_w'], params['conv3_b'], 1)
    o4 = conv(x4 + d3, params['conv4_w'], params['conv4_b'], 1)
    out = (params['w1'] * o1 + params['w2'] * o2
           + params['w3'] * o3 + params['w4'] * o4)
    return out.reshape(out.shape[0], -1)


# ------------------------------ params / main --------------------------------

def init_params(key):
    ks = jax.random.split(key, 7)

    def conv_init(k, cout, cin, kh, kw):
        kw_, kb_ = jax.random.split(k)
        bound = 1.0 / float((cin * kh * kw) ** 0.5)
        w = jax.random.uniform(kw_, (cout, cin, kh, kw), jnp.float32, -bound, bound)
        bb = jax.random.uniform(kb_, (cout,), jnp.float32, -bound, bound)
        return w, bb

    p = {}
    p['down1_w'], p['down1_b'] = conv_init(ks[0], 64, 64, 1, 1)
    p['down2_w'], p['down2_b'] = conv_init(ks[1], 128, 64, 1, 1)
    p['down3_w'], p['down3_b'] = conv_init(ks[2], 128, 128, 1, 1)
    p['conv1_w'], p['conv1_b'] = conv_init(ks[3], 128, 64, 4, 4)
    p['conv2_w'], p['conv2_b'] = conv_init(ks[4], 128, 128, 2, 2)
    p['conv3_w'], p['conv3_b'] = conv_init(ks[5], 128, 128, 1, 1)
    p['conv4_w'], p['conv4_b'] = conv_init(ks[6], 128, 128, 1, 1)
    # nn.Parameter(torch.tensor(1.0)) x 4
    p['w1'] = jnp.float32(1.0)
    p['w2'] = jnp.float32(1.0)
    p['w3'] = jnp.float32(1.0)
    p['w4'] = jnp.float32(1.0)
    return p


if __name__ == "__main__":
    key = jax.random.PRNGKey(0)
    k_in, k_par = jax.random.split(key)
    ki = jax.random.split(k_in, 4)

    B, H = 2, 16
    x1 = jax.random.normal(ki[0], (B, 64, H, H), jnp.float32)
    x2 = jax.random.normal(ki[1], (B, 64, H // 2, H // 2), jnp.float32)
    x3 = jax.random.normal(ki[2], (B, 128, H // 4, H // 4), jnp.float32)
    x4 = jax.random.normal(ki[3], (B, 128, H // 8, H // 8), jnp.float32)

    params = init_params(k_par)

    out = jax.jit(fussion_forward)(params, x1, x2, x3, x4)
    out = jax.block_until_ready(out)

    ref = ref_forward(params, x1, x2, x3, x4)
    rel_err = jnp.max(jnp.abs(out - ref)) / (jnp.max(jnp.abs(ref)) + 1e-6)

    assert out.shape == (B, 128 * (H // 8) * (H // 8)), out.shape
    # bf16 matmul operands with f32 accumulation vs. f32 HIGHEST reference.
    assert bool(rel_err < 2e-2), f"relative error too large: {rel_err}"
    print("KERNEL_OK")
</pallas_src>

<mosaic_0001>
module attributes {stable_mosaic.version = 11 : i64} {
  func.func @fused_msf_kernel(%arg0: i32, %arg1: memref<64x16x128xbf16, #tpu.memory_space<vmem>>, %arg2: memref<16x16x128xbf16, #tpu.memory_space<vmem>>, %arg3: memref<4x16x256xbf16, #tpu.memory_space<vmem>>, %arg4: memref<16x256xbf16, #tpu.memory_space<vmem>>, %arg5: memref<128x128xbf16, #tpu.memory_space<vmem>>, %arg6: memref<1x128xf32, #tpu.memory_space<vmem>>, %arg7: memref<128x256xbf16, #tpu.memory_space<vmem>>, %arg8: memref<1x256xf32, #tpu.memory_space<vmem>>, %arg9: memref<256x256xbf16, #tpu.memory_space<vmem>>, %arg10: memref<1x256xf32, #tpu.memory_space<vmem>>, %arg11: memref<16x128x256xbf16, #tpu.memory_space<vmem>>, %arg12: memref<1x256xf32, #tpu.memory_space<vmem>>, %arg13: memref<4x256x256xbf16, #tpu.memory_space<vmem>>, %arg14: memref<1x256xf32, #tpu.memory_space<vmem>>, %arg15: memref<512x256xbf16, #tpu.memory_space<vmem>>, %arg16: memref<1x256xf32, #tpu.memory_space<vmem>>, %arg17: memref<16x256xf32, #tpu.memory_space<vmem>>) attributes {dimension_semantics = [#tpu.dimension_semantics<parallel>], iteration_bounds = array<i64: 1>, scalar_prefetch = 0 : i64, scratch_operands = 0 : i64, tpu.core_type = #tpu.core_type<tc>, window_params = [{transform_indices = @transform_0, window_bounds = array<i64: 64, 16, 128>}, {transform_indices = @transform_1, window_bounds = array<i64: 16, 16, 128>}, {transform_indices = @transform_2, window_bounds = array<i64: 4, 16, 256>}, {transform_indices = @transform_3, window_bounds = array<i64: 16, 256>}, {pipeline_mode = #tpu.pipeline_mode<synchronous>, transform_indices = @transform_4, window_bounds = array<i64: 128, 128>}, {pipeline_mode = #tpu.pipeline_mode<synchronous>, transform_indices = @transform_5, window_bounds = array<i64: 1, 128>}, {pipeline_mode = #tpu.pipeline_mode<synchronous>, transform_indices = @transform_6, window_bounds = array<i64: 128, 256>}, {pipeline_mode = #tpu.pipeline_mode<synchronous>, transform_indices = @transform_7, window_bounds = array<i64: 1, 256>}, {pipeline_mode = #tpu.pipeline_mode<synchronous>, transform_indices = @transform_8, window_bounds = array<i64: 256, 256>}, {pipeline_mode = #tpu.pipeline_mode<synchronous>, transform_indices = @transform_9, window_bounds = array<i64: 1, 256>}, {pipeline_mode = #tpu.pipeline_mode<synchronous>, transform_indices = @transform_10, window_bounds = array<i64: 16, 128, 256>}, {pipeline_mode = #tpu.pipeline_mode<synchronous>, transform_indices = @transform_11, window_bounds = array<i64: 1, 256>}, {pipeline_mode = #tpu.pipeline_mode<synchronous>, transform_indices = @transform_12, window_bounds = array<i64: 4, 256, 256>}, {pipeline_mode = #tpu.pipeline_mode<synchronous>, transform_indices = @transform_13, window_bounds = array<i64: 1, 256>}, {pipeline_mode = #tpu.pipeline_mode<synchronous>, transform_indices = @transform_14, window_bounds = array<i64: 512, 256>}, {pipeline_mode = #tpu.pipeline_mode<synchronous>, transform_indices = @transform_15, window_bounds = array<i64: 1, 256>}, {transform_indices = @transform_16, window_bounds = array<i64: 16, 256>}]} {
    %c0 = arith.constant 0 : index
    %c0_0 = arith.constant 0 : index
    %c0_1 = arith.constant 0 : index
    %0 = vector.load %arg1[%c0, %c0_0, %c0_1] : memref<64x16x128xbf16, #tpu.memory_space<vmem>>, vector<64x16x128xbf16>
    %1 = vector.shape_cast %0 : vector<64x16x128xbf16> to vector<1024x128xbf16>
    %c0_2 = arith.constant 0 : index
    %c0_3 = arith.constant 0 : index
    %2 = vector.load %arg5[%c0_2, %c0_3] : memref<128x128xbf16, #tpu.memory_space<vmem>>, vector<128x128xbf16>
    %cst = arith.constant dense<0.000000e+00> : vector<1024x128xf32>
    %3 = tpu.matmul %1, %2, %cst {dimension_numbers = #tpu.dot_dimension_numbers<[1], [0], [0], [1], [0, 0, 1, 1], [], []>} : vector<1024x128xbf16>, vector<128x128xbf16>, vector<1024x128xf32> -> vector<1024x128xf32>
    %c0_4 = arith.constant 0 : index
    %c0_5 = arith.constant 0 : index
    %4 = vector.load %arg6[%c0_4, %c0_5] : memref<1x128xf32, #tpu.memory_space<vmem>>, vector<1x128xf32>
    %5 = vector.broadcast %4 : vector<1x128xf32> to vector<1024x128xf32>
    %6 = arith.addf %3, %5 : vector<1024x128xf32>
    %7 = vector.shape_cast %6 : vector<1024x128xf32> to vector<16x4x16x128xf32>
    %cst_6 = arith.constant dense<0xFF800000> : vector<16x16x128xf32>
    %8 = vector.multi_reduction <maximumf>, %7, %cst_6 [1] : vector<16x4x16x128xf32> to vector<16x16x128xf32>
    %9 = vector.extract_strided_slice %8 {offsets = [0, 0, 0], sizes = [1, 16, 128], strides = [1, 1, 1]} : vector<16x16x128xf32> to vector<1x16x128xf32>
    %10 = vector.shape_cast %9 : vector<1x16x128xf32> to vector<16x128xf32>
    %11 = arith.truncf %10 : vector<16x128xf32> to vector<16x128xbf16>
    %c0_7 = arith.constant 0 : index
    %c0_8 = arith.constant 0 : index
    %c0_9 = arith.constant 0 : index
    %12 = vector.load %arg11[%c0_7, %c0_8, %c0_9] : memref<16x128x256xbf16, #tpu.memory_space<vmem>>, vector<1x128x256xbf16>
    %13 = vector.shape_cast %12 : vector<1x128x256xbf16> to vector<128x256xbf16>
    %cst_10 = arith.constant dense<0.000000e+00> : vector<16x256xf32>
    %14 = tpu.matmul %11, %13, %cst_10 {dimension_numbers = #tpu.dot_dimension_numbers<[1], [0], [0], [1], [0, 0, 1, 1], [], []>} : vector<16x128xbf16>, vector<128x256xbf16>, vector<16x256xf32> -> vector<16x256xf32>
    %15 = vector.extract_strided_slice %8 {offsets = [1, 0, 0], sizes = [1, 16, 128], strides = [1, 1, 1]} : vector<16x16x128xf32> to vector<1x16x128xf32>
    %16 = vector.shape_cast %15 : vector<1x16x128xf32> to vector<16x128xf32>
    %17 = arith.truncf %16 : vector<16x128xf32> to vector<16x128xbf16>
    %c1 = arith.constant 1 : index
    %c0_11 = arith.constant 0 : index
    %c0_12 = arith.constant 0 : index
    %18 = vector.load %arg11[%c1, %c0_11, %c0_12] : memref<16x128x256xbf16, #tpu.memory_space<vmem>>, vector<1x128x256xbf16>
    %19 = vector.shape_cast %18 : vector<1x128x256xbf16> to vector<128x256xbf16>
    %cst_13 = arith.constant dense<0.000000e+00> : vector<16x256xf32>
    %20 = tpu.matmul %17, %19, %cst_13 {dimension_numbers = #tpu.dot_dimension_numbers<[1], [0], [0], [1], [0, 0, 1, 1], [], []>} : vector<16x128xbf16>, vector<128x256xbf16>, vector<16x256xf32> -> vector<16x256xf32>
    %21 = arith.addf %14, %20 : vector<16x256xf32>
    %22 = vector.extract_strided_slice %8 {offsets = [2, 0, 0], sizes = [1, 16, 128], strides = [1, 1, 1]} : vector<16x16x128xf32> to vector<1x16x128xf32>
    %23 = vector.shape_cast %22 : vector<1x16x128xf32> to vector<16x128xf32>
    %24 = arith.truncf %23 : vector<16x128xf32> to vector<16x128xbf16>
    %c2 = arith.constant 2 : index
    %c0_14 = arith.constant 0 : index
    %c0_15 = arith.constant 0 : index
    %25 = vector.load %arg11[%c2, %c0_14, %c0_15] : memref<16x128x256xbf16, #tpu.memory_space<vmem>>, vector<1x128x256xbf16>
    %26 = vector.shape_cast %25 : vector<1x128x256xbf16> to vector<128x256xbf16>
    %cst_16 = arith.constant dense<0.000000e+00> : vector<16x256xf32>
    %27 = tpu.matmul %24, %26, %cst_16 {dimension_numbers = #tpu.dot_dimension_numbers<[1], [0], [0], [1], [0, 0, 1, 1], [], []>} : vector<16x128xbf16>, vector<128x256xbf16>, vector<16x256xf32> -> vector<16x256xf32>
    %28 = arith.addf %21, %27 : vector<16x256xf32>
    %29 = vector.extract_strided_slice %8 {offsets = [3, 0, 0], sizes = [1, 16, 128], strides = [1, 1, 1]} : vector<16x16x128xf32> to vector<1x16x128xf32>
    %30 = vector.shape_cast %29 : vector<1x16x128xf32> to vector<16x128xf32>
    %31 = arith.truncf %30 : vector<16x128xf32> to vector<16x128xbf16>
    %c3 = arith.constant 3 : index
    %c0_17 = arith.constant 0 : index
    %c0_18 = arith.constant 0 : index
    %32 = vector.load %arg11[%c3, %c0_17, %c0_18] : memref<16x128x256xbf16, #tpu.memory_space<vmem>>, vector<1x128x256xbf16>
    %33 = vector.shape_cast %32 : vector<1x128x256xbf16> to vector<128x256xbf16>
    %cst_19 = arith.constant dense<0.000000e+00> : vector<16x256xf32>
    %34 = tpu.matmul %31, %33, %cst_19 {dimension_numbers = #tpu.dot_dimension_numbers<[1], [0], [0], [1], [0, 0, 1, 1], [], []>} : vector<16x128xbf16>, vector<128x256xbf16>, vector<16x256xf32> -> vector<16x256xf32>
    %35 = arith.addf %28, %34 : vector<16x256xf32>
    %36 = vector.extract_strided_slice %8 {offsets = [4, 0, 0], sizes = [1, 16, 128], strides = [1, 1, 1]} : vector<16x16x128xf32> to vector<1x16x128xf32>
    %37 = vector.shape_cast %36 : vector<1x16x128xf32> to vector<16x128xf32>
    %38 = arith.truncf %37 : vector<16x128xf32> to vector<16x128xbf16>
    %c4 = arith.constant 4 : index
    %c0_20 = arith.constant 0 : index
    %c0_21 = arith.constant 0 : index
    %39 = vector.load %arg11[%c4, %c0_20, %c0_21] : memref<16x128x256xbf16, #tpu.memory_space<vmem>>, vector<1x128x256xbf16>
    %40 = vector.shape_cast %39 : vector<1x128x256xbf16> to vector<128x256xbf16>
    %cst_22 = arith.constant dense<0.000000e+00> : vector<16x256xf32>
    %41 = tpu.matmul %38, %40, %cst_22 {dimension_numbers = #tpu.dot_dimension_numbers<[1], [0], [0], [1], [0, 0, 1, 1], [], []>} : vector<16x128xbf16>, vector<128x256xbf16>, vector<16x256xf32> -> vector<16x256xf32>
    %42 = arith.addf %35, %41 : vector<16x256xf32>
    %43 = vector.extract_strided_slice %8 {offsets = [5, 0, 0], sizes = [1, 16, 128], strides = [1, 1, 1]} : vector<16x16x128xf32> to vector<1x16x128xf32>
    %44 = vector.shape_cast %43 : vector<1x16x128xf32> to vector<16x128xf32>
    %45 = arith.truncf %44 : vector<16x128xf32> to vector<16x128xbf16>
    %c5 = arith.constant 5 : index
    %c0_23 = arith.constant 0 : index
    %c0_24 = arith.constant 0 : index
    %46 = vector.load %arg11[%c5, %c0_23, %c0_24] : memref<16x128x256xbf16, #tpu.memory_space<vmem>>, vector<1x128x256xbf16>
    %47 = vector.shape_cast %46 : vector<1x128x256xbf16> to vector<128x256xbf16>
    %cst_25 = arith.constant dense<0.000000e+00> : vector<16x256xf32>
    %48 = tpu.matmul %45, %47, %cst_25 {dimension_numbers = #tpu.dot_dimension_numbers<[1], [0], [0], [1], [0, 0, 1, 1], [], []>} : vector<16x128xbf16>, vector<128x256xbf16>, vector<16x256xf32> -> vector<16x256xf32>
    %49 = arith.addf %42, %48 : vector<16x256xf32>
    %50 = vector.extract_strided_slice %8 {offsets = [6, 0, 0], sizes = [1, 16, 128], strides = [1, 1, 1]} : vector<16x16x128xf32> to vector<1x16x128xf32>
    %51 = vector.shape_cast %50 : vector<1x16x128xf32> to vector<16x128xf32>
    %52 = arith.truncf %51 : vector<16x128xf32> to vector<16x128xbf16>
    %c6 = arith.constant 6 : index
    %c0_26 = arith.constant 0 : index
    %c0_27 = arith.constant 0 : index
    %53 = vector.load %arg11[%c6, %c0_26, %c0_27] : memref<16x128x256xbf16, #tpu.memory_space<vmem>>, vector<1x128x256xbf16>
    %54 = vector.shape_cast %53 : vector<1x128x256xbf16> to vector<128x256xbf16>
    %cst_28 = arith.constant dense<0.000000e+00> : vector<16x256xf32>
    %55 = tpu.matmul %52, %54, %cst_28 {dimension_numbers = #tpu.dot_dimension_numbers<[1], [0], [0], [1], [0, 0, 1, 1], [], []>} : vector<16x128xbf16>, vector<128x256xbf16>, vector<16x256xf32> -> vector<16x256xf32>
    %56 = arith.addf %49, %55 : vector<16x256xf32>
    %57 = vector.extract_strided_slice %8 {offsets = [7, 0, 0], sizes = [1, 16, 128], strides = [1, 1, 1]} : vector<16x16x128xf32> to vector<1x16x128xf32>
    %58 = vector.shape_cast %57 : vector<1x16x128xf32> to vector<16x128xf32>
    %59 = arith.truncf %58 : vector<16x128xf32> to vector<16x128xbf16>
    %c7 = arith.constant 7 : index
    %c0_29 = arith.constant 0 : index
    %c0_30 = arith.constant 0 : index
    %60 = vector.load %arg11[%c7, %c0_29, %c0_30] : memref<16x128x256xbf16, #tpu.memory_space<vmem>>, vector<1x128x256xbf16>
    %61 = vector.shape_cast %60 : vector<1x128x256xbf16> to vector<128x256xbf16>
    %cst_31 = arith.constant dense<0.000000e+00> : vector<16x256xf32>
    %62 = tpu.matmul %59, %61, %cst_31 {dimension_numbers = #tpu.dot_dimension_numbers<[1], [0], [0], [1], [0, 0, 1, 1], [], []>} : vector<16x128xbf16>, vector<128x256xbf16>, vector<16x256xf32> -> vector<16x256xf32>
    %63 = arith.addf %56, %62 : vector<16x256xf32>
    %64 = vector.extract_strided_slice %8 {offsets = [8, 0, 0], sizes = [1, 16, 128], strides = [1, 1, 1]} : vector<16x16x128xf32> to vector<1x16x128xf32>
    %65 = vector.shape_cast %64 : vector<1x16x128xf32> to vector<16x128xf32>
    %66 = arith.truncf %65 : vector<16x128xf32> to vector<16x128xbf16>
    %c8 = arith.constant 8 : index
    %c0_32 = arith.constant 0 : index
    %c0_33 = arith.constant 0 : index
    %67 = vector.load %arg11[%c8, %c0_32, %c0_33] : memref<16x128x256xbf16, #tpu.memory_space<vmem>>, vector<1x128x256xbf16>
    %68 = vector.shape_cast %67 : vector<1x128x256xbf16> to vector<128x256xbf16>
    %cst_34 = arith.constant dense<0.000000e+00> : vector<16x256xf32>
    %69 = tpu.matmul %66, %68, %cst_34 {dimension_numbers = #tpu.dot_dimension_numbers<[1], [0], [0], [1], [0, 0, 1, 1], [], []>} : vector<16x128xbf16>, vector<128x256xbf16>, vector<16x256xf32> -> vector<16x256xf32>
    %70 = arith.addf %63, %69 : vector<16x256xf32>
    %71 = vector.extract_strided_slice %8 {offsets = [9, 0, 0], sizes = [1, 16, 128], strides = [1, 1, 1]} : vector<16x16x128xf32> to vector<1x16x128xf32>
    %72 = vector.shape_cast %71 : vector<1x16x128xf32> to vector<16x128xf32>
    %73 = arith.truncf %72 : vector<16x128xf32> to vector<16x128xbf16>
    %c9 = arith.constant 9 : index
    %c0_35 = arith.constant 0 : index
    %c0_36 = arith.constant 0 : index
    %74 = vector.load %arg11[%c9, %c0_35, %c0_36] : memref<16x128x256xbf16, #tpu.memory_space<vmem>>, vector<1x128x256xbf16>
    %75 = vector.shape_cast %74 : vector<1x128x256xbf16> to vector<128x256xbf16>
    %cst_37 = arith.constant dense<0.000000e+00> : vector<16x256xf32>
    %76 = tpu.matmul %73, %75, %cst_37 {dimension_numbers = #tpu.dot_dimension_numbers<[1], [0], [0], [1], [0, 0, 1, 1], [], []>} : vector<16x128xbf16>, vector<128x256xbf16>, vector<16x256xf32> -> vector<16x256xf32>
    %77 = arith.addf %70, %76 : vector<16x256xf32>
    %78 = vector.extract_strided_slice %8 {offsets = [10, 0, 0], sizes = [1, 16, 128], strides = [1, 1, 1]} : vector<16x16x128xf32> to vector<1x16x128xf32>
    %79 = vector.shape_cast %78 : vector<1x16x128xf32> to vector<16x128xf32>
    %80 = arith.truncf %79 : vector<16x128xf32> to vector<16x128xbf16>
    %c10 = arith.constant 10 : index
    %c0_38 = arith.constant 0 : index
    %c0_39 = arith.constant 0 : index
    %81 = vector.load %arg11[%c10, %c0_38, %c0_39] : memref<16x128x256xbf16, #tpu.memory_space<vmem>>, vector<1x128x256xbf16>
    %82 = vector.shape_cast %81 : vector<1x128x256xbf16> to vector<128x256xbf16>
    %cst_40 = arith.constant dense<0.000000e+00> : vector<16x256xf32>
    %83 = tpu.matmul %80, %82, %cst_40 {dimension_numbers = #tpu.dot_dimension_numbers<[1], [0], [0], [1], [0, 0, 1, 1], [], []>} : vector<16x128xbf16>, vector<128x256xbf16>, vector<16x256xf32> -> vector<16x256xf32>
    %84 = arith.addf %77, %83 : vector<16x256xf32>
    %85 = vector.extract_strided_slice %8 {offsets = [11, 0, 0], sizes = [1, 16, 128], strides = [1, 1, 1]} : vector<16x16x128xf32> to vector<1x16x128xf32>
    %86 = vector.shape_cast %85 : vector<1x16x128xf32> to vector<16x128xf32>
    %87 = arith.truncf %86 : vector<16x128xf32> to vector<16x128xbf16>
    %c11 = arith.constant 11 : index
    %c0_41 = arith.constant 0 : index
    %c0_42 = arith.constant 0 : index
    %88 = vector.load %arg11[%c11, %c0_41, %c0_42] : memref<16x128x256xbf16, #tpu.memory_space<vmem>>, vector<1x128x256xbf16>
    %89 = vector.shape_cast %88 : vector<1x128x256xbf16> to vector<128x256xbf16>
    %cst_43 = arith.constant dense<0.000000e+00> : vector<16x256xf32>
    %90 = tpu.matmul %87, %89, %cst_43 {dimension_numbers = #tpu.dot_dimension_numbers<[1], [0], [0], [1], [0, 0, 1, 1], [], []>} : vector<16x128xbf16>, vector<128x256xbf16>, vector<16x256xf32> -> vector<16x256xf32>
    %91 = arith.addf %84, %90 : vector<16x256xf32>
    %92 = vector.extract_strided_slice %8 {offsets = [12, 0, 0], sizes = [1, 16, 128], strides = [1, 1, 1]} : vector<16x16x128xf32> to vector<1x16x128xf32>
    %93 = vector.shape_cast %92 : vector<1x16x128xf32> to vector<16x128xf32>
    %94 = arith.truncf %93 : vector<16x128xf32> to vector<16x128xbf16>
    %c12 = arith.constant 12 : index
    %c0_44 = arith.constant 0 : index
    %c0_45 = arith.constant 0 : index
    %95 = vector.load %arg11[%c12, %c0_44, %c0_45] : memref<16x128x256xbf16, #tpu.memory_space<vmem>>, vector<1x128x256xbf16>
    %96 = vector.shape_cast %95 : vector<1x128x256xbf16> to vector<128x256xbf16>
    %cst_46 = arith.constant dense<0.000000e+00> : vector<16x256xf32>
    %97 = tpu.matmul %94, %96, %cst_46 {dimension_numbers = #tpu.dot_dimension_numbers<[1], [0], [0], [1], [0, 0, 1, 1], [], []>} : vector<16x128xbf16>, vector<128x256xbf16>, vector<16x256xf32> -> vector<16x256xf32>
    %98 = arith.addf %91, %97 : vector<16x256xf32>
    %99 = vector.extract_strided_slice %8 {offsets = [13, 0, 0], sizes = [1, 16, 128], strides = [1, 1, 1]} : vector<16x16x128xf32> to vector<1x16x128xf32>
    %100 = vector.shape_cast %99 : vector<1x16x128xf32> to vector<16x128xf32>
    %101 = arith.truncf %100 : vector<16x128xf32> to vector<16x128xbf16>
    %c13 = arith.constant 13 : index
    %c0_47 = arith.constant 0 : index
    %c0_48 = arith.constant 0 : index
    %102 = vector.load %arg11[%c13, %c0_47, %c0_48] : memref<16x128x256xbf16, #tpu.memory_space<vmem>>, vector<1x128x256xbf16>
    %103 = vector.shape_cast %102 : vector<1x128x256xbf16> to vector<128x256xbf16>
    %cst_49 = arith.constant dense<0.000000e+00> : vector<16x256xf32>
    %104 = tpu.matmul %101, %103, %cst_49 {dimension_numbers = #tpu.dot_dimension_numbers<[1], [0], [0], [1], [0, 0, 1, 1], [], []>} : vector<16x128xbf16>, vector<128x256xbf16>, vector<16x256xf32> -> vector<16x256xf32>
    %105 = arith.addf %98, %104 : vector<16x256xf32>
    %106 = vector.extract_strided_slice %8 {offsets = [14, 0, 0], sizes = [1, 16, 128], strides = [1, 1, 1]} : vector<16x16x128xf32> to vector<1x16x128xf32>
    %107 = vector.shape_cast %106 : vector<1x16x128xf32> to vector<16x128xf32>
    %108 = arith.truncf %107 : vector<16x128xf32> to vector<16x128xbf16>
    %c14 = arith.constant 14 : index
    %c0_50 = arith.constant 0 : index
    %c0_51 = arith.constant 0 : index
    %109 = vector.load %arg11[%c14, %c0_50, %c0_51] : memref<16x128x256xbf16, #tpu.memory_space<vmem>>, vector<1x128x256xbf16>
    %110 = vector.shape_cast %109 : vector<1x128x256xbf16> to vector<128x256xbf16>
    %cst_52 = arith.constant dense<0.000000e+00> : vector<16x256xf32>
    %111 = tpu.matmul %108, %110, %cst_52 {dimension_numbers = #tpu.dot_dimension_numbers<[1], [0], [0], [1], [0, 0, 1, 1], [], []>} : vector<16x128xbf16>, vector<128x256xbf16>, vector<16x256xf32> -> vector<16x256xf32>
    %112 = arith.addf %105, %111 : vector<16x256xf32>
    %113 = vector.extract_strided_slice %8 {offsets = [15, 0, 0], sizes = [1, 16, 128], strides = [1, 1, 1]} : vector<16x16x128xf32> to vector<1x16x128xf32>
    %114 = vector.shape_cast %113 : vector<1x16x128xf32> to vector<16x128xf32>
    %115 = arith.truncf %114 : vector<16x128xf32> to vector<16x128xbf16>
    %c15 = arith.constant 15 : index
    %c0_53 = arith.constant 0 : index
    %c0_54 = arith.constant 0 : index
    %116 = vector.load %arg11[%c15, %c0_53, %c0_54] : memref<16x128x256xbf16, #tpu.memory_space<vmem>>, vector<1x128x256xbf16>
    %117 = vector.shape_cast %116 : vector<1x128x256xbf16> to vector<128x256xbf16>
    %cst_55 = arith.constant dense<0.000000e+00> : vector<16x256xf32>
    %118 = tpu.matmul %115, %117, %cst_55 {dimension_numbers = #tpu.dot_dimension_numbers<[1], [0], [0], [1], [0, 0, 1, 1], [], []>} : vector<16x128xbf16>, vector<128x256xbf16>, vector<16x256xf32> -> vector<16x256xf32>
    %119 = arith.addf %112, %118 : vector<16x256xf32>
    %c0_56 = arith.constant 0 : index
    %c0_57 = arith.constant 0 : index
    %120 = vector.load %arg12[%c0_56, %c0_57] : memref<1x256xf32, #tpu.memory_space<vmem>>, vector<1x256xf32>
    %121 = vector.broadcast %120 : vector<1x256xf32> to vector<16x256xf32>
    %122 = arith.addf %119, %121 : vector<16x256xf32>
    %c0_58 = arith.constant 0 : index
    %c0_59 = arith.constant 0 : index
    %c0_60 = arith.constant 0 : index
    %123 = vector.load %arg2[%c0_58, %c0_59, %c0_60] : memref<16x16x128xbf16, #tpu.memory_space<vmem>>, vector<16x16x128xbf16>
    %124 = arith.extf %123 : vector<16x16x128xbf16> to vector<16x16x128xf32>
    %125 = arith.addf %124, %8 : vector<16x16x128xf32>
    %126 = arith.truncf %125 : vector<16x16x128xf32> to vector<16x16x128xbf16>
    %127 = vector.shape_cast %126 : vector<16x16x128xbf16> to vector<256x128xbf16>
    %c0_61 = arith.constant 0 : index
    %c0_62 = arith.constant 0 : index
    %128 = vector.load %arg7[%c0_61, %c0_62] : memref<128x256xbf16, #tpu.memory_space<vmem>>, vector<128x256xbf16>
    %cst_63 = arith.constant dense<0.000000e+00> : vector<256x256xf32>
    %129 = tpu.matmul %127, %128, %cst_63 {dimension_numbers = #tpu.dot_dimension_numbers<[1], [0], [0], [1], [0, 0, 1, 1], [], []>} : vector<256x128xbf16>, vector<128x256xbf16>, vector<256x256xf32> -> vector<256x256xf32>
    %c0_64 = arith.constant 0 : index
    %c0_65 = arith.constant 0 : index
    %130 = vector.load %arg8[%c0_64, %c0_65] : memref<1x256xf32, #tpu.memory_space<vmem>>, vector<1x256xf32>
    %131 = vector.broadcast %130 : vector<1x256xf32> to vector<256x256xf32>
    %132 = arith.addf %129, %131 : vector<256x256xf32>
    %133 = vector.shape_cast %132 : vector<256x256xf32> to vector<4x4x16x256xf32>
    %cst_66 = arith.constant dense<0xFF800000> : vector<4x16x256xf32>
    %134 = vector.multi_reduction <maximumf>, %133, %cst_66 [1] : vector<4x4x16x256xf32> to vector<4x16x256xf32>
    %135 = vector.extract_strided_slice %134 {offsets = [0, 0, 0], sizes = [1, 16, 256], strides = [1, 1, 1]} : vector<4x16x256xf32> to vector<1x16x256xf32>
    %136 = vector.shape_cast %135 : vector<1x16x256xf32> to vector<16x256xf32>
    %137 = arith.truncf %136 : vector<16x256xf32> to vector<16x256xbf16>
    %c0_67 = arith.constant 0 : index
    %c0_68 = arith.constant 0 : index
    %c0_69 = arith.constant 0 : index
    %138 = vector.load %arg13[%c0_67, %c0_68, %c0_69] : memref<4x256x256xbf16, #tpu.memory_space<vmem>>, vector<1x256x256xbf16>
    %139 = vector.shape_cast %138 : vector<1x256x256xbf16> to vector<256x256xbf16>
    %cst_70 = arith.constant dense<0.000000e+00> : vector<16x256xf32>
    %140 = tpu.matmul %137, %139, %cst_70 {dimension_numbers = #tpu.dot_dimension_numbers<[1], [0], [0], [1], [0, 0, 1, 1], [], []>} : vector<16x256xbf16>, vector<256x256xbf16>, vector<16x256xf32> -> vector<16x256xf32>
    %141 = vector.extract_strided_slice %134 {offsets = [1, 0, 0], sizes = [1, 16, 256], strides = [1, 1, 1]} : vector<4x16x256xf32> to vector<1x16x256xf32>
    %142 = vector.shape_cast %141 : vector<1x16x256xf32> to vector<16x256xf32>
    %143 = arith.truncf %142 : vector<16x256xf32> to vector<16x256xbf16>
    %c1_71 = arith.constant 1 : index
    %c0_72 = arith.constant 0 : index
    %c0_73 = arith.constant 0 : index
    %144 = vector.load %arg13[%c1_71, %c0_72, %c0_73] : memref<4x256x256xbf16, #tpu.memory_space<vmem>>, vector<1x256x256xbf16>
    %145 = vector.shape_cast %144 : vector<1x256x256xbf16> to vector<256x256xbf16>
    %cst_74 = arith.constant dense<0.000000e+00> : vector<16x256xf32>
    %146 = tpu.matmul %143, %145, %cst_74 {dimension_numbers = #tpu.dot_dimension_numbers<[1], [0], [0], [1], [0, 0, 1, 1], [], []>} : vector<16x256xbf16>, vector<256x256xbf16>, vector<16x256xf32> -> vector<16x256xf32>
    %147 = arith.addf %140, %146 : vector<16x256xf32>
    %148 = vector.extract_strided_slice %134 {offsets = [2, 0, 0], sizes = [1, 16, 256], strides = [1, 1, 1]} : vector<4x16x256xf32> to vector<1x16x256xf32>
    %149 = vector.shape_cast %148 : vector<1x16x256xf32> to vector<16x256xf32>
    %150 = arith.truncf %149 : vector<16x256xf32> to vector<16x256xbf16>
    %c2_75 = arith.constant 2 : index
    %c0_76 = arith.constant 0 : index
    %c0_77 = arith.constant 0 : index
    %151 = vector.load %arg13[%c2_75, %c0_76, %c0_77] : memref<4x256x256xbf16, #tpu.memory_space<vmem>>, vector<1x256x256xbf16>
    %152 = vector.shape_cast %151 : vector<1x256x256xbf16> to vector<256x256xbf16>
    %cst_78 = arith.constant dense<0.000000e+00> : vector<16x256xf32>
    %153 = tpu.matmul %150, %152, %cst_78 {dimension_numbers = #tpu.dot_dimension_numbers<[1], [0], [0], [1], [0, 0, 1, 1], [], []>} : vector<16x256xbf16>, vector<256x256xbf16>, vector<16x256xf32> -> vector<16x256xf32>
    %154 = arith.addf %147, %153 : vector<16x256xf32>
    %155 = vector.extract_strided_slice %134 {offsets = [3, 0, 0], sizes = [1, 16, 256], strides = [1, 1, 1]} : vector<4x16x256xf32> to vector<1x16x256xf32>
    %156 = vector.shape_cast %155 : vector<1x16x256xf32> to vector<16x256xf32>
    %157 = arith.truncf %156 : vector<16x256xf32> to vector<16x256xbf16>
    %c3_79 = arith.constant 3 : index
    %c0_80 = arith.constant 0 : index
    %c0_81 = arith.constant 0 : index
    %158 = vector.load %arg13[%c3_79, %c0_80, %c0_81] : memref<4x256x256xbf16, #tpu.memory_space<vmem>>, vector<1x256x256xbf16>
    %159 = vector.shape_cast %158 : vector<1x256x256xbf16> to vector<256x256xbf16>
    %cst_82 = arith.constant dense<0.000000e+00> : vector<16x256xf32>
    %160 = tpu.matmul %157, %159, %cst_82 {dimension_numbers = #tpu.dot_dimension_numbers<[1], [0], [0], [1], [0, 0, 1, 1], [], []>} : vector<16x256xbf16>, vector<256x256xbf16>, vector<16x256xf32> -> vector<16x256xf32>
    %161 = arith.addf %154, %160 : vector<16x256xf32>
    %c0_83 = arith.constant 0 : index
    %c0_84 = arith.constant 0 : index
    %162 = vector.load %arg14[%c0_83, %c0_84] : memref<1x256xf32, #tpu.memory_space<vmem>>, vector<1x256xf32>
    %163 = vector.broadcast %162 : vector<1x256xf32> to vector<16x256xf32>
    %164 = arith.addf %161, %163 : vector<16x256xf32>
    %c0_85 = arith.constant 0 : index
    %c0_86 = arith.constant 0 : index
    %c0_87 = arith.constant 0 : index
    %165 = vector.load %arg3[%c0_85, %c0_86, %c0_87] : memref<4x16x256xbf16, #tpu.memory_space<vmem>>, vector<4x16x256xbf16>
    %166 = arith.extf %165 : vector<4x16x256xbf16> to vector<4x16x256xf32>
    %167 = arith.addf %166, %134 : vector<4x16x256xf32>
    %168 = arith.truncf %167 : vector<4x16x256xf32> to vector<4x16x256xbf16>
    %169 = vector.shape_cast %168 : vector<4x16x256xbf16> to vector<64x256xbf16>
    %c0_88 = arith.constant 0 : index
    %c0_89 = arith.constant 0 : index
    %170 = vector.load %arg9[%c0_88, %c0_89] : memref<256x256xbf16, #tpu.memory_space<vmem>>, vector<256x256xbf16>
    %cst_90 = arith.constant dense<0.000000e+00> : vector<64x256xf32>
    %171 = tpu.matmul %169, %170, %cst_90 {dimension_numbers = #tpu.dot_dimension_numbers<[1], [0], [0], [1], [0, 0, 1, 1], [], []>} : vector<64x256xbf16>, vector<256x256xbf16>, vector<64x256xf32> -> vector<64x256xf32>
    %c0_91 = arith.constant 0 : index
    %c0_92 = arith.constant 0 : index
    %172 = vector.load %arg10[%c0_91, %c0_92] : memref<1x256xf32, #tpu.memory_space<vmem>>, vector<1x256xf32>
    %173 = vector.broadcast %172 : vector<1x256xf32> to vector<64x256xf32>
    %174 = arith.addf %171, %173 : vector<64x256xf32>
    %175 = vector.shape_cast %174 : vector<64x256xf32> to vector<1x4x16x256xf32>
    %cst_93 = arith.constant dense<0xFF800000> : vector<1x16x256xf32>
    %176 = vector.multi_reduction <maximumf>, %175, %cst_93 [1] : vector<1x4x16x256xf32> to vector<1x16x256xf32>
    %177 = vector.shape_cast %176 : vector<1x16x256xf32> to vector<16x256xf32>
    %c0_94 = arith.constant 0 : index
    %c0_95 = arith.constant 0 : index
    %178 = vector.load %arg4[%c0_94, %c0_95] : memref<16x256xbf16, #tpu.memory_space<vmem>>, vector<16x256xbf16>
    %179 = arith.extf %178 : vector<16x256xbf16> to vector<16x256xf32>
    %180 = arith.addf %179, %177 : vector<16x256xf32>
    %181 = arith.truncf %177 : vector<16x256xf32> to vector<16x256xbf16>
    %182 = arith.truncf %180 : vector<16x256xf32> to vector<16x256xbf16>
    %183 = tpu.concatenate %181, %182 in 1 : vector<16x256xbf16>, vector<16x256xbf16> -> vector<16x512xbf16>
    %c0_96 = arith.constant 0 : index
    %c0_97 = arith.constant 0 : index
    %184 = vector.load %arg15[%c0_96, %c0_97] : memref<512x256xbf16, #tpu.memory_space<vmem>>, vector<512x256xbf16>
    %cst_98 = arith.constant dense<0.000000e+00> : vector<16x256xf32>
    %185 = tpu.matmul %183, %184, %cst_98 {dimension_numbers = #tpu.dot_dimension_numbers<[1], [0], [0], [1], [0, 0, 1, 1], [], []>} : vector<16x512xbf16>, vector<512x256xbf16>, vector<16x256xf32> -> vector<16x256xf32>
    %c0_99 = arith.constant 0 : index
    %c0_100 = arith.constant 0 : index
    %186 = vector.load %arg16[%c0_99, %c0_100] : memref<1x256xf32, #tpu.memory_space<vmem>>, vector<1x256xf32>
    %187 = vector.broadcast %186 : vector<1x256xf32> to vector<16x256xf32>
    %188 = arith.addf %185, %187 : vector<16x256xf32>
    %189 = arith.addf %122, %164 : vector<16x256xf32>
    %190 = arith.addf %189, %188 : vector<16x256xf32>
    %c0_101 = arith.constant 0 : index
    %c0_102 = arith.constant 0 : index
    %191 = vector.load %arg17[%c0_101, %c0_102] : memref<16x256xf32, #tpu.memory_space<vmem>>, vector<16x256xf32>
    tpu.vector_store %arg17[%c0_101, %c0_102], %190 {strides = array<i32>} : memref<16x256xf32, #tpu.memory_space<vmem>>, vector<16x256xf32>,
    return
  }
  func.func @transform_0(%arg0: i32) -> (i32, i32, i32) {
    %c0_i32 = arith.constant 0 : i32
    %c0_i32_0 = arith.constant 0 : i32
    %c0_i32_1 = arith.constant 0 : i32
    return %c0_i32, %arg0, %c0_i32_0 : i32, i32, i32
  }
  func.func @transform_1(%arg0: i32) -> (i32, i32, i32) {
    %c0_i32 = arith.constant 0 : i32
    %c0_i32_0 = arith.constant 0 : i32
    %c0_i32_1 = arith.constant 0 : i32
    return %c0_i32, %arg0, %c0_i32_0 : i32, i32, i32
  }
  func.func @transform_2(%arg0: i32) -> (i32, i32, i32) {
    %c0_i32 = arith.constant 0 : i32
    %c0_i32_0 = arith.constant 0 : i32
    %c0_i32_1 = arith.constant 0 : i32
    return %c0_i32, %arg0, %c0_i32_0 : i32, i32, i32
  }
  func.func @transform_3(%arg0: i32) -> (i32, i32) {
    %c0_i32 = arith.constant 0 : i32
    %c0_i32_0 = arith.constant 0 : i32
    return %arg0, %c0_i32 : i32, i32
  }
  func.func @transform_4(%arg0: i32) -> (i32, i32) {
    %c0_i32 = arith.constant 0 : i32
    %c0_i32_0 = arith.constant 0 : i32
    %c0_i32_1 = arith.constant 0 : i32
    return %c0_i32, %c0_i32_0 : i32, i32
  }
  func.func @transform_5(%arg0: i32) -> (i32, i32) {
    %c0_i32 = arith.constant 0 : i32
    %c0_i32_0 = arith.constant 0 : i32
    %c0_i32_1 = arith.constant 0 : i32
    return %c0_i32, %c0_i32_0 : i32, i32
  }
  func.func @transform_6(%arg0: i32) -> (i32, i32) {
    %c0_i32 = arith.constant 0 : i32
    %c0_i32_0 = arith.constant 0 : i32
    %c0_i32_1 = arith.constant 0 : i32
    return %c0_i32, %c0_i32_0 : i32, i32
  }
  func.func @transform_7(%arg0: i32) -> (i32, i32) {
    %c0_i32 = arith.constant 0 : i32
    %c0_i32_0 = arith.constant 0 : i32
    %c0_i32_1 = arith.constant 0 : i32
    return %c0_i32, %c0_i32_0 : i32, i32
  }
  func.func @transform_8(%arg0: i32) -> (i32, i32) {
    %c0_i32 = arith.constant 0 : i32
    %c0_i32_0 = arith.constant 0 : i32
    %c0_i32_1 = arith.constant 0 : i32
    return %c0_i32, %c0_i32_0 : i32, i32
  }
  func.func @transform_9(%arg0: i32) -> (i32, i32) {
    %c0_i32 = arith.constant 0 : i32
    %c0_i32_0 = arith.constant 0 : i32
    %c0_i32_1 = arith.constant 0 : i32
    return %c0_i32, %c0_i32_0 : i32, i32
  }
  func.func @transform_10(%arg0: i32) -> (i32, i32, i32) {
    %c0_i32 = arith.constant 0 : i32
    %c0_i32_0 = arith.constant 0 : i32
    %c0_i32_1 = arith.constant 0 : i32
    %c0_i32_2 = arith.constant 0 : i32
    return %c0_i32, %c0_i32_0, %c0_i32_1 : i32, i32, i32
  }
  func.func @transform_11(%arg0: i32) -> (i32, i32) {
    %c0_i32 = arith.constant 0 : i32
    %c0_i32_0 = arith.constant 0 : i32
    %c0_i32_1 = arith.constant 0 : i32
    return %c0_i32, %c0_i32_0 : i32, i32
  }
  func.func @transform_12(%arg0: i32) -> (i32, i32, i32) {
    %c0_i32 = arith.constant 0 : i32
    %c0_i32_0 = arith.constant 0 : i32
    %c0_i32_1 = arith.constant 0 : i32
    %c0_i32_2 = arith.constant 0 : i32
    return %c0_i32, %c0_i32_0, %c0_i32_1 : i32, i32, i32
  }
  func.func @transform_13(%arg0: i32) -> (i32, i32) {
    %c0_i32 = arith.constant 0 : i32
    %c0_i32_0 = arith.constant 0 : i32
    %c0_i32_1 = arith.constant 0 : i32
    return %c0_i32, %c0_i32_0 : i32, i32
  }
  func.func @transform_14(%arg0: i32) -> (i32, i32) {
    %c0_i32 = arith.constant 0 : i32
    %c0_i32_0 = arith.constant 0 : i32
    %c0_i32_1 = arith.constant 0 : i32
    return %c0_i32, %c0_i32_0 : i32, i32
  }
  func.func @transform_15(%arg0: i32) -> (i32, i32) {
    %c0_i32 = arith.constant 0 : i32
    %c0_i32_0 = arith.constant 0 : i32
    %c0_i32_1 = arith.constant 0 : i32
    return %c0_i32, %c0_i32_0 : i32, i32
  }
  func.func @transform_16(%arg0: i32) -> (i32, i32) {
    %c0_i32 = arith.constant 0 : i32
    %c0_i32_0 = arith.constant 0 : i32
    return %arg0, %c0_i32 : i32, i32
  }
}

</mosaic_0001>

<llo_original>
// kernel: fussion_forward.1
$region0: #{fussion_forward.1}
  #allocation0 [shape = 'u32[]', space=smem, size = 0x4, offset = 0x4, fixed_abs, tag = 'smem constant byte address 0x4 - core index']
  #allocation1 [shape = 'u32[144,128]{1,0:T(1,128)}', space=vmem, size = 0x12000, scoped, tag = 'internal scratch']
  %s0 = inlined_call_operand.vmem [shape: bf16[64,16,128], index: 0, kind: input, shape index: {}]
  %s1 = inlined_call_operand.vmem [shape: bf16[16,16,128], index: 1, kind: input, shape index: {}]
  %s2 = inlined_call_operand.vmem [shape: bf16[4,16,256], index: 2, kind: input, shape index: {}]
  %s3 = inlined_call_operand.vmem [shape: bf16[16,256], index: 3, kind: input, shape index: {}]
  %s4 = inlined_call_operand.vmem [shape: bf16[128,128], index: 4, kind: input, shape index: {}]
  %s5 = inlined_call_operand.vmem [shape: f32[1,128], index: 5, kind: input, shape index: {}]
  %s6 = inlined_call_operand.vmem [shape: bf16[128,256], index: 6, kind: input, shape index: {}]
  %s7 = inlined_call_operand.vmem [shape: f32[1,256], index: 7, kind: input, shape index: {}]
  %s8 = inlined_call_operand.vmem [shape: bf16[256,256], index: 8, kind: input, shape index: {}]
  %s9 = inlined_call_operand.vmem [shape: f32[1,256], index: 9, kind: input, shape index: {}]
  %s10 = inlined_call_operand.vmem [shape: bf16[16,128,256], index: 10, kind: input, shape index: {}]
  %s11 = inlined_call_operand.vmem [shape: f32[1,256], index: 11, kind: input, shape index: {}]
  %s12 = inlined_call_operand.vmem [shape: bf16[4,256,256], index: 12, kind: input, shape index: {}]
  %s13 = inlined_call_operand.vmem [shape: f32[1,256], index: 13, kind: input, shape index: {}]
  %s14 = inlined_call_operand.vmem [shape: bf16[512,256], index: 14, kind: input, shape index: {}]
  %s15 = inlined_call_operand.vmem [shape: f32[1,256], index: 15, kind: input, shape index: {}]
  %s16 = inlined_call_operand.vmem [shape: f32[16,256], index: 16, kind: output, shape index: {}]
  %s17 = sld [smem:[#allocation0]]
  $region74: #{fussion_forward.1} parent=0
    _
  %s19 = ssub.s32 1, %s17
  %s20 = scalar_select 0, %s19, %s17
  // Predicated region
  $region2: #{fussion_forward.1} parent=0 // pred_check
    _
  $region3: #{fussion_forward.1} parent=0 // pred_check_branch
    %22 = sbr.rel (0) target = $region5
  $region4: #{fussion_forward.1} parent=0 // pred_region
    _
  $region5: #{fussion_forward.1} parent=0 // pred_fallthru
    _
  // Predicated region
  $region6: #{fussion_forward.1} parent=0 // pred_check
    _
  $region7: #{fussion_forward.1} parent=0 // pred_check_branch
    %24 = sbr.rel (0) target = $region9
  $region8: #{fussion_forward.1} parent=0 // pred_region
    _
  $region9: #{fussion_forward.1} parent=0 // pred_fallthru
    _
  // Predicated region
  $region10: #{fussion_forward.1} parent=0 // pred_check
    _
  $region11: #{fussion_forward.1} parent=0 // pred_check_branch
    %26 = sbr.rel (0) target = $region13
  $region12: #{fussion_forward.1} parent=0 // pred_region
    _
  $region13: #{fussion_forward.1} parent=0 // pred_fallthru
    _
  // Predicated region
  $region14: #{fussion_forward.1} parent=0 // pred_check
    _
  $region15: #{fussion_forward.1} parent=0 // pred_check_branch
    %28 = sbr.rel (0) target = $region17
  $region16: #{fussion_forward.1} parent=0 // pred_region
    _
  $region17: #{fussion_forward.1} parent=0 // pred_fallthru
    _
  // Predicated region
  $region18: #{fussion_forward.1} parent=0 // pred_check
    _
  $region19: #{fussion_forward.1} parent=0 // pred_check_branch
    %30 = sbr.rel (0) target = $region21
  $region20: #{fussion_forward.1} parent=0 // pred_region
    _
  $region21: #{fussion_forward.1} parent=0 // pred_fallthru
    _
  // Predicated region
  $region22: #{fussion_forward.1} parent=0 // pred_check
    _
  $region23: #{fussion_forward.1} parent=0 // pred_check_branch
    %32 = sbr.rel (0) target = $region25
  $region24: #{fussion_forward.1} parent=0 // pred_region
    _
  $region25: #{fussion_forward.1} parent=0 // pred_fallthru
    _
  // Predicated region
  $region26: #{fussion_forward.1} parent=0 // pred_check
    _
  $region27: #{fussion_forward.1} parent=0 // pred_check_branch
    %34 = sbr.rel (0) target = $region29
  $region28: #{fussion_forward.1} parent=0 // pred_region
    _
  $region29: #{fussion_forward.1} parent=0 // pred_fallthru
    _
  // Predicated region
  $region30: #{fussion_forward.1} parent=0 // pred_check
    _
  $region31: #{fussion_forward.1} parent=0 // pred_check_branch
    %36 = sbr.rel (0) target = $region33
  $region32: #{fussion_forward.1} parent=0 // pred_region
    _
  $region33: #{fussion_forward.1} parent=0 // pred_fallthru
    _
  // Predicated region
  $region34: #{fussion_forward.1} parent=0 // pred_check
    _
  $region35: #{fussion_forward.1} parent=0 // pred_check_branch
    %38 = sbr.rel (0) target = $region37
  $region36: #{fussion_forward.1} parent=0 // pred_region
    _
  $region37: #{fussion_forward.1} parent=0 // pred_fallthru
    _
  // Predicated region
  $region38: #{fussion_forward.1} parent=0 // pred_check
    _
  $region39: #{fussion_forward.1} parent=0 // pred_check_branch
    %40 = sbr.rel (0) target = $region41
  $region40: #{fussion_forward.1} parent=0 // pred_region
    _
  $region41: #{fussion_forward.1} parent=0 // pred_fallthru
    _
  // Predicated region
  $region42: #{fussion_forward.1} parent=0 // pred_check
    _
  $region43: #{fussion_forward.1} parent=0 // pred_check_branch
    %42 = sbr.rel (0) target = $region45
  $region44: #{fussion_forward.1} parent=0 // pred_region
    _
  $region45: #{fussion_forward.1} parent=0 // pred_fallthru
    _
  // Predicated region
  $region46: #{fussion_forward.1} parent=0 // pred_check
    _
  $region47: #{fussion_forward.1} parent=0 // pred_check_branch
    %44 = sbr.rel (0) target = $region49
  $region48: #{fussion_forward.1} parent=0 // pred_region
    _
  $region49: #{fussion_forward.1} parent=0 // pred_fallthru
    _
  // Predicated region
  $region50: #{fussion_forward.1} parent=0 // pred_check
    _
  $region51: #{fussion_forward.1} parent=0 // pred_check_branch
    %46 = sbr.rel (0) target = $region53
  $region52: #{fussion_forward.1} parent=0 // pred_region
    _
  $region53: #{fussion_forward.1} parent=0 // pred_fallthru
    _
  // Predicated region
  $region54: #{fussion_forward.1} parent=0 // pred_check
    _
  $region55: #{fussion_forward.1} parent=0 // pred_check_branch
    %48 = sbr.rel (0) target = $region57
  $region56: #{fussion_forward.1} parent=0 // pred_region
    _
  $region57: #{fussion_forward.1} parent=0 // pred_fallthru
    _
  // Predicated region
  $region58: #{fussion_forward.1} parent=0 // pred_check
    _
  $region59: #{fussion_forward.1} parent=0 // pred_check_branch
    %50 = sbr.rel (0) target = $region61
  $region60: #{fussion_forward.1} parent=0 // pred_region
    _
  $region61: #{fussion_forward.1} parent=0 // pred_fallthru
    _
  // Predicated region
  $region62: #{fussion_forward.1} parent=0 // pred_check
    _
  $region63: #{fussion_forward.1} parent=0 // pred_check_branch
    %52 = sbr.rel (0) target = $region65
  $region64: #{fussion_forward.1} parent=0 // pred_region
    _
  $region65: #{fussion_forward.1} parent=0 // pred_fallthru
    _
  %v54 = vld [vmem:[%s0] sm:$0xf]
  %v55 = vld [vmem:[%s0 + $0x4] sm:$0xf]
  %v56 = vld [vmem:[%s0 + $0x8] sm:$0xf]
  %v57 = vld [vmem:[%s0 + $0xc] sm:$0xf]
  %v58 = vld [vmem:[%s0 + $0x10] sm:$0xf]
  %v59 = vld [vmem:[%s0 + $0x14] sm:$0xf]
  %v60 = vld [vmem:[%s0 + $0x18] sm:$0xf]
  %v61 = vld [vmem:[%s0 + $0x1c] sm:$0xf]
  %v62 = vld [vmem:[%s0 + $0x20] sm:$0xf]
  %v63 = vld [vmem:[%s0 + $0x24] sm:$0xf]
  %v64 = vld [vmem:[%s0 + $0x28] sm:$0xf]
  %v65 = vld [vmem:[%s0 + $0x2c] sm:$0xf]
  %v66 = vld [vmem:[%s0 + $0x30] sm:$0xf]
  %v67 = vld [vmem:[%s0 + $0x34] sm:$0xf]
  %v68 = vld [vmem:[%s0 + $0x38] sm:$0xf]
  %v69 = vld [vmem:[%s0 + $0x3c] sm:$0xf]
  %v70 = vld [vmem:[%s0 + $0x40] sm:$0xf]
  %v71 = vld [vmem:[%s0 + $0x44] sm:$0xf]
  %v72 = vld [vmem:[%s0 + $0x48] sm:$0xf]
  %v73 = vld [vmem:[%s0 + $0x4c] sm:$0xf]
  %v74 = vld [vmem:[%s0 + $0x50] sm:$0xf]
  %v75 = vld [vmem:[%s0 + $0x54] sm:$0xf]
  %v76 = vld [vmem:[%s0 + $0x58] sm:$0xf]
  %v77 = vld [vmem:[%s0 + $0x5c] sm:$0xf]
  %v78 = vld [vmem:[%s0 + $0x60] sm:$0xf]
  %v79 = vld [vmem:[%s0 + $0x64] sm:$0xf]
  %v80 = vld [vmem:[%s0 + $0x68] sm:$0xf]
  %v81 = vld [vmem:[%s0 + $0x6c] sm:$0xf]
  %v82 = vld [vmem:[%s0 + $0x70] sm:$0xf]
  %v83 = vld [vmem:[%s0 + $0x74] sm:$0xf]
  %v84 = vld [vmem:[%s0 + $0x78] sm:$0xf]
  %v85 = vld [vmem:[%s0 + $0x7c] sm:$0xf]
  %v86 = vld [vmem:[%s0 + $0x80] sm:$0xf]
  %v87 = vld [vmem:[%s0 + $0x84] sm:$0xf]
  %v88 = vld [vmem:[%s0 + $0x88] sm:$0xf]
  %v89 = vld [vmem:[%s0 + $0x8c] sm:$0xf]
  %v90 = vld [vmem:[%s0 + $0x90] sm:$0xf]
  %v91 = vld [vmem:[%s0 + $0x94] sm:$0xf]
  %v92 = vld [vmem:[%s0 + $0x98] sm:$0xf]
  %v93 = vld [vmem:[%s0 + $0x9c] sm:$0xf]
  %v94 = vld [vmem:[%s0 + $0xa0] sm:$0xf]
  %v95 = vld [vmem:[%s0 + $0xa4] sm:$0xf]
  %v96 = vld [vmem:[%s0 + $0xa8] sm:$0xf]
  %v97 = vld [vmem:[%s0 + $0xac] sm:$0xf]
  %v98 = vld [vmem:[%s0 + $0xb0] sm:$0xf]
  %v99 = vld [vmem:[%s0 + $0xb4] sm:$0xf]
  %v100 = vld [vmem:[%s0 + $0xb8] sm:$0xf]
  %v101 = vld [vmem:[%s0 + $0xbc] sm:$0xf]
  %v102 = vld [vmem:[%s0 + $0xc0] sm:$0xf]
  %v103 = vld [vmem:[%s0 + $0xc4] sm:$0xf]
  %v104 = vld [vmem:[%s0 + $0xc8] sm:$0xf]
  %v105 = vld [vmem:[%s0 + $0xcc] sm:$0xf]
  %v106 = vld [vmem:[%s0 + $0xd0] sm:$0xf]
  %v107 = vld [vmem:[%s0 + $0xd4] sm:$0xf]
  %v108 = vld [vmem:[%s0 + $0xd8] sm:$0xf]
  %v109 = vld [vmem:[%s0 + $0xdc] sm:$0xf]
  %v110 = vld [vmem:[%s0 + $0xe0] sm:$0xf]
  %v111 = vld [vmem:[%s0 + $0xe4] sm:$0xf]
  %v112 = vld [vmem:[%s0 + $0xe8] sm:$0xf]
  %v113 = vld [vmem:[%s0 + $0xec] sm:$0xf]
  %v114 = vld [vmem:[%s0 + $0xf0] sm:$0xf]
  %v115 = vld [vmem:[%s0 + $0xf4] sm:$0xf]
  %v116 = vld [vmem:[%s0 + $0xf8] sm:$0xf]
  %v117 = vld [vmem:[%s0 + $0xfc] sm:$0xf]
  %v118 = vld [vmem:[%s0 + $0x100] sm:$0xf]
  %v119 = vld [vmem:[%s0 + $0x104] sm:$0xf]
  %v120 = vld [vmem:[%s0 + $0x108] sm:$0xf]
  %v121 = vld [vmem:[%s0 + $0x10c] sm:$0xf]
  %v122 = vld [vmem:[%s0 + $0x110] sm:$0xf]
  %v123 = vld [vmem:[%s0 + $0x114] sm:$0xf]
  %v124 = vld [vmem:[%s0 + $0x118] sm:$0xf]
  %v125 = vld [vmem:[%s0 + $0x11c] sm:$0xf]
  %v126 = vld [vmem:[%s0 + $0x120] sm:$0xf]
  %v127 = vld [vmem:[%s0 + $0x124] sm:$0xf]
  %v128 = vld [vmem:[%s0 + $0x128] sm:$0xf]
  %v129 = vld [vmem:[%s0 + $0x12c] sm:$0xf]
  %v130 = vld [vmem:[%s0 + $0x130] sm:$0xf]
  %v131 = vld [vmem:[%s0 + $0x134] sm:$0xf]
  %v132 = vld [vmem:[%s0 + $0x138] sm:$0xf]
  %v133 = vld [vmem:[%s0 + $0x13c] sm:$0xf]
  %v134 = vld [vmem:[%s0 + $0x140] sm:$0xf]
  %v135 = vld [vmem:[%s0 + $0x144] sm:$0xf]
  %v136 = vld [vmem:[%s0 + $0x148] sm:$0xf]
  %v137 = vld [vmem:[%s0 + $0x14c] sm:$0xf]
  %v138 = vld [vmem:[%s0 + $0x150] sm:$0xf]
  %v139 = vld [vmem:[%s0 + $0x154] sm:$0xf]
  %v140 = vld [vmem:[%s0 + $0x158] sm:$0xf]
  %v141 = vld [vmem:[%s0 + $0x15c] sm:$0xf]
  %v142 = vld [vmem:[%s0 + $0x160] sm:$0xf]
  %v143 = vld [vmem:[%s0 + $0x164] sm:$0xf]
  %v144 = vld [vmem:[%s0 + $0x168] sm:$0xf]
  %v145 = vld [vmem:[%s0 + $0x16c] sm:$0xf]
  %v146 = vld [vmem:[%s0 + $0x170] sm:$0xf]
  %v147 = vld [vmem:[%s0 + $0x174] sm:$0xf]
  %v148 = vld [vmem:[%s0 + $0x178] sm:$0xf]
  %v149 = vld [vmem:[%s0 + $0x17c] sm:$0xf]
  %v150 = vld [vmem:[%s0 + $0x180] sm:$0xf]
  %v151 = vld [vmem:[%s0 + $0x184] sm:$0xf]
  %v152 = vld [vmem:[%s0 + $0x188] sm:$0xf]
  %v153 = vld [vmem:[%s0 + $0x18c] sm:$0xf]
  %v154 = vld [vmem:[%s0 + $0x190] sm:$0xf]
  %v155 = vld [vmem:[%s0 + $0x194] sm:$0xf]
  %v156 = vld [vmem:[%s0 + $0x198] sm:$0xf]
  %v157 = vld [vmem:[%s0 + $0x19c] sm:$0xf]
  %v158 = vld [vmem:[%s0 + $0x1a0] sm:$0xf]
  %v159 = vld [vmem:[%s0 + $0x1a4] sm:$0xf]
  %v160 = vld [vmem:[%s0 + $0x1a8] sm:$0xf]
  %v161 = vld [vmem:[%s0 + $0x1ac] sm:$0xf]
  %v162 = vld [vmem:[%s0 + $0x1b0] sm:$0xf]
  %v163 = vld [vmem:[%s0 + $0x1b4] sm:$0xf]
  %v164 = vld [vmem:[%s0 + $0x1b8] sm:$0xf]
  %v165 = vld [vmem:[%s0 + $0x1bc] sm:$0xf]
  %v166 = vld [vmem:[%s0 + $0x1c0] sm:$0xf]
  %v167 = vld [vmem:[%s0 + $0x1c4] sm:$0xf]
  %v168 = vld [vmem:[%s0 + $0x1c8] sm:$0xf]
  %v169 = vld [vmem:[%s0 + $0x1cc] sm:$0xf]
  %v170 = vld [vmem:[%s0 + $0x1d0] sm:$0xf]
  %v171 = vld [vmem:[%s0 + $0x1d4] sm:$0xf]
  %v172 = vld [vmem:[%s0 + $0x1d8] sm:$0xf]
  %v173 = vld [vmem:[%s0 + $0x1dc] sm:$0xf]
  %v174 = vld [vmem:[%s0 + $0x1e0] sm:$0xf]
  %v175 = vld [vmem:[%s0 + $0x1e4] sm:$0xf]
  %v176 = vld [vmem:[%s0 + $0x1e8] sm:$0xf]
  %v177 = vld [vmem:[%s0 + $0x1ec] sm:$0xf]
  %v178 = vld [vmem:[%s0 + $0x1f0] sm:$0xf]
  %v179 = vld [vmem:[%s0 + $0x1f4] sm:$0xf]
  %v180 = vld [vmem:[%s0 + $0x1f8] sm:$0xf]
  %v181 = vld [vmem:[%s0 + $0x1fc] sm:$0xf]
  %v182 = vld [vmem:[%s4] sm:$0xf]
  %v183 = vld [vmem:[%s4 + $0x4] sm:$0xf]
  %v184 = vld [vmem:[%s4 + $0x8] sm:$0xf]
  %v185 = vld [vmem:[%s4 + $0xc] sm:$0xf]
  %v186 = vld [vmem:[%s4 + $0x10] sm:$0xf]
  %v187 = vld [vmem:[%s4 + $0x14] sm:$0xf]
  %v188 = vld [vmem:[%s4 + $0x18] sm:$0xf]
  %v189 = vld [vmem:[%s4 + $0x1c] sm:$0xf]
  %v190 = vld [vmem:[%s4 + $0x20] sm:$0xf]
  %v191 = vld [vmem:[%s4 + $0x24] sm:$0xf]
  %v192 = vld [vmem:[%s4 + $0x28] sm:$0xf]
  %v193 = vld [vmem:[%s4 + $0x2c] sm:$0xf]
  %v194 = vld [vmem:[%s4 + $0x30] sm:$0xf]
  %v195 = vld [vmem:[%s4 + $0x34] sm:$0xf]
  %v196 = vld [vmem:[%s4 + $0x38] sm:$0xf]
  %v197 = vld [vmem:[%s4 + $0x3c] sm:$0xf]
  %v198 = vld [vmem:[%s5] sm:$0x1]
  %v200 = vlaneseq
  %v201 = vshrl.u32 %v200, 7
  %v202 = vsub.s32 0, %v201
  %v203 = vrot.slane %v198, %v202
  %v333 = vunpack.c.l.b16 %v54
  %v334 = vunpack.c.l.b16 %v55
  %v335 = vunpack.c.l.b16 %v56
  %v336 = vunpack.c.l.b16 %v57
  %v337 = vunpack.c.l.b16 %v58
  %v338 = vunpack.c.l.b16 %v59
  %v339 = vunpack.c.l.b16 %v60
  %v340 = vunpack.c.l.b16 %v61
  %v341 = vunpack.c.l.b16 %v62
  %v342 = vunpack.c.l.b16 %v63
  %v343 = vunpack.c.l.b16 %v64
  %v344 = vunpack.c.l.b16 %v65
  %v345 = vunpack.c.l.b16 %v66
  %v346 = vunpack.c.l.b16 %v67
  %v347 = vunpack.c.l.b16 %v68
  %v348 = vunpack.c.l.b16 %v69
  %v349 = vunpack.c.l.b16 %v70
  %v350 = vunpack.c.l.b16 %v71
  %v351 = vunpack.c.l.b16 %v72
  %v352 = vunpack.c.l.b16 %v73
  %v353 = vunpack.c.l.b16 %v74
  %v354 = vunpack.c.l.b16 %v75
  %v355 = vunpack.c.l.b16 %v76
  %v356 = vunpack.c.l.b16 %v77
  %v357 = vunpack.c.l.b16 %v78
  %v358 = vunpack.c.l.b16 %v79
  %v359 = vunpack.c.l.b16 %v80
  %v360 = vunpack.c.l.b16 %v81
  %v361 = vunpack.c.l.b16 %v82
  %v362 = vunpack.c.l.b16 %v83
  %v363 = vunpack.c.l.b16 %v84
  %v364 = vunpack.c.l.b16 %v85
  %v365 = vunpack.c.l.b16 %v86
  %v366 = vunpack.c.l.b16 %v87
  %v367 = vunpack.c.l.b16 %v88
  %v368 = vunpack.c.l.b16 %v89
  %v369 = vunpack.c.l.b16 %v90
  %v370 = vunpack.c.l.b16 %v91
  %v371 = vunpack.c.l.b16 %v92
  %v372 = vunpack.c.l.b16 %v93
  %v373 = vunpack.c.l.b16 %v94
  %v374 = vunpack.c.l.b16 %v95
  %v375 = vunpack.c.l.b16 %v96
  %v376 = vunpack.c.l.b16 %v97
  %v377 = vunpack.c.l.b16 %v98
  %v378 = vunpack.c.l.b16 %v99
  %v379 = vunpack.c.l.b16 %v100
  %v380 = vunpack.c.l.b16 %v101
  %v381 = vunpack.c.l.b16 %v102
  %v382 = vunpack.c.l.b16 %v103
  %v383 = vunpack.c.l.b16 %v104
  %v384 = vunpack.c.l.b16 %v105
  %v385 = vunpack.c.l.b16 %v106
  %v386 = vunpack.c.l.b16 %v107
  %v387 = vunpack.c.l.b16 %v108
  %v388 = vunpack.c.l.b16 %v109
  %v389 = vunpack.c.l.b16 %v110
  %v390 = vunpack.c.l.b16 %v111
  %v391 = vunpack.c.l.b16 %v112
  %v392 = vunpack.c.l.b16 %v113
  %v393 = vunpack.c.l.b16 %v114
  %v394 = vunpack.c.l.b16 %v115
  %v395 = vunpack.c.l.b16 %v116
  %v396 = vunpack.c.l.b16 %v117
  %v397 = vunpack.c.l.b16 %v118
  %v398 = vunpack.c.l.b16 %v119
  %v399 = vunpack.c.l.b16 %v120
  %v400 = vunpack.c.l.b16 %v121
  %v401 = vunpack.c.l.b16 %v122
  %v402 = vunpack.c.l.b16 %v123
  %v403 = vunpack.c.l.b16 %v124
  %v404 = vunpack.c.l.b16 %v125
  %v405 = vunpack.c.l.b16 %v126
  %v406 = vunpack.c.l.b16 %v127
  %v407 = vunpack.c.l.b16 %v128
  %v408 = vunpack.c.l.b16 %v129
  %v409 = vunpack.c.l.b16 %v130
  %v410 = vunpack.c.l.b16 %v131
  %v411 = vunpack.c.l.b16 %v132
  %v412 = vunpack.c.l.b16 %v133
  %v413 = vunpack.c.l.b16 %v134
  %v414 = vunpack.c.l.b16 %v135
  %v415 = vunpack.c.l.b16 %v136
  %v416 = vunpack.c.l.b16 %v137
  %v417 = vunpack.c.l.b16 %v138
  %v418 = vunpack.c.l.b16 %v139
  %v419 = vunpack.c.l.b16 %v140
  %v420 = vunpack.c.l.b16 %v141
  %v421 = vunpack.c.l.b16 %v142
  %v422 = vunpack.c.l.b16 %v143
  %v423 = vunpack.c.l.b16 %v144
  %v424 = vunpack.c.l.b16 %v145
  %v425 = vunpack.c.l.b16 %v146
  %v426 = vunpack.c.l.b16 %v147
  %v427 = vunpack.c.l.b16 %v148
  %v428 = vunpack.c.l.b16 %v149
  %v429 = vunpack.c.l.b16 %v150
  %v430 = vunpack.c.l.b16 %v151
  %v431 = vunpack.c.l.b16 %v152
  %v432 = vunpack.c.l.b16 %v153
  %v433 = vunpack.c.l.b16 %v154
  %v434 = vunpack.c.l.b16 %v155
  %v435 = vunpack.c.l.b16 %v156
  %v436 = vunpack.c.l.b16 %v157
  %v437 = vunpack.c.l.b16 %v158
  %v438 = vunpack.c.l.b16 %v159
  %v439 = vunpack.c.l.b16 %v160
  %v440 = vunpack.c.l.b16 %v161
  %v441 = vunpack.c.l.b16 %v162
  %v442 = vunpack.c.l.b16 %v163
  %v443 = vunpack.c.l.b16 %v164
  %v444 = vunpack.c.l.b16 %v165
  %v445 = vunpack.c.l.b16 %v166
  %v446 = vunpack.c.l.b16 %v167
  %v447 = vunpack.c.l.b16 %v168
  %v448 = vunpack.c.l.b16 %v169
  %v449 = vunpack.c.l.b16 %v170
  %v450 = vunpack.c.l.b16 %v171
  %v451 = vunpack.c.l.b16 %v172
  %v452 = vunpack.c.l.b16 %v173
  %v453 = vunpack.c.l.b16 %v174
  %v454 = vunpack.c.l.b16 %v175
  %v455 = vunpack.c.l.b16 %v176
  %v456 = vunpack.c.l.b16 %v177
  %v457 = vunpack.c.l.b16 %v178
  %v458 = vunpack.c.l.b16 %v179
  %v459 = vunpack.c.l.b16 %v180
  %v460 = vunpack.c.l.b16 %v181
  %v461 = vpack.c.b16 %v334, %v333
  %v462 = vpack.c.b16 %v336, %v335
  %v463 = vpack.c.b16 %v338, %v337
  %v464 = vpack.c.b16 %v340, %v339
  %v465 = vpack.c.b16 %v342, %v341
  %v466 = vpack.c.b16 %v344, %v343
  %v467 = vpack.c.b16 %v346, %v345
  %v468 = vpack.c.b16 %v348, %v347
  %v469 = vpack.c.b16 %v350, %v349
  %v470 = vpack.c.b16 %v352, %v351
  %v471 = vpack.c.b16 %v354, %v353
  %v472 = vpack.c.b16 %v356, %v355
  %v473 = vpack.c.b16 %v358, %v357
  %v474 = vpack.c.b16 %v360, %v359
  %v475 = vpack.c.b16 %v362, %v361
  %v476 = vpack.c.b16 %v364, %v363
  %v477 = vpack.c.b16 %v366, %v365
  %v478 = vpack.c.b16 %v368, %v367
  %v479 = vpack.c.b16 %v370, %v369
  %v480 = vpack.c.b16 %v372, %v371
  %v481 = vpack.c.b16 %v374, %v373
  %v482 = vpack.c.b16 %v376, %v375
  %v483 = vpack.c.b16 %v378, %v377
  %v484 = vpack.c.b16 %v380, %v379
  %v485 = vpack.c.b16 %v382, %v381
  %v486 = vpack.c.b16 %v384, %v383
  %v487 = vpack.c.b16 %v386, %v385
  %v488 = vpack.c.b16 %v388, %v387
  %v489 = vpack.c.b16 %v390, %v389
  %v490 = vpack.c.b16 %v392, %v391
  %v491 = vpack.c.b16 %v394, %v393
  %v492 = vpack.c.b16 %v396, %v395
  %v493 = vpack.c.b16 %v398, %v397
  %v494 = vpack.c.b16 %v400, %v399
  %v495 = vpack.c.b16 %v402, %v401
  %v496 = vpack.c.b16 %v404, %v403
  %v497 = vpack.c.b16 %v406, %v405
  %v498 = vpack.c.b16 %v408, %v407
  %v499 = vpack.c.b16 %v410, %v409
  %v500 = vpack.c.b16 %v412, %v411
  %v501 = vpack.c.b16 %v414, %v413
  %v502 = vpack.c.b16 %v416, %v415
  %v503 = vpack.c.b16 %v418, %v417
  %v504 = vpack.c.b16 %v420, %v419
  %v505 = vpack.c.b16 %v422, %v421
  %v506 = vpack.c.b16 %v424, %v423
  %v507 = vpack.c.b16 %v426, %v425
  %v508 = vpack.c.b16 %v428, %v427
  %v509 = vpack.c.b16 %v430, %v429
  %v510 = vpack.c.b16 %v432, %v431
  %v511 = vpack.c.b16 %v434, %v433
  %v512 = vpack.c.b16 %v436, %v435
  %v513 = vpack.c.b16 %v438, %v437
  %v514 = vpack.c.b16 %v440, %v439
  %v515 = vpack.c.b16 %v442, %v441
  %v516 = vpack.c.b16 %v444, %v443
  %v517 = vpack.c.b16 %v446, %v445
  %v518 = vpack.c.b16 %v448, %v447
  %v519 = vpack.c.b16 %v450, %v449
  %v520 = vpack.c.b16 %v452, %v451
  %v521 = vpack.c.b16 %v454, %v453
  %v522 = vpack.c.b16 %v456, %v455
  %v523 = vpack.c.b16 %v458, %v457
  %v524 = vpack.c.b16 %v460, %v459
  %v605 = vunpack.c.l.b16 %v182
  %v606 = vunpack.c.l.b16 %v183
  %v607 = vunpack.c.l.b16 %v184
  %v608 = vunpack.c.l.b16 %v185
  %v609 = vunpack.c.l.b16 %v186
  %v610 = vunpack.c.l.b16 %v187
  %v611 = vunpack.c.l.b16 %v188
  %v612 = vunpack.c.l.b16 %v189
  %v613 = vunpack.c.l.b16 %v190
  %v614 = vunpack.c.l.b16 %v191
  %v615 = vunpack.c.l.b16 %v192
  %v616 = vunpack.c.l.b16 %v193
  %v617 = vunpack.c.l.b16 %v194
  %v618 = vunpack.c.l.b16 %v195
  %v619 = vunpack.c.l.b16 %v196
  %v620 = vunpack.c.l.b16 %v197
  %v621 = vpack.c.b16 %v606, %v605
  %v622 = vpack.c.b16 %v608, %v607
  %v623 = vpack.c.b16 %v610, %v609
  %v624 = vpack.c.b16 %v612, %v611
  %v625 = vpack.c.b16 %v614, %v613
  %v626 = vpack.c.b16 %v616, %v615
  %v627 = vpack.c.b16 %v618, %v617
  %v628 = vpack.c.b16 %v620, %v619
  %637 = vmatprep.subr.bf16.mxu0 0
  %638 = vmatpush1.bf16.msra.mxu0 %v628
  %639 = vmatprep.subr.bf16.mxu0 0
  %640 = vmatpush1.bf16.msra.mxu0 %v627
  %641 = vmatprep.subr.bf16.mxu0 0
  %642 = vmatpush1.bf16.msra.mxu0 %v626
  %643 = vmatprep.subr.bf16.mxu0 0
  %644 = vmatpush1.bf16.msra.mxu0 %v625
  %645 = vmatprep.subr.bf16.mxu0 0
  %646 = vmatpush1.bf16.msra.mxu0 %v624
  %647 = vmatprep.subr.bf16.mxu0 0
  %648 = vmatpush1.bf16.msra.mxu0 %v623
  %649 = vmatprep.subr.bf16.mxu0 0
  %650 = vmatpush1.bf16.msra.mxu0 %v622
  %651 = vmatprep.subr.bf16.mxu0 0
  %652 = vmatpush1.bf16.msra.mxu0 %v621
  %653 = vmatprep.subr.bf16.mxu0 0
  %654 = vmatpush2.bf16.msra.mxu0 0
  %655 = vmatprep.subr.bf16.mxu0 0
  %656 = vmatpush2.bf16.msra.mxu0 0
  %657 = vmatprep.subr.bf16.mxu0 0
  %658 = vmatpush2.bf16.msra.mxu0 0
  %659 = vmatprep.subr.bf16.mxu0 0
  %660 = vmatpush2.bf16.msra.mxu0 0
  %661 = vmatprep.subr.bf16.mxu0 0
  %662 = vmatpush2.bf16.msra.mxu0 0
  %663 = vmatprep.subr.bf16.mxu0 0
  %664 = vmatpush2.bf16.msra.mxu0 0
  %665 = vmatprep.subr.bf16.mxu0 0
  %666 = vmatpush2.bf16.msra.mxu0 0
  %667 = vmatprep.subr.bf16.mxu0 0
  %668 = vmatpush2.bf16.msra.mxu0 0
  %669 = vmatprep.mubr.bf16.mxu0 0
  %670 = vmatmul.mubr.bf16.gmra.mxu0 %v461
  %v671 = vpop.f32.mrf.mxu0
  %v672 = vadd.f32 %v203, %v671
  %v673 = vpop.f32.mrf.mxu0
  %v674 = vpop.f32.mrf.mxu0
  %v675 = vadd.f32 %v203, %v674
  %v676 = vpop.f32.mrf.mxu0
  %677 = vmatprep.mubr.bf16.mxu0 0
  %678 = vmatmul.mubr.bf16.gmra.mxu0 %v462
  %v679 = vpop.f32.mrf.mxu0
  %v680 = vadd.f32 %v203, %v679
  %v681 = vpop.f32.mrf.mxu0
  %v682 = vpop.f32.mrf.mxu0
  %v683 = vadd.f32 %v203, %v682
  %v684 = vpop.f32.mrf.mxu0
  %685 = vmatprep.mubr.bf16.mxu0 0
  %686 = vmatmul.mubr.bf16.gmra.mxu0 %v463
  %v687 = vpop.f32.mrf.mxu0
  %v688 = vadd.f32 %v203, %v687
  %v689 = vpop.f32.mrf.mxu0
  %v690 = vpop.f32.mrf.mxu0
  %v691 = vadd.f32 %v203, %v690
  %v692 = vpop.f32.mrf.mxu0
  %693 = vmatprep.mubr.bf16.mxu0 0
  %694 = vmatmul.mubr.bf16.gmra.mxu0 %v464
  %v695 = vpop.f32.mrf.mxu0
  %v696 = vadd.f32 %v203, %v695
  %v697 = vpop.f32.mrf.mxu0
  %v698 = vpop.f32.mrf.mxu0
  %v699 = vadd.f32 %v203, %v698
  %v700 = vpop.f32.mrf.mxu0
  %701 = vmatprep.mubr.bf16.mxu0 0
  %702 = vmatmul.mubr.bf16.gmra.mxu0 %v465
  %v703 = vpop.f32.mrf.mxu0
  %v704 = vadd.f32 %v203, %v703
  %v705 = vpop.f32.mrf.mxu0
  %v706 = vpop.f32.mrf.mxu0
  %v707 = vadd.f32 %v203, %v706
  %v708 = vpop.f32.mrf.mxu0
  %709 = vmatprep.mubr.bf16.mxu0 0
  %710 = vmatmul.mubr.bf16.gmra.mxu0 %v466
  %v711 = vpop.f32.mrf.mxu0
  %v712 = vadd.f32 %v203, %v711
  %v713 = vpop.f32.mrf.mxu0
  %v714 = vpop.f32.mrf.mxu0
  %v715 = vadd.f32 %v203, %v714
  %v716 = vpop.f32.mrf.mxu0
  %717 = vmatprep.mubr.bf16.mxu0 0
  %718 = vmatmul.mubr.bf16.gmra.mxu0 %v467
  %v719 = vpop.f32.mrf.mxu0
  %v720 = vadd.f32 %v203, %v719
  %v721 = vpop.f32.mrf.mxu0
  %v722 = vpop.f32.mrf.mxu0
  %v723 = vadd.f32 %v203, %v722
  %v724 = vpop.f32.mrf.mxu0
  %725 = vmatprep.mubr.bf16.mxu0 0
  %726 = vmatmul.mubr.bf16.gmra.mxu0 %v468
  %v727 = vpop.f32.mrf.mxu0
  %v728 = vadd.f32 %v203, %v727
  %v729 = vpop.f32.mrf.mxu0
  %v730 = vpop.f32.mrf.mxu0
  %v731 = vadd.f32 %v203, %v730
  %v732 = vpop.f32.mrf.mxu0
  %733 = vmatprep.mubr.bf16.mxu0 0
  %734 = vmatmul.mubr.bf16.gmra.mxu0 %v469
  %v735 = vpop.f32.mrf.mxu0
  %v736 = vadd.f32 %v203, %v735
  %v737 = vpop.f32.mrf.mxu0
  %v738 = vpop.f32.mrf.mxu0
  %v739 = vadd.f32 %v203, %v738
  %v740 = vpop.f32.mrf.mxu0
  %741 = vmatprep.mubr.bf16.mxu0 0
  %742 = vmatmul.mubr.bf16.gmra.mxu0 %v470
  %v743 = vpop.f32.mrf.mxu0
  %v744 = vadd.f32 %v203, %v743
  %v745 = vpop.f32.mrf.mxu0
  %v746 = vpop.f32.mrf.mxu0
  %v747 = vadd.f32 %v203, %v746
  %v748 = vpop.f32.mrf.mxu0
  %749 = vmatprep.mubr.bf16.mxu0 0
  %750 = vmatmul.mubr.bf16.gmra.mxu0 %v471
  %v751 = vpop.f32.mrf.mxu0
  %v752 = vadd.f32 %v203, %v751
  %v753 = vpop.f32.mrf.mxu0
  %v754 = vpop.f32.mrf.mxu0
  %v755 = vadd.f32 %v203, %v754
  %v756 = vpop.f32.mrf.mxu0
  %757 = vmatprep.mubr.bf16.mxu0 0
  %758 = vmatmul.mubr.bf16.gmra.mxu0 %v472
  %v759 = vpop.f32.mrf.mxu0
  %v760 = vadd.f32 %v203, %v759
  %v761 = vpop.f32.mrf.mxu0
  %v762 = vpop.f32.mrf.mxu0
  %v763 = vadd.f32 %v203, %v762
  %v764 = vpop.f32.mrf.mxu0
  %765 = vmatprep.mubr.bf16.mxu0 0
  %766 = vmatmul.mubr.bf16.gmra.mxu0 %v473
  %v767 = vpop.f32.mrf.mxu0
  %v768 = vadd.f32 %v203, %v767
  %v769 = vpop.f32.mrf.mxu0
  %v770 = vpop.f32.mrf.mxu0
  %v771 = vadd.f32 %v203, %v770
  %v772 = vpop.f32.mrf.mxu0
  %773 = vmatprep.mubr.bf16.mxu0 0
  %774 = vmatmul.mubr.bf16.gmra.mxu0 %v474
  %v775 = vpop.f32.mrf.mxu0
  %v776 = vadd.f32 %v203, %v775
  %v777 = vpop.f32.mrf.mxu0
  %v778 = vpop.f32.mrf.mxu0
  %v779 = vadd.f32 %v203, %v778
  %v780 = vpop.f32.mrf.mxu0
  %781 = vmatprep.mubr.bf16.mxu0 0
  %782 = vmatmul.mubr.bf16.gmra.mxu0 %v475
  %v783 = vpop.f32.mrf.mxu0
  %v784 = vadd.f32 %v203, %v783
  %v785 = vpop.f32.mrf.mxu0
  %v786 = vpop.f32.mrf.mxu0
  %v787 = vadd.f32 %v203, %v786
  %v788 = vpop.f32.mrf.mxu0
  %789 = vmatprep.mubr.bf16.mxu0 0
  %790 = vmatmul.mubr.bf16.gmra.mxu0 %v476
  %v791 = vpop.f32.mrf.mxu0
  %v792 = vadd.f32 %v203, %v791
  %v793 = vpop.f32.mrf.mxu0
  %v794 = vpop.f32.mrf.mxu0
  %v795 = vadd.f32 %v203, %v794
  %v796 = vpop.f32.mrf.mxu0
  %797 = vmatprep.mubr.bf16.mxu0 0
  %798 = vmatmul.mubr.bf16.gmra.mxu0 %v477
  %v799 = vpop.f32.mrf.mxu0
  %v800 = vadd.f32 %v203, %v799
  %v801 = vpop.f32.mrf.mxu0
  %v802 = vpop.f32.mrf.mxu0
  %v803 = vadd.f32 %v203, %v802
  %v804 = vpop.f32.mrf.mxu0
  %805 = vmatprep.mubr.bf16.mxu0 0
  %806 = vmatmul.mubr.bf16.gmra.mxu0 %v478
  %v807 = vpop.f32.mrf.mxu0
  %v808 = vadd.f32 %v203, %v807
  %v809 = vpop.f32.mrf.mxu0
  %v810 = vpop.f32.mrf.mxu0
  %v811 = vadd.f32 %v203, %v810
  %v812 = vpop.f32.mrf.mxu0
  %813 = vmatprep.mubr.bf16.mxu0 0
  %814 = vmatmul.mubr.bf16.gmra.mxu0 %v479
  %v815 = vpop.f32.mrf.mxu0
  %v816 = vadd.f32 %v203, %v815
  %v817 = vpop.f32.mrf.mxu0
  %v818 = vpop.f32.mrf.mxu0
  %v819 = vadd.f32 %v203, %v818
  %v820 = vpop.f32.mrf.mxu0
  %821 = vmatprep.mubr.bf16.mxu0 0
  %822 = vmatmul.mubr.bf16.gmra.mxu0 %v480
  %v823 = vpop.f32.mrf.mxu0
  %v824 = vadd.f32 %v203, %v823
  %v825 = vpop.f32.mrf.mxu0
  %v826 = vpop.f32.mrf.mxu0
  %v827 = vadd.f32 %v203, %v826
  %v828 = vpop.f32.mrf.mxu0
  %829 = vmatprep.mubr.bf16.mxu0 0
  %830 = vmatmul.mubr.bf16.gmra.mxu0 %v481
  %v831 = vpop.f32.mrf.mxu0
  %v832 = vadd.f32 %v203, %v831
  %v833 = vpop.f32.mrf.mxu0
  %v834 = vpop.f32.mrf.mxu0
  %v835 = vadd.f32 %v203, %v834
  %v836 = vpop.f32.mrf.mxu0
  %837 = vmatprep.mubr.bf16.mxu0 0
  %838 = vmatmul.mubr.bf16.gmra.mxu0 %v482
  %v839 = vpop.f32.mrf.mxu0
  %v840 = vadd.f32 %v203, %v839
  %v841 = vpop.f32.mrf.mxu0
  %v842 = vpop.f32.mrf.mxu0
  %v843 = vadd.f32 %v203, %v842
  %v844 = vpop.f32.mrf.mxu0
  %845 = vmatprep.mubr.bf16.mxu0 0
  %846 = vmatmul.mubr.bf16.gmra.mxu0 %v483
  %v847 = vpop.f32.mrf.mxu0
  %v848 = vadd.f32 %v203, %v847
  %v849 = vpop.f32.mrf.mxu0
  %v850 = vpop.f32.mrf.mxu0
  %v851 = vadd.f32 %v203, %v850
  %v852 = vpop.f32.mrf.mxu0
  %853 = vmatprep.mubr.bf16.mxu0 0
  %854 = vmatmul.mubr.bf16.gmra.mxu0 %v484
  %v855 = vpop.f32.mrf.mxu0
  %v856 = vadd.f32 %v203, %v855
  %v857 = vpop.f32.mrf.mxu0
  %v858 = vpop.f32.mrf.mxu0
  %v859 = vadd.f32 %v203, %v858
  %v860 = vpop.f32.mrf.mxu0
  %861 = vmatprep.mubr.bf16.mxu0 0
  %862 = vmatmul.mubr.bf16.gmra.mxu0 %v485
  %v863 = vpop.f32.mrf.mxu0
  %v864 = vadd.f32 %v203, %v863
  %v865 = vpop.f32.mrf.mxu0
  %v866 = vpop.f32.mrf.mxu0
  %v867 = vadd.f32 %v203, %v866
  %v868 = vpop.f32.mrf.mxu0
  %869 = vmatprep.mubr.bf16.mxu0 0
  %870 = vmatmul.mubr.bf16.gmra.mxu0 %v486
  %v871 = vpop.f32.mrf.mxu0
  %v872 = vadd.f32 %v203, %v871
  %v873 = vpop.f32.mrf.mxu0
  %v874 = vpop.f32.mrf.mxu0
  %v875 = vadd.f32 %v203, %v874
  %v876 = vpop.f32.mrf.mxu0
  %877 = vmatprep.mubr.bf16.mxu0 0
  %878 = vmatmul.mubr.bf16.gmra.mxu0 %v487
  %v879 = vpop.f32.mrf.mxu0
  %v880 = vadd.f32 %v203, %v879
  %v881 = vpop.f32.mrf.mxu0
  %v882 = vpop.f32.mrf.mxu0
  %v883 = vadd.f32 %v203, %v882
  %v884 = vpop.f32.mrf.mxu0
  %885 = vmatprep.mubr.bf16.mxu0 0
  %886 = vmatmul.mubr.bf16.gmra.mxu0 %v488
  %v887 = vpop.f32.mrf.mxu0
  %v888 = vadd.f32 %v203, %v887
  %v889 = vpop.f32.mrf.mxu0
  %v890 = vpop.f32.mrf.mxu0
  %v891 = vadd.f32 %v203, %v890
  %v892 = vpop.f32.mrf.mxu0
  %893 = vmatprep.mubr.bf16.mxu0 0
  %894 = vmatmul.mubr.bf16.gmra.mxu0 %v489
  %v895 = vpop.f32.mrf.mxu0
  %v896 = vadd.f32 %v203, %v895
  %v897 = vpop.f32.mrf.mxu0
  %v898 = vpop.f32.mrf.mxu0
  %v899 = vadd.f32 %v203, %v898
  %v900 = vpop.f32.mrf.mxu0
  %901 = vmatprep.mubr.bf16.mxu0 0
  %902 = vmatmul.mubr.bf16.gmra.mxu0 %v490
  %v903 = vpop.f32.mrf.mxu0
  %v904 = vadd.f32 %v203, %v903
  %v905 = vpop.f32.mrf.mxu0
  %v906 = vpop.f32.mrf.mxu0
  %v907 = vadd.f32 %v203, %v906
  %v908 = vpop.f32.mrf.mxu0
  %909 = vmatprep.mubr.bf16.mxu0 0
  %910 = vmatmul.mubr.bf16.gmra.mxu0 %v491
  %v911 = vpop.f32.mrf.mxu0
  %v912 = vadd.f32 %v203, %v911
  %v913 = vpop.f32.mrf.mxu0
  %v914 = vpop.f32.mrf.mxu0
  %v915 = vadd.f32 %v203, %v914
  %v916 = vpop.f32.mrf.mxu0
  %917 = vmatprep.mubr.bf16.mxu0 0
  %918 = vmatmul.mubr.bf16.gmra.mxu0 %v492
  %v919 = vpop.f32.mrf.mxu0
  %v920 = vadd.f32 %v203, %v919
  %v921 = vpop.f32.mrf.mxu0
  %v922 = vpop.f32.mrf.mxu0
  %v923 = vadd.f32 %v203, %v922
  %v924 = vpop.f32.mrf.mxu0
  %925 = vmatprep.mubr.bf16.mxu0 0
  %926 = vmatmul.mubr.bf16.gmra.mxu0 %v493
  %v927 = vpop.f32.mrf.mxu0
  %v928 = vadd.f32 %v203, %v927
  %v929 = vpop.f32.mrf.mxu0
  %v930 = vpop.f32.mrf.mxu0
  %v931 = vadd.f32 %v203, %v930
  %v932 = vpop.f32.mrf.mxu0
  %933 = vmatprep.mubr.bf16.mxu0 0
  %934 = vmatmul.mubr.bf16.gmra.mxu0 %v494
  %v935 = vpop.f32.mrf.mxu0
  %v936 = vadd.f32 %v203, %v935
  %v937 = vpop.f32.mrf.mxu0
  %v938 = vpop.f32.mrf.mxu0
  %v939 = vadd.f32 %v203, %v938
  %v940 = vpop.f32.mrf.mxu0
  %941 = vmatprep.mubr.bf16.mxu0 0
  %942 = vmatmul.mubr.bf16.gmra.mxu0 %v495
  %v943 = vpop.f32.mrf.mxu0
  %v944 = vadd.f32 %v203, %v943
  %v945 = vpop.f32.mrf.mxu0
  %v946 = vpop.f32.mrf.mxu0
  %v947 = vadd.f32 %v203, %v946
  %v948 = vpop.f32.mrf.mxu0
  %949 = vmatprep.mubr.bf16.mxu0 0
  %950 = vmatmul.mubr.bf16.gmra.mxu0 %v496
  %v951 = vpop.f32.mrf.mxu0
  %v952 = vadd.f32 %v203, %v951
  %v953 = vpop.f32.mrf.mxu0
  %v954 = vpop.f32.mrf.mxu0
  %v955 = vadd.f32 %v203, %v954
  %v956 = vpop.f32.mrf.mxu0
  %957 = vmatprep.mubr.bf16.mxu0 0
  %958 = vmatmul.mubr.bf16.gmra.mxu0 %v497
  %v959 = vpop.f32.mrf.mxu0
  %v960 = vadd.f32 %v203, %v959
  %v961 = vpop.f32.mrf.mxu0
  %v962 = vpop.f32.mrf.mxu0
  %v963 = vadd.f32 %v203, %v962
  %v964 = vpop.f32.mrf.mxu0
  %965 = vmatprep.mubr.bf16.mxu0 0
  %966 = vmatmul.mubr.bf16.gmra.mxu0 %v498
  %v967 = vpop.f32.mrf.mxu0
  %v968 = vadd.f32 %v203, %v967
  %v969 = vpop.f32.mrf.mxu0
  %v970 = vpop.f32.mrf.mxu0
  %v971 = vadd.f32 %v203, %v970
  %v972 = vpop.f32.mrf.mxu0
  %973 = vmatprep.mubr.bf16.mxu0 0
  %974 = vmatmul.mubr.bf16.gmra.mxu0 %v499
  %v975 = vpop.f32.mrf.mxu0
  %v976 = vadd.f32 %v203, %v975
  %v977 = vpop.f32.mrf.mxu0
  %v978 = vpop.f32.mrf.mxu0
  %v979 = vadd.f32 %v203, %v978
  %v980 = vpop.f32.mrf.mxu0
  %981 = vmatprep.mubr.bf16.mxu0 0
  %982 = vmatmul.mubr.bf16.gmra.mxu0 %v500
  %v983 = vpop.f32.mrf.mxu0
  %v984 = vadd.f32 %v203, %v983
  %v985 = vpop.f32.mrf.mxu0
  %v986 = vpop.f32.mrf.mxu0
  %v987 = vadd.f32 %v203, %v986
  %v988 = vpop.f32.mrf.mxu0
  %989 = vmatprep.mubr.bf16.mxu0 0
  %990 = vmatmul.mubr.bf16.gmra.mxu0 %v501
  %v991 = vpop.f32.mrf.mxu0
  %v992 = vadd.f32 %v203, %v991
  %v993 = vpop.f32.mrf.mxu0
  %v994 = vpop.f32.mrf.mxu0
  %v995 = vadd.f32 %v203, %v994
  %v996 = vpop.f32.mrf.mxu0
  %997 = vmatprep.mubr.bf16.mxu0 0
  %998 = vmatmul.mubr.bf16.gmra.mxu0 %v502
  %v999 = vpop.f32.mrf.mxu0
  %v1000 = vadd.f32 %v203, %v999
  %v1001 = vpop.f32.mrf.mxu0
  %v1002 = vpop.f32.mrf.mxu0
  %v1003 = vadd.f32 %v203, %v1002
  %v1004 = vpop.f32.mrf.mxu0
  %1005 = vmatprep.mubr.bf16.mxu0 0
  %1006 = vmatmul.mubr.bf16.gmra.mxu0 %v503
  %v1007 = vpop.f32.mrf.mxu0
  %v1008 = vadd.f32 %v203, %v1007
  %v1009 = vpop.f32.mrf.mxu0
  %v1010 = vpop.f32.mrf.mxu0
  %v1011 = vadd.f32 %v203, %v1010
  %v1012 = vpop.f32.mrf.mxu0
  %1013 = vmatprep.mubr.bf16.mxu0 0
  %1014 = vmatmul.mubr.bf16.gmra.mxu0 %v504
  %v1015 = vpop.f32.mrf.mxu0
  %v1016 = vadd.f32 %v203, %v1015
  %v1017 = vpop.f32.mrf.mxu0
  %v1018 = vpop.f32.mrf.mxu0
  %v1019 = vadd.f32 %v203, %v1018
  %v1020 = vpop.f32.mrf.mxu0
  %1021 = vmatprep.mubr.bf16.mxu0 0
  %1022 = vmatmul.mubr.bf16.gmra.mxu0 %v505
  %v1023 = vpop.f32.mrf.mxu0
  %v1024 = vadd.f32 %v203, %v1023
  %v1025 = vpop.f32.mrf.mxu0
  %v1026 = vpop.f32.mrf.mxu0
  %v1027 = vadd.f32 %v203, %v1026
  %v1028 = vpop.f32.mrf.mxu0
  %1029 = vmatprep.mubr.bf16.mxu0 0
  %1030 = vmatmul.mubr.bf16.gmra.mxu0 %v506
  %v1031 = vpop.f32.mrf.mxu0
  %v1032 = vadd.f32 %v203, %v1031
  %v1033 = vpop.f32.mrf.mxu0
  %v1034 = vpop.f32.mrf.mxu0
  %v1035 = vadd.f32 %v203, %v1034
  %v1036 = vpop.f32.mrf.mxu0
  %1037 = vmatprep.mubr.bf16.mxu0 0
  %1038 = vmatmul.mubr.bf16.gmra.mxu0 %v507
  %v1039 = vpop.f32.mrf.mxu0
  %v1040 = vadd.f32 %v203, %v1039
  %v1041 = vpop.f32.mrf.mxu0
  %v1042 = vpop.f32.mrf.mxu0
  %v1043 = vadd.f32 %v203, %v1042
  %v1044 = vpop.f32.mrf.mxu0
  %1045 = vmatprep.mubr.bf16.mxu0 0
  %1046 = vmatmul.mubr.bf16.gmra.mxu0 %v508
  %v1047 = vpop.f32.mrf.mxu0
  %v1048 = vadd.f32 %v203, %v1047
  %v1049 = vpop.f32.mrf.mxu0
  %v1050 = vpop.f32.mrf.mxu0
  %v1051 = vadd.f32 %v203, %v1050
  %v1052 = vpop.f32.mrf.mxu0
  %1053 = vmatprep.mubr.bf16.mxu0 0
  %1054 = vmatmul.mubr.bf16.gmra.mxu0 %v509
  %v1055 = vpop.f32.mrf.mxu0
  %v1056 = vadd.f32 %v203, %v1055
  %v1057 = vpop.f32.mrf.mxu0
  %v1058 = vpop.f32.mrf.mxu0
  %v1059 = vadd.f32 %v203, %v1058
  %v1060 = vpop.f32.mrf.mxu0
  %1061 = vmatprep.mubr.bf16.mxu0 0
  %1062 = vmatmul.mubr.bf16.gmra.mxu0 %v510
  %v1063 = vpop.f32.mrf.mxu0
  %v1064 = vadd.f32 %v203, %v1063
  %v1065 = vpop.f32.mrf.mxu0
  %v1066 = vpop.f32.mrf.mxu0
  %v1067 = vadd.f32 %v203, %v1066
  %v1068 = vpop.f32.mrf.mxu0
  %1069 = vmatprep.mubr.bf16.mxu0 0
  %1070 = vmatmul.mubr.bf16.gmra.mxu0 %v511
  %v1071 = vpop.f32.mrf.mxu0
  %v1072 = vadd.f32 %v203, %v1071
  %v1073 = vpop.f32.mrf.mxu0
  %v1074 = vpop.f32.mrf.mxu0
  %v1075 = vadd.f32 %v203, %v1074
  %v1076 = vpop.f32.mrf.mxu0
  %1077 = vmatprep.mubr.bf16.mxu0 0
  %1078 = vmatmul.mubr.bf16.gmra.mxu0 %v512
  %v1079 = vpop.f32.mrf.mxu0
  %v1080 = vadd.f32 %v203, %v1079
  %v1081 = vpop.f32.mrf.mxu0
  %v1082 = vpop.f32.mrf.mxu0
  %v1083 = vadd.f32 %v203, %v1082
  %v1084 = vpop.f32.mrf.mxu0
  %1085 = vmatprep.mubr.bf16.mxu0 0
  %1086 = vmatmul.mubr.bf16.gmra.mxu0 %v513
  %v1087 = vpop.f32.mrf.mxu0
  %v1088 = vadd.f32 %v203, %v1087
  %v1089 = vpop.f32.mrf.mxu0
  %v1090 = vpop.f32.mrf.mxu0
  %v1091 = vadd.f32 %v203, %v1090
  %v1092 = vpop.f32.mrf.mxu0
  %1093 = vmatprep.mubr.bf16.mxu0 0
  %1094 = vmatmul.mubr.bf16.gmra.mxu0 %v514
  %v1095 = vpop.f32.mrf.mxu0
  %v1096 = vadd.f32 %v203, %v1095
  %v1097 = vpop.f32.mrf.mxu0
  %v1098 = vpop.f32.mrf.mxu0
  %v1099 = vadd.f32 %v203, %v1098
  %v1100 = vpop.f32.mrf.mxu0
  %1101 = vmatprep.mubr.bf16.mxu0 0
  %1102 = vmatmul.mubr.bf16.gmra.mxu0 %v515
  %v1103 = vpop.f32.mrf.mxu0
  %v1104 = vadd.f32 %v203, %v1103
  %v1105 = vpop.f32.mrf.mxu0
  %v1106 = vpop.f32.mrf.mxu0
  %v1107 = vadd.f32 %v203, %v1106
  %v1108 = vpop.f32.mrf.mxu0
  %1109 = vmatprep.mubr.bf16.mxu0 0
  %1110 = vmatmul.mubr.bf16.gmra.mxu0 %v516
  %v1111 = vpop.f32.mrf.mxu0
  %v1112 = vadd.f32 %v203, %v1111
  %v1113 = vpop.f32.mrf.mxu0
  %v1114 = vpop.f32.mrf.mxu0
  %v1115 = vadd.f32 %v203, %v1114
  %v1116 = vpop.f32.mrf.mxu0
  %1117 = vmatprep.mubr.bf16.mxu0 0
  %1118 = vmatmul.mubr.bf16.gmra.mxu0 %v517
  %v1119 = vpop.f32.mrf.mxu0
  %v1120 = vadd.f32 %v203, %v1119
  %v1121 = vpop.f32.mrf.mxu0
  %v1122 = vpop.f32.mrf.mxu0
  %v1123 = vadd.f32 %v203, %v1122
  %v1124 = vpop.f32.mrf.mxu0
  %1125 = vmatprep.mubr.bf16.mxu0 0
  %1126 = vmatmul.mubr.bf16.gmra.mxu0 %v518
  %v1127 = vpop.f32.mrf.mxu0
  %v1128 = vadd.f32 %v203, %v1127
  %v1129 = vpop.f32.mrf.mxu0
  %v1130 = vpop.f32.mrf.mxu0
  %v1131 = vadd.f32 %v203, %v1130
  %v1132 = vpop.f32.mrf.mxu0
  %1133 = vmatprep.mubr.bf16.mxu0 0
  %1134 = vmatmul.mubr.bf16.gmra.mxu0 %v519
  %v1135 = vpop.f32.mrf.mxu0
  %v1136 = vadd.f32 %v203, %v1135
  %v1137 = vpop.f32.mrf.mxu0
  %v1138 = vpop.f32.mrf.mxu0
  %v1139 = vadd.f32 %v203, %v1138
  %v1140 = vpop.f32.mrf.mxu0
  %1141 = vmatprep.mubr.bf16.mxu0 0
  %1142 = vmatmul.mubr.bf16.gmra.mxu0 %v520
  %v1143 = vpop.f32.mrf.mxu0
  %v1144 = vadd.f32 %v203, %v1143
  %v1145 = vpop.f32.mrf.mxu0
  %v1146 = vpop.f32.mrf.mxu0
  %v1147 = vadd.f32 %v203, %v1146
  %v1148 = vpop.f32.mrf.mxu0
  %1149 = vmatprep.mubr.bf16.mxu0 0
  %1150 = vmatmul.mubr.bf16.gmra.mxu0 %v521
  %v1151 = vpop.f32.mrf.mxu0
  %v1152 = vadd.f32 %v203, %v1151
  %v1153 = vpop.f32.mrf.mxu0
  %v1154 = vpop.f32.mrf.mxu0
  %v1155 = vadd.f32 %v203, %v1154
  %v1156 = vpop.f32.mrf.mxu0
  %1157 = vmatprep.mubr.bf16.mxu0 0
  %1158 = vmatmul.mubr.bf16.gmra.mxu0 %v522
  %v1159 = vpop.f32.mrf.mxu0
  %v1160 = vadd.f32 %v203, %v1159
  %v1161 = vpop.f32.mrf.mxu0
  %v1162 = vpop.f32.mrf.mxu0
  %v1163 = vadd.f32 %v203, %v1162
  %v1164 = vpop.f32.mrf.mxu0
  %1165 = vmatprep.mubr.bf16.mxu0 0
  %1166 = vmatmul.mubr.bf16.gmra.mxu0 %v523
  %v1167 = vpop.f32.mrf.mxu0
  %v1168 = vadd.f32 %v203, %v1167
  %v1169 = vpop.f32.mrf.mxu0
  %v1170 = vpop.f32.mrf.mxu0
  %v1171 = vadd.f32 %v203, %v1170
  %v1172 = vpop.f32.mrf.mxu0
  %1173 = vmatprep.mubr.bf16.mxu0 0
  %1174 = vmatmul.mubr.bf16.gmra.mxu0 %v524
  %v1175 = vpop.f32.mrf.mxu0
  %v1176 = vadd.f32 %v203, %v1175
  %v1177 = vpop.f32.mrf.mxu0
  %v1178 = vpop.f32.mrf.mxu0
  %v1179 = vadd.f32 %v203, %v1178
  %v1180 = vpop.f32.mrf.mxu0
  %1181 = vdwg.mxu0
  %v1182 = vmax.f32 %v672, %v680
  %v1183 = vmax.f32 %v1182, %v688
  %v1184 = vmax.f32 %v1183, %v696
  %v1185 = vmax.f32 %v675, %v683
  %v1186 = vmax.f32 %v1185, %v691
  %v1187 = vmax.f32 %v1186, %v699
  %v1188 = vmax.f32 %v704, %v712
  %v1189 = vmax.f32 %v1188, %v720
  %v1190 = vmax.f32 %v1189, %v728
  %v1191 = vmax.f32 %v707, %v715
  %v1192 = vmax.f32 %v1191, %v723
  %v1193 = vmax.f32 %v1192, %v731
  %v1194 = vmax.f32 %v736, %v744
  %v1195 = vmax.f32 %v1194, %v752
  %v1196 = vmax.f32 %v1195, %v760
  %v1197 = vmax.f32 %v739, %v747
  %v1198 = vmax.f32 %v1197, %v755
  %v1199 = vmax.f32 %v1198, %v763
  %v1200 = vmax.f32 %v768, %v776
  %v1201 = vmax.f32 %v1200, %v784
  %v1202 = vmax.f32 %v1201, %v792
  %v1203 = vmax.f32 %v771, %v779
  %v1204 = vmax.f32 %v1203, %v787
  %v1205 = vmax.f32 %v1204, %v795
  %v1206 = vmax.f32 %v800, %v808
  %v1207 = vmax.f32 %v1206, %v816
  %v1208 = vmax.f32 %v1207, %v824
  %v1209 = vmax.f32 %v803, %v811
  %v1210 = vmax.f32 %v1209, %v819
  %v1211 = vmax.f32 %v1210, %v827
  %v1212 = vmax.f32 %v832, %v840
  %v1213 = vmax.f32 %v1212, %v848
  %v1214 = vmax.f32 %v1213, %v856
  %v1215 = vmax.f32 %v835, %v843
  %v1216 = vmax.f32 %v1215, %v851
  %v1217 = vmax.f32 %v1216, %v859
  %v1218 = vmax.f32 %v864, %v872
  %v1219 = vmax.f32 %v1218, %v880
  %v1220 = vmax.f32 %v1219, %v888
  %v1221 = vmax.f32 %v867, %v875
  %v1222 = vmax.f32 %v1221, %v883
  %v1223 = vmax.f32 %v1222, %v891
  %v1224 = vmax.f32 %v896, %v904
  %v1225 = vmax.f32 %v1224, %v912
  %v1226 = vmax.f32 %v1225, %v920
  %v1227 = vmax.f32 %v899, %v907
  %v1228 = vmax.f32 %v1227, %v915
  %v1229 = vmax.f32 %v1228, %v923
  %v1230 = vmax.f32 %v928, %v936
  %v1231 = vmax.f32 %v1230, %v944
  %v1232 = vmax.f32 %v1231, %v952
  %v1233 = vmax.f32 %v931, %v939
  %v1234 = vmax.f32 %v1233, %v947
  %v1235 = vmax.f32 %v1234, %v955
  %v1236 = vmax.f32 %v960, %v968
  %v1237 = vmax.f32 %v1236, %v976
  %v1238 = vmax.f32 %v1237, %v984
  %v1239 = vmax.f32 %v963, %v971
  %v1240 = vmax.f32 %v1239, %v979
  %v1241 = vmax.f32 %v1240, %v987
  %v1242 = vmax.f32 %v992, %v1000
  %v1243 = vmax.f32 %v1242, %v1008
  %v1244 = vmax.f32 %v1243, %v1016
  %v1245 = vmax.f32 %v995, %v1003
  %v1246 = vmax.f32 %v1245, %v1011
  %v1247 = vmax.f32 %v1246, %v1019
  %v1248 = vmax.f32 %v1024, %v1032
  %v1249 = vmax.f32 %v1248, %v1040
  %v1250 = vmax.f32 %v1249, %v1048
  %v1251 = vmax.f32 %v1027, %v1035
  %v1252 = vmax.f32 %v1251, %v1043
  %v1253 = vmax.f32 %v1252, %v1051
  %v1254 = vmax.f32 %v1056, %v1064
  %v1255 = vmax.f32 %v1254, %v1072
  %v1256 = vmax.f32 %v1255, %v1080
  %v1257 = vmax.f32 %v1059, %v1067
  %v1258 = vmax.f32 %v1257, %v1075
  %v1259 = vmax.f32 %v1258, %v1083
  %v1260 = vmax.f32 %v1088, %v1096
  %v1261 = vmax.f32 %v1260, %v1104
  %v1262 = vmax.f32 %v1261, %v1112
  %v1263 = vmax.f32 %v1091, %v1099
  %v1264 = vmax.f32 %v1263, %v1107
  %v1265 = vmax.f32 %v1264, %v1115
  %v1266 = vmax.f32 %v1120, %v1128
  %v1267 = vmax.f32 %v1266, %v1136
  %v1268 = vmax.f32 %v1267, %v1144
  %v1269 = vmax.f32 %v1123, %v1131
  %v1270 = vmax.f32 %v1269, %v1139
  %v1271 = vmax.f32 %v1270, %v1147
  %v1272 = vmax.f32 %v1152, %v1160
  %v1273 = vmax.f32 %v1272, %v1168
  %v1274 = vmax.f32 %v1273, %v1176
  %v1275 = vmax.f32 %v1155, %v1163
  %v1276 = vmax.f32 %v1275, %v1171
  %v1277 = vmax.f32 %v1276, %v1179
  %v1278 = vpack.c.bf16 %v1187, %v1184
  %v1279 = vld [vmem:[%s10] sm:$0xff]
  %v1280 = vld [vmem:[%s10 + $0x8] sm:$0xff]
  %v1281 = vld [vmem:[%s10 + $0x10] sm:$0xff]
  %v1282 = vld [vmem:[%s10 + $0x18] sm:$0xff]
  %v1283 = vld [vmem:[%s10 + $0x20] sm:$0xff]
  %v1284 = vld [vmem:[%s10 + $0x28] sm:$0xff]
  %v1285 = vld [vmem:[%s10 + $0x30] sm:$0xff]
  %v1286 = vld [vmem:[%s10 + $0x38] sm:$0xff]
  %v1287 = vld [vmem:[%s10 + $0x40] sm:$0xff]
  %v1288 = vld [vmem:[%s10 + $0x48] sm:$0xff]
  %v1289 = vld [vmem:[%s10 + $0x50] sm:$0xff]
  %v1290 = vld [vmem:[%s10 + $0x58] sm:$0xff]
  %v1291 = vld [vmem:[%s10 + $0x60] sm:$0xff]
  %v1292 = vld [vmem:[%s10 + $0x68] sm:$0xff]
  %v1293 = vld [vmem:[%s10 + $0x70] sm:$0xff]
  %v1294 = vld [vmem:[%s10 + $0x78] sm:$0xff]
  %v1295 = vpack.c.bf16 %v1193, %v1190
  %s1296 = scalar_lea.vmem %s10, 128
  %v1297 = vld [vmem:[%s1296] sm:$0xff]
  %v1298 = vld [vmem:[%s1296 + $0x8] sm:$0xff]
  %v1299 = vld [vmem:[%s1296 + $0x10] sm:$0xff]
  %v1300 = vld [vmem:[%s1296 + $0x18] sm:$0xff]
  %v1301 = vld [vmem:[%s1296 + $0x20] sm:$0xff]
  %v1302 = vld [vmem:[%s1296 + $0x28] sm:$0xff]
  %v1303 = vld [vmem:[%s1296 + $0x30] sm:$0xff]
  %v1304 = vld [vmem:[%s1296 + $0x38] sm:$0xff]
  %v1305 = vld [vmem:[%s1296 + $0x40] sm:$0xff]
  %v1306 = vld [vmem:[%s1296 + $0x48] sm:$0xff]
  %v1307 = vld [vmem:[%s1296 + $0x50] sm:$0xff]
  %v1308 = vld [vmem:[%s1296 + $0x58] sm:$0xff]
  %v1309 = vld [vmem:[%s1296 + $0x60] sm:$0xff]
  %v1310 = vld [vmem:[%s1296 + $0x68] sm:$0xff]
  %v1311 = vld [vmem:[%s1296 + $0x70] sm:$0xff]
  %v1312 = vld [vmem:[%s1296 + $0x78] sm:$0xff]
  %v1329 = vunpack.c.l.b16 %v1297
  %v1330 = vunpack.c.h.b16 %v1297
  %v1331 = vunpack.c.l.b16 %v1298
  %v1332 = vunpack.c.h.b16 %v1298
  %v1333 = vunpack.c.l.b16 %v1299
  %v1334 = vunpack.c.h.b16 %v1299
  %v1335 = vunpack.c.l.b16 %v1300
  %v1336 = vunpack.c.h.b16 %v1300
  %v1337 = vunpack.c.l.b16 %v1301
  %v1338 = vunpack.c.h.b16 %v1301
  %v1339 = vunpack.c.l.b16 %v1302
  %v1340 = vunpack.c.h.b16 %v1302
  %v1341 = vunpack.c.l.b16 %v1303
  %v1342 = vunpack.c.h.b16 %v1303
  %v1343 = vunpack.c.l.b16 %v1304
  %v1344 = vunpack.c.h.b16 %v1304
  %v1345 = vunpack.c.l.b16 %v1305
  %v1346 = vunpack.c.h.b16 %v1305
  %v1347 = vunpack.c.l.b16 %v1306
  %v1348 = vunpack.c.h.b16 %v1306
  %v1349 = vunpack.c.l.b16 %v1307
  %v1350 = vunpack.c.h.b16 %v1307
  %v1351 = vunpack.c.l.b16 %v1308
  %v1352 = vunpack.c.h.b16 %v1308
  %v1353 = vunpack.c.l.b16 %v1309
  %v1354 = vunpack.c.h.b16 %v1309
  %v1355 = vunpack.c.l.b16 %v1310
  %v1356 = vunpack.c.h.b16 %v1310
  %v1357 = vunpack.c.l.b16 %v1311
  %v1358 = vunpack.c.h.b16 %v1311
  %v1359 = vunpack.c.l.b16 %v1312
  %v1360 = vunpack.c.h.b16 %v1312
  %v1361 = vpack.c.b16 %v1331, %v1329
  %v1362 = vpack.c.b16 %v1332, %v1330
  %v1363 = vpack.c.b16 %v1335, %v1333
  %v1364 = vpack.c.b16 %v1336, %v1334
  %v1365 = vpack.c.b16 %v1339, %v1337
  %v1366 = vpack.c.b16 %v1340, %v1338
  %v1367 = vpack.c.b16 %v1343, %v1341
  %v1368 = vpack.c.b16 %v1344, %v1342
  %v1369 = vpack.c.b16 %v1347, %v1345
  %v1370 = vpack.c.b16 %v1348, %v1346
  %v1371 = vpack.c.b16 %v1351, %v1349
  %v1372 = vpack.c.b16 %v1352, %v1350
  %v1373 = vpack.c.b16 %v1355, %v1353
  %v1374 = vpack.c.b16 %v1356, %v1354
  %v1375 = vpack.c.b16 %v1359, %v1357
  %v1376 = vpack.c.b16 %v1360, %v1358
  %1393 = vmatprep.subr.bf16.mxu0 %v1376
  %1394 = vmatpush1.bf16.msra.mxu0 %v1375
  %1395 = vmatprep.subr.bf16.mxu0 %v1374
  %1396 = vmatpush1.bf16.msra.mxu0 %v1373
  %1397 = vmatprep.subr.bf16.mxu0 %v1372
  %1398 = vmatpush1.bf16.msra.mxu0 %v1371
  %1399 = vmatprep.subr.bf16.mxu0 %v1370
  %1400 = vmatpush1.bf16.msra.mxu0 %v1369
  %1401 = vmatprep.subr.bf16.mxu0 %v1368
  %1402 = vmatpush1.bf16.msra.mxu0 %v1367
  %1403 = vmatprep.subr.bf16.mxu0 %v1366
  %1404 = vmatpush1.bf16.msra.mxu0 %v1365
  %1405 = vmatprep.subr.bf16.mxu0 %v1364
  %1406 = vmatpush1.bf16.msra.mxu0 %v1363
  %1407 = vmatprep.subr.bf16.mxu0 %v1362
  %1408 = vmatpush1.bf16.msra.mxu0 %v1361
  %1409 = vmatprep.subr.bf16.mxu0 0
  %1410 = vmatpush2.bf16.msra.mxu0 0
  %1411 = vmatprep.subr.bf16.mxu0 0
  %1412 = vmatpush2.bf16.msra.mxu0 0
  %1413 = vmatprep.subr.bf16.mxu0 0
  %1414 = vmatpush2.bf16.msra.mxu0 0
  %1415 = vmatprep.subr.bf16.mxu0 0
  %1416 = vmatpush2.bf16.msra.mxu0 0
  %1417 = vmatprep.subr.bf16.mxu0 0
  %1418 = vmatpush2.bf16.msra.mxu0 0
  %1419 = vmatprep.subr.bf16.mxu0 0
  %1420 = vmatpush2.bf16.msra.mxu0 0
  %1421 = vmatprep.subr.bf16.mxu0 0
  %1422 = vmatpush2.bf16.msra.mxu0 0
  %1423 = vmatprep.subr.bf16.mxu0 0
  %1424 = vmatpush2.bf16.msra.mxu0 0
  %1425 = vmatprep.mubr.bf16.mxu0 0
  %1426 = vmatmul.mubr.bf16.gmra.mxu0 %v1295
  %v1427 = vpop.f32.mrf.mxu0
  %v1428 = vadd.f32 0.0, %v1427
  %v1429 = vpop.f32.mrf.mxu0
  %v1430 = vadd.f32 0.0, %v1429
  %v1431 = vpop.f32.mrf.mxu0
  %v1432 = vadd.f32 0.0, %v1431
  %v1433 = vpop.f32.mrf.mxu0
  %v1434 = vadd.f32 0.0, %v1433
  %1435 = vdwg.mxu0
  %v1452 = vunpack.c.l.b16 %v1279
  %v1453 = vunpack.c.h.b16 %v1279
  %v1454 = vunpack.c.l.b16 %v1280
  %v1455 = vunpack.c.h.b16 %v1280
  %v1456 = vunpack.c.l.b16 %v1281
  %v1457 = vunpack.c.h.b16 %v1281
  %v1458 = vunpack.c.l.b16 %v1282
  %v1459 = vunpack.c.h.b16 %v1282
  %v1460 = vunpack.c.l.b16 %v1283
  %v1461 = vunpack.c.h.b16 %v1283
  %v1462 = vunpack.c.l.b16 %v1284
  %v1463 = vunpack.c.h.b16 %v1284
  %v1464 = vunpack.c.l.b16 %v1285
  %v1465 = vunpack.c.h.b16 %v1285
  %v1466 = vunpack.c.l.b16 %v1286
  %v1467 = vunpack.c.h.b16 %v1286
  %v1468 = vunpack.c.l.b16 %v1287
  %v1469 = vunpack.c.h.b16 %v1287
  %v1470 = vunpack.c.l.b16 %v1288
  %v1471 = vunpack.c.h.b16 %v1288
  %v1472 = vunpack.c.l.b16 %v1289
  %v1473 = vunpack.c.h.b16 %v1289
  %v1474 = vunpack.c.l.b16 %v1290
  %v1475 = vunpack.c.h.b16 %v1290
  %v1476 = vunpack.c.l.b16 %v1291
  %v1477 = vunpack.c.h.b16 %v1291
  %v1478 = vunpack.c.l.b16 %v1292
  %v1479 = vunpack.c.h.b16 %v1292
  %v1480 = vunpack.c.l.b16 %v1293
  %v1481 = vunpack.c.h.b16 %v1293
  %v1482 = vunpack.c.l.b16 %v1294
  %v1483 = vunpack.c.h.b16 %v1294
  %v1484 = vpack.c.b16 %v1454, %v1452
  %v1485 = vpack.c.b16 %v1455, %v1453
  %v1486 = vpack.c.b16 %v1458, %v1456
  %v1487 = vpack.c.b16 %v1459, %v1457
  %v1488 = vpack.c.b16 %v1462, %v1460
  %v1489 = vpack.c.b16 %v1463, %v1461
  %v1490 = vpack.c.b16 %v1466, %v1464
  %v1491 = vpack.c.b16 %v1467, %v1465
  %v1492 = vpack.c.b16 %v1470, %v1468
  %v1493 = vpack.c.b16 %v1471, %v1469
  %v1494 = vpack.c.b16 %v1474, %v1472
  %v1495 = vpack.c.b16 %v1475, %v1473
  %v1496 = vpack.c.b16 %v1478, %v1476
  %v1497 = vpack.c.b16 %v1479, %v1477
  %v1498 = vpack.c.b16 %v1482, %v1480
  %v1499 = vpack.c.b16 %v1483, %v1481
  %1516 = vmatprep.subr.bf16.mxu0 %v1499
  %1517 = vmatpush1.bf16.msra.mxu0 %v1498
  %1518 = vmatprep.subr.bf16.mxu0 %v1497
  %1519 = vmatpush1.bf16.msra.mxu0 %v1496
  %1520 = vmatprep.subr.bf16.mxu0 %v1495
  %1521 = vmatpush1.bf16.msra.mxu0 %v1494
  %1522 = vmatprep.subr.bf16.mxu0 %v1493
  %1523 = vmatpush1.bf16.msra.mxu0 %v1492
  %1524 = vmatprep.subr.bf16.mxu0 %v1491
  %1525 = vmatpush1.bf16.msra.mxu0 %v1490
  %1526 = vmatprep.subr.bf16.mxu0 %v1489
  %1527 = vmatpush1.bf16.msra.mxu0 %v1488
  %1528 = vmatprep.subr.bf16.mxu0 %v1487
  %1529 = vmatpush1.bf16.msra.mxu0 %v1486
  %1530 = vmatprep.subr.bf16.mxu0 %v1485
  %1531 = vmatpush1.bf16.msra.mxu0 %v1484
  %1532 = vmatprep.subr.bf16.mxu0 0
  %1533 = vmatpush2.bf16.msra.mxu0 0
  %1534 = vmatprep.subr.bf16.mxu0 0
  %1535 = vmatpush2.bf16.msra.mxu0 0
  %1536 = vmatprep.subr.bf16.mxu0 0
  %1537 = vmatpush2.bf16.msra.mxu0 0
  %1538 = vmatprep.subr.bf16.mxu0 0
  %1539 = vmatpush2.bf16.msra.mxu0 0
  %1540 = vmatprep.subr.bf16.mxu0 0
  %1541 = vmatpush2.bf16.msra.mxu0 0
  %1542 = vmatprep.subr.bf16.mxu0 0
  %1543 = vmatpush2.bf16.msra.mxu0 0
  %1544 = vmatprep.subr.bf16.mxu0 0
  %1545 = vmatpush2.bf16.msra.mxu0 0
  %1546 = vmatprep.subr.bf16.mxu0 0
  %1547 = vmatpush2.bf16.msra.mxu0 0
  %1548 = vmatprep.mubr.bf16.mxu0 0
  %1549 = vmatmul.mubr.bf16.gmra.mxu0 %v1278
  %v1550 = vpop.f32.mrf.mxu0
  %v1551 = vadd.f32 %v1428, %v1550
  %v1552 = vpop.f32.mrf.mxu0
  %v1553 = vadd.f32 %v1430, %v1552
  %v1554 = vpop.f32.mrf.mxu0
  %v1555 = vadd.f32 %v1432, %v1554
  %v1556 = vpop.f32.mrf.mxu0
  %v1557 = vadd.f32 %v1434, %v1556
  %1558 = vdwg.mxu0
  %v1559 = vpack.c.bf16 %v1199, %v1196
  %s1560 = scalar_lea.vmem %s10, 256
  %v1561 = vld [vmem:[%s1560] sm:$0xff]
  %v1562 = vld [vmem:[%s1560 + $0x8] sm:$0xff]
  %v1563 = vld [vmem:[%s1560 + $0x10] sm:$0xff]
  %v1564 = vld [vmem:[%s1560 + $0x18] sm:$0xff]
  %v1565 = vld [vmem:[%s1560 + $0x20] sm:$0xff]
  %v1566 = vld [vmem:[%s1560 + $0x28] sm:$0xff]
  %v1567 = vld [vmem:[%s1560 + $0x30] sm:$0xff]
  %v1568 = vld [vmem:[%s1560 + $0x38] sm:$0xff]
  %v1569 = vld [vmem:[%s1560 + $0x40] sm:$0xff]
  %v1570 = vld [vmem:[%s1560 + $0x48] sm:$0xff]
  %v1571 = vld [vmem:[%s1560 + $0x50] sm:$0xff]
  %v1572 = vld [vmem:[%s1560 + $0x58] sm:$0xff]
  %v1573 = vld [vmem:[%s1560 + $0x60] sm:$0xff]
  %v1574 = vld [vmem:[%s1560 + $0x68] sm:$0xff]
  %v1575 = vld [vmem:[%s1560 + $0x70] sm:$0xff]
  %v1576 = vld [vmem:[%s1560 + $0x78] sm:$0xff]
  %v1593 = vunpack.c.l.b16 %v1561
  %v1594 = vunpack.c.h.b16 %v1561
  %v1595 = vunpack.c.l.b16 %v1562
  %v1596 = vunpack.c.h.b16 %v1562
  %v1597 = vunpack.c.l.b16 %v1563
  %v1598 = vunpack.c.h.b16 %v1563
  %v1599 = vunpack.c.l.b16 %v1564
  %v1600 = vunpack.c.h.b16 %v1564
  %v1601 = vunpack.c.l.b16 %v1565
  %v1602 = vunpack.c.h.b16 %v1565
  %v1603 = vunpack.c.l.b16 %v1566
  %v1604 = vunpack.c.h.b16 %v1566
  %v1605 = vunpack.c.l.b16 %v1567
  %v1606 = vunpack.c.h.b16 %v1567
  %v1607 = vunpack.c.l.b16 %v1568
  %v1608 = vunpack.c.h.b16 %v1568
  %v1609 = vunpack.c.l.b16 %v1569
  %v1610 = vunpack.c.h.b16 %v1569
  %v1611 = vunpack.c.l.b16 %v1570
  %v1612 = vunpack.c.h.b16 %v1570
  %v1613 = vunpack.c.l.b16 %v1571
  %v1614 = vunpack.c.h.b16 %v1571
  %v1615 = vunpack.c.l.b16 %v1572
  %v1616 = vunpack.c.h.b16 %v1572
  %v1617 = vunpack.c.l.b16 %v1573
  %v1618 = vunpack.c.h.b16 %v1573
  %v1619 = vunpack.c.l.b16 %v1574
  %v1620 = vunpack.c.h.b16 %v1574
  %v1621 = vunpack.c.l.b16 %v1575
  %v1622 = vunpack.c.h.b16 %v1575
  %v1623 = vunpack.c.l.b16 %v1576
  %v1624 = vunpack.c.h.b16 %v1576
  %v1625 = vpack.c.b16 %v1595, %v1593
  %v1626 = vpack.c.b16 %v1596, %v1594
  %v1627 = vpack.c.b16 %v1599, %v1597
  %v1628 = vpack.c.b16 %v1600, %v1598
  %v1629 = vpack.c.b16 %v1603, %v1601
  %v1630 = vpack.c.b16 %v1604, %v1602
  %v1631 = vpack.c.b16 %v1607, %v1605
  %v1632 = vpack.c.b16 %v1608, %v1606
  %v1633 = vpack.c.b16 %v1611, %v1609
  %v1634 = vpack.c.b16 %v1612, %v1610
  %v1635 = vpack.c.b16 %v1615, %v1613
  %v1636 = vpack.c.b16 %v1616, %v1614
  %v1637 = vpack.c.b16 %v1619, %v1617
  %v1638 = vpack.c.b16 %v1620, %v1618
  %v1639 = vpack.c.b16 %v1623, %v1621
  %v1640 = vpack.c.b16 %v1624, %v1622
  %1657 = vmatprep.subr.bf16.mxu0 %v1640
  %1658 = vmatpush1.bf16.msra.mxu0 %v1639
  %1659 = vmatprep.subr.bf16.mxu0 %v1638
  %1660 = vmatpush1.bf16.msra.mxu0 %v1637
  %1661 = vmatprep.subr.bf16.mxu0 %v1636
  %1662 = vmatpush1.bf16.msra.mxu0 %v1635
  %1663 = vmatprep.subr.bf16.mxu0 %v1634
  %1664 = vmatpush1.bf16.msra.mxu0 %v1633
  %1665 = vmatprep.subr.bf16.mxu0 %v1632
  %1666 = vmatpush1.bf16.msra.mxu0 %v1631
  %1667 = vmatprep.subr.bf16.mxu0 %v1630
  %1668 = vmatpush1.bf16.msra.mxu0 %v1629
  %1669 = vmatprep.subr.bf16.mxu0 %v1628
  %1670 = vmatpush1.bf16.msra.mxu0 %v1627
  %1671 = vmatprep.subr.bf16.mxu0 %v1626
  %1672 = vmatpush1.bf16.msra.mxu0 %v1625
  %1673 = vmatprep.subr.bf16.mxu0 0
  %1674 = vmatpush2.bf16.msra.mxu0 0
  %1675 = vmatprep.subr.bf16.mxu0 0
  %1676 = vmatpush2.bf16.msra.mxu0 0
  %1677 = vmatprep.subr.bf16.mxu0 0
  %1678 = vmatpush2.bf16.msra.mxu0 0
  %1679 = vmatprep.subr.bf16.mxu0 0
  %1680 = vmatpush2.bf16.msra.mxu0 0
  %1681 = vmatprep.subr.bf16.mxu0 0
  %1682 = vmatpush2.bf16.msra.mxu0 0
  %1683 = vmatprep.subr.bf16.mxu0 0
  %1684 = vmatpush2.bf16.msra.mxu0 0
  %1685 = vmatprep.subr.bf16.mxu0 0
  %1686 = vmatpush2.bf16.msra.mxu0 0
  %1687 = vmatprep.subr.bf16.mxu0 0
  %1688 = vmatpush2.bf16.msra.mxu0 0
  %1689 = vmatprep.mubr.bf16.mxu0 0
  %1690 = vmatmul.mubr.bf16.gmra.mxu0 %v1559
  %v1691 = vpop.f32.mrf.mxu0
  %v1692 = vadd.f32 0.0, %v1691
  %v1693 = vpop.f32.mrf.mxu0
  %v1694 = vadd.f32 0.0, %v1693
  %v1695 = vpop.f32.mrf.mxu0
  %v1696 = vadd.f32 0.0, %v1695
  %v1697 = vpop.f32.mrf.mxu0
  %v1698 = vadd.f32 0.0, %v1697
  %1699 = vdwg.mxu0
  %v1700 = vadd.f32 %v1551, %v1692
  %v1701 = vadd.f32 %v1553, %v1694
  %v1702 = vadd.f32 %v1555, %v1696
  %v1703 = vadd.f32 %v1557, %v1698
  %v1704 = vpack.c.bf16 %v1205, %v1202
  %s1705 = scalar_lea.vmem %s10, 384
  %v1706 = vld [vmem:[%s1705] sm:$0xff]
  %v1707 = vld [vmem:[%s1705 + $0x8] sm:$0xff]
  %v1708 = vld [vmem:[%s1705 + $0x10] sm:$0xff]
  %v1709 = vld [vmem:[%s1705 + $0x18] sm:$0xff]
  %v1710 = vld [vmem:[%s1705 + $0x20] sm:$0xff]
  %v1711 = vld [vmem:[%s1705 + $0x28] sm:$0xff]
  %v1712 = vld [vmem:[%s1705 + $0x30] sm:$0xff]
  %v1713 = vld [vmem:[%s1705 + $0x38] sm:$0xff]
  %v1714 = vld [vmem:[%s1705 + $0x40] sm:$0xff]
  %v1715 = vld [vmem:[%s1705 + $0x48] sm:$0xff]
  %v1716 = vld [vmem:[%s1705 + $0x50] sm:$0xff]
  %v1717 = vld [vmem:[%s1705 + $0x58] sm:$0xff]
  %v1718 = vld [vmem:[%s1705 + $0x60] sm:$0xff]
  %v1719 = vld [vmem:[%s1705 + $0x68] sm:$0xff]
  %v1720 = vld [vmem:[%s1705 + $0x70] sm:$0xff]
  %v1721 = vld [vmem:[%s1705 + $0x78] sm:$0xff]
  %v1738 = vunpack.c.l.b16 %v1706
  %v1739 = vunpack.c.h.b16 %v1706
  %v1740 = vunpack.c.l.b16 %v1707
  %v1741 = vunpack.c.h.b16 %v1707
  %v1742 = vunpack.c.l.b16 %v1708
  %v1743 = vunpack.c.h.b16 %v1708
  %v1744 = vunpack.c.l.b16 %v1709
  %v1745 = vunpack.c.h.b16 %v1709
  %v1746 = vunpack.c.l.b16 %v1710
  %v1747 = vunpack.c.h.b16 %v1710
  %v1748 = vunpack.c.l.b16 %v1711
  %v1749 = vunpack.c.h.b16 %v1711
  %v1750 = vunpack.c.l.b16 %v1712
  %v1751 = vunpack.c.h.b16 %v1712
  %v1752 = vunpack.c.l.b16 %v1713
  %v1753 = vunpack.c.h.b16 %v1713
  %v1754 = vunpack.c.l.b16 %v1714
  %v1755 = vunpack.c.h.b16 %v1714
  %v1756 = vunpack.c.l.b16 %v1715
  %v1757 = vunpack.c.h.b16 %v1715
  %v1758 = vunpack.c.l.b16 %v1716
  %v1759 = vunpack.c.h.b16 %v1716
  %v1760 = vunpack.c.l.b16 %v1717
  %v1761 = vunpack.c.h.b16 %v1717
  %v1762 = vunpack.c.l.b16 %v1718
  %v1763 = vunpack.c.h.b16 %v1718
  %v1764 = vunpack.c.l.b16 %v1719
  %v1765 = vunpack.c.h.b16 %v1719
  %v1766 = vunpack.c.l.b16 %v1720
  %v1767 = vunpack.c.h.b16 %v1720
  %v1768 = vunpack.c.l.b16 %v1721
  %v1769 = vunpack.c.h.b16 %v1721
  %v1770 = vpack.c.b16 %v1740, %v1738
  %v1771 = vpack.c.b16 %v1741, %v1739
  %v1772 = vpack.c.b16 %v1744, %v1742
  %v1773 = vpack.c.b16 %v1745, %v1743
  %v1774 = vpack.c.b16 %v1748, %v1746
  %v1775 = vpack.c.b16 %v1749, %v1747
  %v1776 = vpack.c.b16 %v1752, %v1750
  %v1777 = vpack.c.b16 %v1753, %v1751
  %v1778 = vpack.c.b16 %v1756, %v1754
  %v1779 = vpack.c.b16 %v1757, %v1755
  %v1780 = vpack.c.b16 %v1760, %v1758
  %v1781 = vpack.c.b16 %v1761, %v1759
  %v1782 = vpack.c.b16 %v1764, %v1762
  %v1783 = vpack.c.b16 %v1765, %v1763
  %v1784 = vpack.c.b16 %v1768, %v1766
  %v1785 = vpack.c.b16 %v1769, %v1767
  %1802 = vmatprep.subr.bf16.mxu0 %v1785
  %1803 = vmatpush1.bf16.msra.mxu0 %v1784
  %1804 = vmatprep.subr.bf16.mxu0 %v1783
  %1805 = vmatpush1.bf16.msra.mxu0 %v1782
  %1806 = vmatprep.subr.bf16.mxu0 %v1781
  %1807 = vmatpush1.bf16.msra.mxu0 %v1780
  %1808 = vmatprep.subr.bf16.mxu0 %v1779
  %1809 = vmatpush1.bf16.msra.mxu0 %v1778
  %1810 = vmatprep.subr.bf16.mxu0 %v1777
  %1811 = vmatpush1.bf16.msra.mxu0 %v1776
  %1812 = vmatprep.subr.bf16.mxu0 %v1775
  %1813 = vmatpush1.bf16.msra.mxu0 %v1774
  %1814 = vmatprep.subr.bf16.mxu0 %v1773
  %1815 = vmatpush1.bf16.msra.mxu0 %v1772
  %1816 = vmatprep.subr.bf16.mxu0 %v1771
  %1817 = vmatpush1.bf16.msra.mxu0 %v1770
  %1818 = vmatprep.subr.bf16.mxu0 0
  %1819 = vmatpush2.bf16.msra.mxu0 0
  %1820 = vmatprep.subr.bf16.mxu0 0
  %1821 = vmatpush2.bf16.msra.mxu0 0
  %1822 = vmatprep.subr.bf16.mxu0 0
  %1823 = vmatpush2.bf16.msra.mxu0 0
  %1824 = vmatprep.subr.bf16.mxu0 0
  %1825 = vmatpush2.bf16.msra.mxu0 0
  %1826 = vmatprep.subr.bf16.mxu0 0
  %1827 = vmatpush2.bf16.msra.mxu0 0
  %1828 = vmatprep.subr.bf16.mxu0 0
  %1829 = vmatpush2.bf16.msra.mxu0 0
  %1830 = vmatprep.subr.bf16.mxu0 0
  %1831 = vmatpush2.bf16.msra.mxu0 0
  %1832 = vmatprep.subr.bf16.mxu0 0
  %1833 = vmatpush2.bf16.msra.mxu0 0
  %1834 = vmatprep.mubr.bf16.mxu0 0
  %1835 = vmatmul.mubr.bf16.gmra.mxu0 %v1704
  %v1836 = vpop.f32.mrf.mxu0
  %v1837 = vadd.f32 0.0, %v1836
  %v1838 = vpop.f32.mrf.mxu0
  %v1839 = vadd.f32 0.0, %v1838
  %v1840 = vpop.f32.mrf.mxu0
  %v1841 = vadd.f32 0.0, %v1840
  %v1842 = vpop.f32.mrf.mxu0
  %v1843 = vadd.f32 0.0, %v1842
  %1844 = vdwg.mxu0
  %v1845 = vadd.f32 %v1700, %v1837
  %v1846 = vadd.f32 %v1701, %v1839
  %v1847 = vadd.f32 %v1702, %v1841
  %v1848 = vadd.f32 %v1703, %v1843
  %v1849 = vpack.c.bf16 %v1211, %v1208
  %s1850 = scalar_lea.vmem %s10, 512
  %v1851 = vld [vmem:[%s1850] sm:$0xff]
  %v1852 = vld [vmem:[%s1850 + $0x8] sm:$0xff]
  %v1853 = vld [vmem:[%s1850 + $0x10] sm:$0xff]
  %v1854 = vld [vmem:[%s1850 + $0x18] sm:$0xff]
  %v1855 = vld [vmem:[%s1850 + $0x20] sm:$0xff]
  %v1856 = vld [vmem:[%s1850 + $0x28] sm:$0xff]
  %v1857 = vld [vmem:[%s1850 + $0x30] sm:$0xff]
  %v1858 = vld [vmem:[%s1850 + $0x38] sm:$0xff]
  %v1859 = vld [vmem:[%s1850 + $0x40] sm:$0xff]
  %v1860 = vld [vmem:[%s1850 + $0x48] sm:$0xff]
  %v1861 = vld [vmem:[%s1850 + $0x50] sm:$0xff]
  %v1862 = vld [vmem:[%s1850 + $0x58] sm:$0xff]
  %v1863 = vld [vmem:[%s1850 + $0x60] sm:$0xff]
  %v1864 = vld [vmem:[%s1850 + $0x68] sm:$0xff]
  %v1865 = vld [vmem:[%s1850 + $0x70] sm:$0xff]
  %v1866 = vld [vmem:[%s1850 + $0x78] sm:$0xff]
  %v1883 = vunpack.c.l.b16 %v1851
  %v1884 = vunpack.c.h.b16 %v1851
  %v1885 = vunpack.c.l.b16 %v1852
  %v1886 = vunpack.c.h.b16 %v1852
  %v1887 = vunpack.c.l.b16 %v1853
  %v1888 = vunpack.c.h.b16 %v1853
  %v1889 = vunpack.c.l.b16 %v1854
  %v1890 = vunpack.c.h.b16 %v1854
  %v1891 = vunpack.c.l.b16 %v1855
  %v1892 = vunpack.c.h.b16 %v1855
  %v1893 = vunpack.c.l.b16 %v1856
  %v1894 = vunpack.c.h.b16 %v1856
  %v1895 = vunpack.c.l.b16 %v1857
  %v1896 = vunpack.c.h.b16 %v1857
  %v1897 = vunpack.c.l.b16 %v1858
  %v1898 = vunpack.c.h.b16 %v1858
  %v1899 = vunpack.c.l.b16 %v1859
  %v1900 = vunpack.c.h.b16 %v1859
  %v1901 = vunpack.c.l.b16 %v1860
  %v1902 = vunpack.c.h.b16 %v1860
  %v1903 = vunpack.c.l.b16 %v1861
  %v1904 = vunpack.c.h.b16 %v1861
  %v1905 = vunpack.c.l.b16 %v1862
  %v1906 = vunpack.c.h.b16 %v1862
  %v1907 = vunpack.c.l.b16 %v1863
  %v1908 = vunpack.c.h.b16 %v1863
  %v1909 = vunpack.c.l.b16 %v1864
  %v1910 = vunpack.c.h.b16 %v1864
  %v1911 = vunpack.c.l.b16 %v1865
  %v1912 = vunpack.c.h.b16 %v1865
  %v1913 = vunpack.c.l.b16 %v1866
  %v1914 = vunpack.c.h.b16 %v1866
  %v1915 = vpack.c.b16 %v1885, %v1883
  %v1916 = vpack.c.b16 %v1886, %v1884
  %v1917 = vpack.c.b16 %v1889, %v1887
  %v1918 = vpack.c.b16 %v1890, %v1888
  %v1919 = vpack.c.b16 %v1893, %v1891
  %v1920 = vpack.c.b16 %v1894, %v1892
  %v1921 = vpack.c.b16 %v1897, %v1895
  %v1922 = vpack.c.b16 %v1898, %v1896
  %v1923 = vpack.c.b16 %v1901, %v1899
  %v1924 = vpack.c.b16 %v1902, %v1900
  %v1925 = vpack.c.b16 %v1905, %v1903
  %v1926 = vpack.c.b16 %v1906, %v1904
  %v1927 = vpack.c.b16 %v1909, %v1907
  %v1928 = vpack.c.b16 %v1910, %v1908
  %v1929 = vpack.c.b16 %v1913, %v1911
  %v1930 = vpack.c.b16 %v1914, %v1912
  %1947 = vmatprep.subr.bf16.mxu0 %v1930
  %1948 = vmatpush1.bf16.msra.mxu0 %v1929
  %1949 = vmatprep.subr.bf16.mxu0 %v1928
  %1950 = vmatpush1.bf16.msra.mxu0 %v1927
  %1951 = vmatprep.subr.bf16.mxu0 %v1926
  %1952 = vmatpush1.bf16.msra.mxu0 %v1925
  %1953 = vmatprep.subr.bf16.mxu0 %v1924
  %1954 = vmatpush1.bf16.msra.mxu0 %v1923
  %1955 = vmatprep.subr.bf16.mxu0 %v1922
  %1956 = vmatpush1.bf16.msra.mxu0 %v1921
  %1957 = vmatprep.subr.bf16.mxu0 %v1920
  %1958 = vmatpush1.bf16.msra.mxu0 %v1919
  %1959 = vmatprep.subr.bf16.mxu0 %v1918
  %1960 = vmatpush1.bf16.msra.mxu0 %v1917
  %1961 = vmatprep.subr.bf16.mxu0 %v1916
  %1962 = vmatpush1.bf16.msra.mxu0 %v1915
  %1963 = vmatprep.subr.bf16.mxu0 0
  %1964 = vmatpush2.bf16.msra.mxu0 0
  %1965 = vmatprep.subr.bf16.mxu0 0
  %1966 = vmatpush2.bf16.msra.mxu0 0
  %1967 = vmatprep.subr.bf16.mxu0 0
  %1968 = vmatpush2.bf16.msra.mxu0 0
  %1969 = vmatprep.subr.bf16.mxu0 0
  %1970 = vmatpush2.bf16.msra.mxu0 0
  %1971 = vmatprep.subr.bf16.mxu0 0
  %1972 = vmatpush2.bf16.msra.mxu0 0
  %1973 = vmatprep.subr.bf16.mxu0 0
  %1974 = vmatpush2.bf16.msra.mxu0 0
  %1975 = vmatprep.subr.bf16.mxu0 0
  %1976 = vmatpush2.bf16.msra.mxu0 0
  %1977 = vmatprep.subr.bf16.mxu0 0
  %1978 = vmatpush2.bf16.msra.mxu0 0
  %1979 = vmatprep.mubr.bf16.mxu0 0
  %1980 = vmatmul.mubr.bf16.gmra.mxu0 %v1849
  %v1981 = vpop.f32.mrf.mxu0
  %v1982 = vadd.f32 0.0, %v1981
  %v1983 = vpop.f32.mrf.mxu0
  %v1984 = vadd.f32 0.0, %v1983
  %v1985 = vpop.f32.mrf.mxu0
  %v1986 = vadd.f32 0.0, %v1985
  %v1987 = vpop.f32.mrf.mxu0
  %v1988 = vadd.f32 0.0, %v1987
  %1989 = vdwg.mxu0
  %v1990 = vadd.f32 %v1845, %v1982
  %v1991 = vadd.f32 %v1846, %v1984
  %v1992 = vadd.f32 %v1847, %v1986
  %v1993 = vadd.f32 %v1848, %v1988
  %v1994 = vpack.c.bf16 %v1217, %v1214
  %s1995 = scalar_lea.vmem %s10, 640
  %v1996 = vld [vmem:[%s1995] sm:$0xff]
  %v1997 = vld [vmem:[%s1995 + $0x8] sm:$0xff]
  %v1998 = vld [vmem:[%s1995 + $0x10] sm:$0xff]
  %v1999 = vld [vmem:[%s1995 + $0x18] sm:$0xff]
  %v2000 = vld [vmem:[%s1995 + $0x20] sm:$0xff]
  %v2001 = vld [vmem:[%s1995 + $0x28] sm:$0xff]
  %v2002 = vld [vmem:[%s1995 + $0x30] sm:$0xff]
  %v2003 = vld [vmem:[%s1995 + $0x38] sm:$0xff]
  %v2004 = vld [vmem:[%s1995 + $0x40] sm:$0xff]
  %v2005 = vld [vmem:[%s1995 + $0x48] sm:$0xff]
  %v2006 = vld [vmem:[%s1995 + $0x50] sm:$0xff]
  %v2007 = vld [vmem:[%s1995 + $0x58] sm:$0xff]
  %v2008 = vld [vmem:[%s1995 + $0x60] sm:$0xff]
  %v2009 = vld [vmem:[%s1995 + $0x68] sm:$0xff]
  %v2010 = vld [vmem:[%s1995 + $0x70] sm:$0xff]
  %v2011 = vld [vmem:[%s1995 + $0x78] sm:$0xff]
  %v2028 = vunpack.c.l.b16 %v1996
  %v2029 = vunpack.c.h.b16 %v1996
  %v2030 = vunpack.c.l.b16 %v1997
  %v2031 = vunpack.c.h.b16 %v1997
  %v2032 = vunpack.c.l.b16 %v1998
  %v2033 = vunpack.c.h.b16 %v1998
  %v2034 = vunpack.c.l.b16 %v1999
  %v2035 = vunpack.c.h.b16 %v1999
  %v2036 = vunpack.c.l.b16 %v2000
  %v2037 = vunpack.c.h.b16 %v2000
  %v2038 = vunpack.c.l.b16 %v2001
  %v2039 = vunpack.c.h.b16 %v2001
  %v2040 = vunpack.c.l.b16 %v2002
  %v2041 = vunpack.c.h.b16 %v2002
  %v2042 = vunpack.c.l.b16 %v2003
  %v2043 = vunpack.c.h.b16 %v2003
  %v2044 = vunpack.c.l.b16 %v2004
  %v2045 = vunpack.c.h.b16 %v2004
  %v2046 = vunpack.c.l.b16 %v2005
  %v2047 = vunpack.c.h.b16 %v2005
  %v2048 = vunpack.c.l.b16 %v2006
  %v2049 = vunpack.c.h.b16 %v2006
  %v2050 = vunpack.c.l.b16 %v2007
  %v2051 = vunpack.c.h.b16 %v2007
  %v2052 = vunpack.c.l.b16 %v2008
  %v2053 = vunpack.c.h.b16 %v2008
  %v2054 = vunpack.c.l.b16 %v2009
  %v2055 = vunpack.c.h.b16 %v2009
  %v2056 = vunpack.c.l.b16 %v2010
  %v2057 = vunpack.c.h.b16 %v2010
  %v2058 = vunpack.c.l.b16 %v2011
  %v2059 = vunpack.c.h.b16 %v2011
  %v2060 = vpack.c.b16 %v2030, %v2028
  %v2061 = vpack.c.b16 %v2031, %v2029
  %v2062 = vpack.c.b16 %v2034, %v2032
  %v2063 = vpack.c.b16 %v2035, %v2033
  %v2064 = vpack.c.b16 %v2038, %v2036
  %v2065 = vpack.c.b16 %v2039, %v2037
  %v2066 = vpack.c.b16 %v2042, %v2040
  %v2067 = vpack.c.b16 %v2043, %v2041
  %v2068 = vpack.c.b16 %v2046, %v2044
  %v2069 = vpack.c.b16 %v2047, %v2045
  %v2070 = vpack.c.b16 %v2050, %v2048
  %v2071 = vpack.c.b16 %v2051, %v2049
  %v2072 = vpack.c.b16 %v2054, %v2052
  %v2073 = vpack.c.b16 %v2055, %v2053
  %v2074 = vpack.c.b16 %v2058, %v2056
  %v2075 = vpack.c.b16 %v2059, %v2057
  %2092 = vmatprep.subr.bf16.mxu0 %v2075
  %2093 = vmatpush1.bf16.msra.mxu0 %v2074
  %2094 = vmatprep.subr.bf16.mxu0 %v2073
  %2095 = vmatpush1.bf16.msra.mxu0 %v2072
  %2096 = vmatprep.subr.bf16.mxu0 %v2071
  %2097 = vmatpush1.bf16.msra.mxu0 %v2070
  %2098 = vmatprep.subr.bf16.mxu0 %v2069
  %2099 = vmatpush1.bf16.msra.mxu0 %v2068
  %2100 = vmatprep.subr.bf16.mxu0 %v2067
  %2101 = vmatpush1.bf16.msra.mxu0 %v2066
  %2102 = vmatprep.subr.bf16.mxu0 %v2065
  %2103 = vmatpush1.bf16.msra.mxu0 %v2064
  %2104 = vmatprep.subr.bf16.mxu0 %v2063
  %2105 = vmatpush1.bf16.msra.mxu0 %v2062
  %2106 = vmatprep.subr.bf16.mxu0 %v2061
  %2107 = vmatpush1.bf16.msra.mxu0 %v2060
  %2108 = vmatprep.subr.bf16.mxu0 0
  %2109 = vmatpush2.bf16.msra.mxu0 0
  %2110 = vmatprep.subr.bf16.mxu0 0
  %2111 = vmatpush2.bf16.msra.mxu0 0
  %2112 = vmatprep.subr.bf16.mxu0 0
  %2113 = vmatpush2.bf16.msra.mxu0 0
  %2114 = vmatprep.subr.bf16.mxu0 0
  %2115 = vmatpush2.bf16.msra.mxu0 0
  %2116 = vmatprep.subr.bf16.mxu0 0
  %2117 = vmatpush2.bf16.msra.mxu0 0
  %2118 = vmatprep.subr.bf16.mxu0 0
  %2119 = vmatpush2.bf16.msra.mxu0 0
  %2120 = vmatprep.subr.bf16.mxu0 0
  %2121 = vmatpush2.bf16.msra.mxu0 0
  %2122 = vmatprep.subr.bf16.mxu0 0
  %2123 = vmatpush2.bf16.msra.mxu0 0
  %2124 = vmatprep.mubr.bf16.mxu0 0
  %2125 = vmatmul.mubr.bf16.gmra.mxu0 %v1994
  %v2126 = vpop.f32.mrf.mxu0
  %v2127 = vadd.f32 0.0, %v2126
  %v2128 = vpop.f32.mrf.mxu0
  %v2129 = vadd.f32 0.0, %v2128
  %v2130 = vpop.f32.mrf.mxu0
  %v2131 = vadd.f32 0.0, %v2130
  %v2132 = vpop.f32.mrf.mxu0
  %v2133 = vadd.f32 0.0, %v2132
  %2134 = vdwg.mxu0
  %v2135 = vadd.f32 %v1990, %v2127
  %v2136 = vadd.f32 %v1991, %v2129
  %v2137 = vadd.f32 %v1992, %v2131
  %v2138 = vadd.f32 %v1993, %v2133
  %v2139 = vpack.c.bf16 %v1223, %v1220
  %s2140 = scalar_lea.vmem %s10, 768
  %v2141 = vld [vmem:[%s2140] sm:$0xff]
  %v2142 = vld [vmem:[%s2140 + $0x8] sm:$0xff]
  %v2143 = vld [vmem:[%s2140 + $0x10] sm:$0xff]
  %v2144 = vld [vmem:[%s2140 + $0x18] sm:$0xff]
  %v2145 = vld [vmem:[%s2140 + $0x20] sm:$0xff]
  %v2146 = vld [vmem:[%s2140 + $0x28] sm:$0xff]
  %v2147 = vld [vmem:[%s2140 + $0x30] sm:$0xff]
  %v2148 = vld [vmem:[%s2140 + $0x38] sm:$0xff]
  %v2149 = vld [vmem:[%s2140 + $0x40] sm:$0xff]
  %v2150 = vld [vmem:[%s2140 + $0x48] sm:$0xff]
  %v2151 = vld [vmem:[%s2140 + $0x50] sm:$0xff]
  %v2152 = vld [vmem:[%s2140 + $0x58] sm:$0xff]
  %v2153 = vld [vmem:[%s2140 + $0x60] sm:$0xff]
  %v2154 = vld [vmem:[%s2140 + $0x68] sm:$0xff]
  %v2155 = vld [vmem:[%s2140 + $0x70] sm:$0xff]
  %v2156 = vld [vmem:[%s2140 + $0x78] sm:$0xff]
  %v2173 = vunpack.c.l.b16 %v2141
  %v2174 = vunpack.c.h.b16 %v2141
  %v2175 = vunpack.c.l.b16 %v2142
  %v2176 = vunpack.c.h.b16 %v2142
  %v2177 = vunpack.c.l.b16 %v2143
  %v2178 = vunpack.c.h.b16 %v2143
  %v2179 = vunpack.c.l.b16 %v2144
  %v2180 = vunpack.c.h.b16 %v2144
  %v2181 = vunpack.c.l.b16 %v2145
  %v2182 = vunpack.c.h.b16 %v2145
  %v2183 = vunpack.c.l.b16 %v2146
  %v2184 = vunpack.c.h.b16 %v2146
  %v2185 = vunpack.c.l.b16 %v2147
  %v2186 = vunpack.c.h.b16 %v2147
  %v2187 = vunpack.c.l.b16 %v2148
  %v2188 = vunpack.c.h.b16 %v2148
  %v2189 = vunpack.c.l.b16 %v2149
  %v2190 = vunpack.c.h.b16 %v2149
  %v2191 = vunpack.c.l.b16 %v2150
  %v2192 = vunpack.c.h.b16 %v2150
  %v2193 = vunpack.c.l.b16 %v2151
  %v2194 = vunpack.c.h.b16 %v2151
  %v2195 = vunpack.c.l.b16 %v2152
  %v2196 = vunpack.c.h.b16 %v2152
  %v2197 = vunpack.c.l.b16 %v2153
  %v2198 = vunpack.c.h.b16 %v2153
  %v2199 = vunpack.c.l.b16 %v2154
  %v2200 = vunpack.c.h.b16 %v2154
  %v2201 = vunpack.c.l.b16 %v2155
  %v2202 = vunpack.c.h.b16 %v2155
  %v2203 = vunpack.c.l.b16 %v2156
  %v2204 = vunpack.c.h.b16 %v2156
  %v2205 = vpack.c.b16 %v2175, %v2173
  %v2206 = vpack.c.b16 %v2176, %v2174
  %v2207 = vpack.c.b16 %v2179, %v2177
  %v2208 = vpack.c.b16 %v2180, %v2178
  %v2209 = vpack.c.b16 %v2183, %v2181
  %v2210 = vpack.c.b16 %v2184, %v2182
  %v2211 = vpack.c.b16 %v2187, %v2185
  %v2212 = vpack.c.b16 %v2188, %v2186
  %v2213 = vpack.c.b16 %v2191, %v2189
  %v2214 = vpack.c.b16 %v2192, %v2190
  %v2215 = vpack.c.b16 %v2195, %v2193
  %v2216 = vpack.c.b16 %v2196, %v2194
  %v2217 = vpack.c.b16 %v2199, %v2197
  %v2218 = vpack.c.b16 %v2200, %v2198
  %v2219 = vpack.c.b16 %v2203, %v2201
  %v2220 = vpack.c.b16 %v2204, %v2202
  %2237 = vmatprep.subr.bf16.mxu0 %v2220
  %2238 = vmatpush1.bf16.msra.mxu0 %v2219
  %2239 = vmatprep.subr.bf16.mxu0 %v2218
  %2240 = vmatpush1.bf16.msra.mxu0 %v2217
  %2241 = vmatprep.subr.bf16.mxu0 %v2216
  %2242 = vmatpush1.bf16.msra.mxu0 %v2215
  %2243 = vmatprep.subr.bf16.mxu0 %v2214
  %2244 = vmatpush1.bf16.msra.mxu0 %v2213
  %2245 = vmatprep.subr.bf16.mxu0 %v2212
  %2246 = vmatpush1.bf16.msra.mxu0 %v2211
  %2247 = vmatprep.subr.bf16.mxu0 %v2210
  %2248 = vmatpush1.bf16.msra.mxu0 %v2209
  %2249 = vmatprep.subr.bf16.mxu0 %v2208
  %2250 = vmatpush1.bf16.msra.mxu0 %v2207
  %2251 = vmatprep.subr.bf16.mxu0 %v2206
  %2252 = vmatpush1.bf16.msra.mxu0 %v2205
  %2253 = vmatprep.subr.bf16.mxu0 0
  %2254 = vmatpush2.bf16.msra.mxu0 0
  %2255 = vmatprep.subr.bf16.mxu0 0
  %2256 = vmatpush2.bf16.msra.mxu0 0
  %2257 = vmatprep.subr.bf16.mxu0 0
  %2258 = vmatpush2.bf16.msra.mxu0 0
  %2259 = vmatprep.subr.bf16.mxu0 0
  %2260 = vmatpush2.bf16.msra.mxu0 0
  %2261 = vmatprep.subr.bf16.mxu0 0
  %2262 = vmatpush2.bf16.msra.mxu0 0
  %2263 = vmatprep.subr.bf16.mxu0 0
  %2264 = vmatpush2.bf16.msra.mxu0 0
  %2265 = vmatprep.subr.bf16.mxu0 0
  %2266 = vmatpush2.bf16.msra.mxu0 0
  %2267 = vmatprep.subr.bf16.mxu0 0
  %2268 = vmatpush2.bf16.msra.mxu0 0
  %2269 = vmatprep.mubr.bf16.mxu0 0
  %2270 = vmatmul.mubr.bf16.gmra.mxu0 %v2139
  %v2271 = vpop.f32.mrf.mxu0
  %v2272 = vadd.f32 0.0, %v2271
  %v2273 = vpop.f32.mrf.mxu0
  %v2274 = vadd.f32 0.0, %v2273
  %v2275 = vpop.f32.mrf.mxu0
  %v2276 = vadd.f32 0.0, %v2275
  %v2277 = vpop.f32.mrf.mxu0
  %v2278 = vadd.f32 0.0, %v2277
  %2279 = vdwg.mxu0
  %v2280 = vadd.f32 %v2135, %v2272
  %v2281 = vadd.f32 %v2136, %v2274
  %v2282 = vadd.f32 %v2137, %v2276
  %v2283 = vadd.f32 %v2138, %v2278
  %v2284 = vpack.c.bf16 %v1229, %v1226
  %s2285 = scalar_lea.vmem %s10, 896
  %v2286 = vld [vmem:[%s2285] sm:$0xff]
  %v2287 = vld [vmem:[%s2285 + $0x8] sm:$0xff]
  %v2288 = vld [vmem:[%s2285 + $0x10] sm:$0xff]
  %v2289 = vld [vmem:[%s2285 + $0x18] sm:$0xff]
  %v2290 = vld [vmem:[%s2285 + $0x20] sm:$0xff]
  %v2291 = vld [vmem:[%s2285 + $0x28] sm:$0xff]
  %v2292 = vld [vmem:[%s2285 + $0x30] sm:$0xff]
  %v2293 = vld [vmem:[%s2285 + $0x38] sm:$0xff]
  %v2294 = vld [vmem:[%s2285 + $0x40] sm:$0xff]
  %v2295 = vld [vmem:[%s2285 + $0x48] sm:$0xff]
  %v2296 = vld [vmem:[%s2285 + $0x50] sm:$0xff]
  %v2297 = vld [vmem:[%s2285 + $0x58] sm:$0xff]
  %v2298 = vld [vmem:[%s2285 + $0x60] sm:$0xff]
  %v2299 = vld [vmem:[%s2285 + $0x68] sm:$0xff]
  %v2300 = vld [vmem:[%s2285 + $0x70] sm:$0xff]
  %v2301 = vld [vmem:[%s2285 + $0x78] sm:$0xff]
  %v2318 = vunpack.c.l.b16 %v2286
  %v2319 = vunpack.c.h.b16 %v2286
  %v2320 = vunpack.c.l.b16 %v2287
  %v2321 = vunpack.c.h.b16 %v2287
  %v2322 = vunpack.c.l.b16 %v2288
  %v2323 = vunpack.c.h.b16 %v2288
  %v2324 = vunpack.c.l.b16 %v2289
  %v2325 = vunpack.c.h.b16 %v2289
  %v2326 = vunpack.c.l.b16 %v2290
  %v2327 = vunpack.c.h.b16 %v2290
  %v2328 = vunpack.c.l.b16 %v2291
  %v2329 = vunpack.c.h.b16 %v2291
  %v2330 = vunpack.c.l.b16 %v2292
  %v2331 = vunpack.c.h.b16 %v2292
  %v2332 = vunpack.c.l.b16 %v2293
  %v2333 = vunpack.c.h.b16 %v2293
  %v2334 = vunpack.c.l.b16 %v2294
  %v2335 = vunpack.c.h.b16 %v2294
  %v2336 = vunpack.c.l.b16 %v2295
  %v2337 = vunpack.c.h.b16 %v2295
  %v2338 = vunpack.c.l.b16 %v2296
  %v2339 = vunpack.c.h.b16 %v2296
  %v2340 = vunpack.c.l.b16 %v2297
  %v2341 = vunpack.c.h.b16 %v2297
  %v2342 = vunpack.c.l.b16 %v2298
  %v2343 = vunpack.c.h.b16 %v2298
  %v2344 = vunpack.c.l.b16 %v2299
  %v2345 = vunpack.c.h.b16 %v2299
  %v2346 = vunpack.c.l.b16 %v2300
  %v2347 = vunpack.c.h.b16 %v2300
  %v2348 = vunpack.c.l.b16 %v2301
  %v2349 = vunpack.c.h.b16 %v2301
  %v2350 = vpack.c.b16 %v2320, %v2318
  %v2351 = vpack.c.b16 %v2321, %v2319
  %v2352 = vpack.c.b16 %v2324, %v2322
  %v2353 = vpack.c.b16 %v2325, %v2323
  %v2354 = vpack.c.b16 %v2328, %v2326
  %v2355 = vpack.c.b16 %v2329, %v2327
  %v2356 = vpack.c.b16 %v2332, %v2330
  %v2357 = vpack.c.b16 %v2333, %v2331
  %v2358 = vpack.c.b16 %v2336, %v2334
  %v2359 = vpack.c.b16 %v2337, %v2335
  %v2360 = vpack.c.b16 %v2340, %v2338
  %v2361 = vpack.c.b16 %v2341, %v2339
  %v2362 = vpack.c.b16 %v2344, %v2342
  %v2363 = vpack.c.b16 %v2345, %v2343
  %v2364 = vpack.c.b16 %v2348, %v2346
  %v2365 = vpack.c.b16 %v2349, %v2347
  %2382 = vmatprep.subr.bf16.mxu0 %v2365
  %2383 = vmatpush1.bf16.msra.mxu0 %v2364
  %2384 = vmatprep.subr.bf16.mxu0 %v2363
  %2385 = vmatpush1.bf16.msra.mxu0 %v2362
  %2386 = vmatprep.subr.bf16.mxu0 %v2361
  %2387 = vmatpush1.bf16.msra.mxu0 %v2360
  %2388 = vmatprep.subr.bf16.mxu0 %v2359
  %2389 = vmatpush1.bf16.msra.mxu0 %v2358
  %2390 = vmatprep.subr.bf16.mxu0 %v2357
  %2391 = vmatpush1.bf16.msra.mxu0 %v2356
  %2392 = vmatprep.subr.bf16.mxu0 %v2355
  %2393 = vmatpush1.bf16.msra.mxu0 %v2354
  %2394 = vmatprep.subr.bf16.mxu0 %v2353
  %2395 = vmatpush1.bf16.msra.mxu0 %v2352
  %2396 = vmatprep.subr.bf16.mxu0 %v2351
  %2397 = vmatpush1.bf16.msra.mxu0 %v2350
  %2398 = vmatprep.subr.bf16.mxu0 0
  %2399 = vmatpush2.bf16.msra.mxu0 0
  %2400 = vmatprep.subr.bf16.mxu0 0
  %2401 = vmatpush2.bf16.msra.mxu0 0
  %2402 = vmatprep.subr.bf16.mxu0 0
  %2403 = vmatpush2.bf16.msra.mxu0 0
  %2404 = vmatprep.subr.bf16.mxu0 0
  %2405 = vmatpush2.bf16.msra.mxu0 0
  %2406 = vmatprep.subr.bf16.mxu0 0
  %2407 = vmatpush2.bf16.msra.mxu0 0
  %2408 = vmatprep.subr.bf16.mxu0 0
  %2409 = vmatpush2.bf16.msra.mxu0 0
  %2410 = vmatprep.subr.bf16.mxu0 0
  %2411 = vmatpush2.bf16.msra.mxu0 0
  %2412 = vmatprep.subr.bf16.mxu0 0
  %2413 = vmatpush2.bf16.msra.mxu0 0
  %2414 = vmatprep.mubr.bf16.mxu0 0
  %2415 = vmatmul.mubr.bf16.gmra.mxu0 %v2284
  %v2416 = vpop.f32.mrf.mxu0
  %v2417 = vadd.f32 0.0, %v2416
  %v2418 = vpop.f32.mrf.mxu0
  %v2419 = vadd.f32 0.0, %v2418
  %v2420 = vpop.f32.mrf.mxu0
  %v2421 = vadd.f32 0.0, %v2420
  %v2422 = vpop.f32.mrf.mxu0
  %v2423 = vadd.f32 0.0, %v2422
  %2424 = vdwg.mxu0
  %v2425 = vadd.f32 %v2280, %v2417
  %v2426 = vadd.f32 %v2281, %v2419
  %v2427 = vadd.f32 %v2282, %v2421
  %v2428 = vadd.f32 %v2283, %v2423
  %v2429 = vpack.c.bf16 %v1235, %v1232
  %s2430 = scalar_lea.vmem %s10, 1024
  %v2431 = vld [vmem:[%s2430] sm:$0xff]
  %v2432 = vld [vmem:[%s2430 + $0x8] sm:$0xff]
  %v2433 = vld [vmem:[%s2430 + $0x10] sm:$0xff]
  %v2434 = vld [vmem:[%s2430 + $0x18] sm:$0xff]
  %v2435 = vld [vmem:[%s2430 + $0x20] sm:$0xff]
  %v2436 = vld [vmem:[%s2430 + $0x28] sm:$0xff]
  %v2437 = vld [vmem:[%s2430 + $0x30] sm:$0xff]
  %v2438 = vld [vmem:[%s2430 + $0x38] sm:$0xff]
  %v2439 = vld [vmem:[%s2430 + $0x40] sm:$0xff]
  %v2440 = vld [vmem:[%s2430 + $0x48] sm:$0xff]
  %v2441 = vld [vmem:[%s2430 + $0x50] sm:$0xff]
  %v2442 = vld [vmem:[%s2430 + $0x58] sm:$0xff]
  %v2443 = vld [vmem:[%s2430 + $0x60] sm:$0xff]
  %v2444 = vld [vmem:[%s2430 + $0x68] sm:$0xff]
  %v2445 = vld [vmem:[%s2430 + $0x70] sm:$0xff]
  %v2446 = vld [vmem:[%s2430 + $0x78] sm:$0xff]
  %v2463 = vunpack.c.l.b16 %v2431
  %v2464 = vunpack.c.h.b16 %v2431
  %v2465 = vunpack.c.l.b16 %v2432
  %v2466 = vunpack.c.h.b16 %v2432
  %v2467 = vunpack.c.l.b16 %v2433
  %v2468 = vunpack.c.h.b16 %v2433
  %v2469 = vunpack.c.l.b16 %v2434
  %v2470 = vunpack.c.h.b16 %v2434
  %v2471 = vunpack.c.l.b16 %v2435
  %v2472 = vunpack.c.h.b16 %v2435
  %v2473 = vunpack.c.l.b16 %v2436
  %v2474 = vunpack.c.h.b16 %v2436
  %v2475 = vunpack.c.l.b16 %v2437
  %v2476 = vunpack.c.h.b16 %v2437
  %v2477 = vunpack.c.l.b16 %v2438
  %v2478 = vunpack.c.h.b16 %v2438
  %v2479 = vunpack.c.l.b16 %v2439
  %v2480 = vunpack.c.h.b16 %v2439
  %v2481 = vunpack.c.l.b16 %v2440
  %v2482 = vunpack.c.h.b16 %v2440
  %v2483 = vunpack.c.l.b16 %v2441
  %v2484 = vunpack.c.h.b16 %v2441
  %v2485 = vunpack.c.l.b16 %v2442
  %v2486 = vunpack.c.h.b16 %v2442
  %v2487 = vunpack.c.l.b16 %v2443
  %v2488 = vunpack.c.h.b16 %v2443
  %v2489 = vunpack.c.l.b16 %v2444
  %v2490 = vunpack.c.h.b16 %v2444
  %v2491 = vunpack.c.l.b16 %v2445
  %v2492 = vunpack.c.h.b16 %v2445
  %v2493 = vunpack.c.l.b16 %v2446
  %v2494 = vunpack.c.h.b16 %v2446
  %v2495 = vpack.c.b16 %v2465, %v2463
  %v2496 = vpack.c.b16 %v2466, %v2464
  %v2497 = vpack.c.b16 %v2469, %v2467
  %v2498 = vpack.c.b16 %v2470, %v2468
  %v2499 = vpack.c.b16 %v2473, %v2471
  %v2500 = vpack.c.b16 %v2474, %v2472
  %v2501 = vpack.c.b16 %v2477, %v2475
  %v2502 = vpack.c.b16 %v2478, %v2476
  %v2503 = vpack.c.b16 %v2481, %v2479
  %v2504 = vpack.c.b16 %v2482, %v2480
  %v2505 = vpack.c.b16 %v2485, %v2483
  %v2506 = vpack.c.b16 %v2486, %v2484
  %v2507 = vpack.c.b16 %v2489, %v2487
  %v2508 = vpack.c.b16 %v2490, %v2488
  %v2509 = vpack.c.b16 %v2493, %v2491
  %v2510 = vpack.c.b16 %v2494, %v2492
  %2527 = vmatprep.subr.bf16.mxu0 %v2510
  %2528 = vmatpush1.bf16.msra.mxu0 %v2509
  %2529 = vmatprep.subr.bf16.mxu0 %v2508
  %2530 = vmatpush1.bf16.msra.mxu0 %v2507
  %2531 = vmatprep.subr.bf16.mxu0 %v2506
  %2532 = vmatpush1.bf16.msra.mxu0 %v2505
  %2533 = vmatprep.subr.bf16.mxu0 %v2504
  %2534 = vmatpush1.bf16.msra.mxu0 %v2503
  %2535 = vmatprep.subr.bf16.mxu0 %v2502
  %2536 = vmatpush1.bf16.msra.mxu0 %v2501
  %2537 = vmatprep.subr.bf16.mxu0 %v2500
  %2538 = vmatpush1.bf16.msra.mxu0 %v2499
  %2539 = vmatprep.subr.bf16.mxu0 %v2498
  %2540 = vmatpush1.bf16.msra.mxu0 %v2497
  %2541 = vmatprep.subr.bf16.mxu0 %v2496
  %2542 = vmatpush1.bf16.msra.mxu0 %v2495
  %2543 = vmatprep.subr.bf16.mxu0 0
  %2544 = vmatpush2.bf16.msra.mxu0 0
  %2545 = vmatprep.subr.bf16.mxu0 0
  %2546 = vmatpush2.bf16.msra.mxu0 0
  %2547 = vmatprep.subr.bf16.mxu0 0
  %2548 = vmatpush2.bf16.msra.mxu0 0
  %2549 = vmatprep.subr.bf16.mxu0 0
  %2550 = vmatpush2.bf16.msra.mxu0 0
  %2551 = vmatprep.subr.bf16.mxu0 0
  %2552 = vmatpush2.bf16.msra.mxu0 0
  %2553 = vmatprep.subr.bf16.mxu0 0
  %2554 = vmatpush2.bf16.msra.mxu0 0
  %2555 = vmatprep.subr.bf16.mxu0 0
  %2556 = vmatpush2.bf16.msra.mxu0 0
  %2557 = vmatprep.subr.bf16.mxu0 0
  %2558 = vmatpush2.bf16.msra.mxu0 0
  %2559 = vmatprep.mubr.bf16.mxu0 0
  %2560 = vmatmul.mubr.bf16.gmra.mxu0 %v2429
  %v2561 = vpop.f32.mrf.mxu0
  %v2562 = vadd.f32 0.0, %v2561
  %v2563 = vpop.f32.mrf.mxu0
  %v2564 = vadd.f32 0.0, %v2563
  %v2565 = vpop.f32.mrf.mxu0
  %v2566 = vadd.f32 0.0, %v2565
  %v2567 = vpop.f32.mrf.mxu0
  %v2568 = vadd.f32 0.0, %v2567
  %2569 = vdwg.mxu0
  %v2570 = vadd.f32 %v2425, %v2562
  %v2571 = vadd.f32 %v2426, %v2564
  %v2572 = vadd.f32 %v2427, %v2566
  %v2573 = vadd.f32 %v2428, %v2568
  %v2574 = vpack.c.bf16 %v1241, %v1238
  %s2575 = scalar_lea.vmem %s10, 1152
  %v2576 = vld [vmem:[%s2575] sm:$0xff]
  %v2577 = vld [vmem:[%s2575 + $0x8] sm:$0xff]
  %v2578 = vld [vmem:[%s2575 + $0x10] sm:$0xff]
  %v2579 = vld [vmem:[%s2575 + $0x18] sm:$0xff]
  %v2580 = vld [vmem:[%s2575 + $0x20] sm:$0xff]
  %v2581 = vld [vmem:[%s2575 + $0x28] sm:$0xff]
  %v2582 = vld [vmem:[%s2575 + $0x30] sm:$0xff]
  %v2583 = vld [vmem:[%s2575 + $0x38] sm:$0xff]
  %v2584 = vld [vmem:[%s2575 + $0x40] sm:$0xff]
  %v2585 = vld [vmem:[%s2575 + $0x48] sm:$0xff]
  %v2586 = vld [vmem:[%s2575 + $0x50] sm:$0xff]
  %v2587 = vld [vmem:[%s2575 + $0x58] sm:$0xff]
  %v2588 = vld [vmem:[%s2575 + $0x60] sm:$0xff]
  %v2589 = vld [vmem:[%s2575 + $0x68] sm:$0xff]
  %v2590 = vld [vmem:[%s2575 + $0x70] sm:$0xff]
  %v2591 = vld [vmem:[%s2575 + $0x78] sm:$0xff]
  %v2608 = vunpack.c.l.b16 %v2576
  %v2609 = vunpack.c.h.b16 %v2576
  %v2610 = vunpack.c.l.b16 %v2577
  %v2611 = vunpack.c.h.b16 %v2577
  %v2612 = vunpack.c.l.b16 %v2578
  %v2613 = vunpack.c.h.b16 %v2578
  %v2614 = vunpack.c.l.b16 %v2579
  %v2615 = vunpack.c.h.b16 %v2579
  %v2616 = vunpack.c.l.b16 %v2580
  %v2617 = vunpack.c.h.b16 %v2580
  %v2618 = vunpack.c.l.b16 %v2581
  %v2619 = vunpack.c.h.b16 %v2581
  %v2620 = vunpack.c.l.b16 %v2582
  %v2621 = vunpack.c.h.b16 %v2582
  %v2622 = vunpack.c.l.b16 %v2583
  %v2623 = vunpack.c.h.b16 %v2583
  %v2624 = vunpack.c.l.b16 %v2584
  %v2625 = vunpack.c.h.b16 %v2584
  %v2626 = vunpack.c.l.b16 %v2585
  %v2627 = vunpack.c.h.b16 %v2585
  %v2628 = vunpack.c.l.b16 %v2586
  %v2629 = vunpack.c.h.b16 %v2586
  %v2630 = vunpack.c.l.b16 %v2587
  %v2631 = vunpack.c.h.b16 %v2587
  %v2632 = vunpack.c.l.b16 %v2588
  %v2633 = vunpack.c.h.b16 %v2588
  %v2634 = vunpack.c.l.b16 %v2589
  %v2635 = vunpack.c.h.b16 %v2589
  %v2636 = vunpack.c.l.b16 %v2590
  %v2637 = vunpack.c.h.b16 %v2590
  %v2638 = vunpack.c.l.b16 %v2591
  %v2639 = vunpack.c.h.b16 %v2591
  %v2640 = vpack.c.b16 %v2610, %v2608
  %v2641 = vpack.c.b16 %v2611, %v2609
  %v2642 = vpack.c.b16 %v2614, %v2612
  %v2643 = vpack.c.b16 %v2615, %v2613
  %v2644 = vpack.c.b16 %v2618, %v2616
  %v2645 = vpack.c.b16 %v2619, %v2617
  %v2646 = vpack.c.b16 %v2622, %v2620
  %v2647 = vpack.c.b16 %v2623, %v2621
  %v2648 = vpack.c.b16 %v2626, %v2624
  %v2649 = vpack.c.b16 %v2627, %v2625
  %v2650 = vpack.c.b16 %v2630, %v2628
  %v2651 = vpack.c.b16 %v2631, %v2629
  %v2652 = vpack.c.b16 %v2634, %v2632
  %v2653 = vpack.c.b16 %v2635, %v2633
  %v2654 = vpack.c.b16 %v2638, %v2636
  %v2655 = vpack.c.b16 %v2639, %v2637
  %2672 = vmatprep.subr.bf16.mxu0 %v2655
  %2673 = vmatpush1.bf16.msra.mxu0 %v2654
  %2674 = vmatprep.subr.bf16.mxu0 %v2653
  %2675 = vmatpush1.bf16.msra.mxu0 %v2652
  %2676 = vmatprep.subr.bf16.mxu0 %v2651
  %2677 = vmatpush1.bf16.msra.mxu0 %v2650
  %2678 = vmatprep.subr.bf16.mxu0 %v2649
  %2679 = vmatpush1.bf16.msra.mxu0 %v2648
  %2680 = vmatprep.subr.bf16.mxu0 %v2647
  %2681 = vmatpush1.bf16.msra.mxu0 %v2646
  %2682 = vmatprep.subr.bf16.mxu0 %v2645
  %2683 = vmatpush1.bf16.msra.mxu0 %v2644
  %2684 = vmatprep.subr.bf16.mxu0 %v2643
  %2685 = vmatpush1.bf16.msra.mxu0 %v2642
  %2686 = vmatprep.subr.bf16.mxu0 %v2641
  %2687 = vmatpush1.bf16.msra.mxu0 %v2640
  %2688 = vmatprep.subr.bf16.mxu0 0
  %2689 = vmatpush2.bf16.msra.mxu0 0
  %2690 = vmatprep.subr.bf16.mxu0 0
  %2691 = vmatpush2.bf16.msra.mxu0 0
  %2692 = vmatprep.subr.bf16.mxu0 0
  %2693 = vmatpush2.bf16.msra.mxu0 0
  %2694 = vmatprep.subr.bf16.mxu0 0
  %2695 = vmatpush2.bf16.msra.mxu0 0
  %2696 = vmatprep.subr.bf16.mxu0 0
  %2697 = vmatpush2.bf16.msra.mxu0 0
  %2698 = vmatprep.subr.bf16.mxu0 0
  %2699 = vmatpush2.bf16.msra.mxu0 0
  %2700 = vmatprep.subr.bf16.mxu0 0
  %2701 = vmatpush2.bf16.msra.mxu0 0
  %2702 = vmatprep.subr.bf16.mxu0 0
  %2703 = vmatpush2.bf16.msra.mxu0 0
  %2704 = vmatprep.mubr.bf16.mxu0 0
  %2705 = vmatmul.mubr.bf16.gmra.mxu0 %v2574
  %v2706 = vpop.f32.mrf.mxu0
  %v2707 = vadd.f32 0.0, %v2706
  %v2708 = vpop.f32.mrf.mxu0
  %v2709 = vadd.f32 0.0, %v2708
  %v2710 = vpop.f32.mrf.mxu0
  %v2711 = vadd.f32 0.0, %v2710
  %v2712 = vpop.f32.mrf.mxu0
  %v2713 = vadd.f32 0.0, %v2712
  %2714 = vdwg.mxu0
  %v2715 = vadd.f32 %v2570, %v2707
  %v2716 = vadd.f32 %v2571, %v2709
  %v2717 = vadd.f32 %v2572, %v2711
  %v2718 = vadd.f32 %v2573, %v2713
  %v2719 = vpack.c.bf16 %v1247, %v1244
  %s2720 = scalar_lea.vmem %s10, 1280
  %v2721 = vld [vmem:[%s2720] sm:$0xff]
  %v2722 = vld [vmem:[%s2720 + $0x8] sm:$0xff]
  %v2723 = vld [vmem:[%s2720 + $0x10] sm:$0xff]
  %v2724 = vld [vmem:[%s2720 + $0x18] sm:$0xff]
  %v2725 = vld [vmem:[%s2720 + $0x20] sm:$0xff]
  %v2726 = vld [vmem:[%s2720 + $0x28] sm:$0xff]
  %v2727 = vld [vmem:[%s2720 + $0x30] sm:$0xff]
  %v2728 = vld [vmem:[%s2720 + $0x38] sm:$0xff]
  %v2729 = vld [vmem:[%s2720 + $0x40] sm:$0xff]
  %v2730 = vld [vmem:[%s2720 + $0x48] sm:$0xff]
  %v2731 = vld [vmem:[%s2720 + $0x50] sm:$0xff]
  %v2732 = vld [vmem:[%s2720 + $0x58] sm:$0xff]
  %v2733 = vld [vmem:[%s2720 + $0x60] sm:$0xff]
  %v2734 = vld [vmem:[%s2720 + $0x68] sm:$0xff]
  %v2735 = vld [vmem:[%s2720 + $0x70] sm:$0xff]
  %v2736 = vld [vmem:[%s2720 + $0x78] sm:$0xff]
  %v2753 = vunpack.c.l.b16 %v2721
  %v2754 = vunpack.c.h.b16 %v2721
  %v2755 = vunpack.c.l.b16 %v2722
  %v2756 = vunpack.c.h.b16 %v2722
  %v2757 = vunpack.c.l.b16 %v2723
  %v2758 = vunpack.c.h.b16 %v2723
  %v2759 = vunpack.c.l.b16 %v2724
  %v2760 = vunpack.c.h.b16 %v2724
  %v2761 = vunpack.c.l.b16 %v2725
  %v2762 = vunpack.c.h.b16 %v2725
  %v2763 = vunpack.c.l.b16 %v2726
  %v2764 = vunpack.c.h.b16 %v2726
  %v2765 = vunpack.c.l.b16 %v2727
  %v2766 = vunpack.c.h.b16 %v2727
  %v2767 = vunpack.c.l.b16 %v2728
  %v2768 = vunpack.c.h.b16 %v2728
  %v2769 = vunpack.c.l.b16 %v2729
  %v2770 = vunpack.c.h.b16 %v2729
  %v2771 = vunpack.c.l.b16 %v2730
  %v2772 = vunpack.c.h.b16 %v2730
  %v2773 = vunpack.c.l.b16 %v2731
  %v2774 = vunpack.c.h.b16 %v2731
  %v2775 = vunpack.c.l.b16 %v2732
  %v2776 = vunpack.c.h.b16 %v2732
  %v2777 = vunpack.c.l.b16 %v2733
  %v2778 = vunpack.c.h.b16 %v2733
  %v2779 = vunpack.c.l.b16 %v2734
  %v2780 = vunpack.c.h.b16 %v2734
  %v2781 = vunpack.c.l.b16 %v2735
  %v2782 = vunpack.c.h.b16 %v2735
  %v2783 = vunpack.c.l.b16 %v2736
  %v2784 = vunpack.c.h.b16 %v2736
  %v2785 = vpack.c.b16 %v2755, %v2753
  %v2786 = vpack.c.b16 %v2756, %v2754
  %v2787 = vpack.c.b16 %v2759, %v2757
  %v2788 = vpack.c.b16 %v2760, %v2758
  %v2789 = vpack.c.b16 %v2763, %v2761
  %v2790 = vpack.c.b16 %v2764, %v2762
  %v2791 = vpack.c.b16 %v2767, %v2765
  %v2792 = vpack.c.b16 %v2768, %v2766
  %v2793 = vpack.c.b16 %v2771, %v2769
  %v2794 = vpack.c.b16 %v2772, %v2770
  %v2795 = vpack.c.b16 %v2775, %v2773
  %v2796 = vpack.c.b16 %v2776, %v2774
  %v2797 = vpack.c.b16 %v2779, %v2777
  %v2798 = vpack.c.b16 %v2780, %v2778
  %v2799 = vpack.c.b16 %v2783, %v2781
  %v2800 = vpack.c.b16 %v2784, %v2782
  %2817 = vmatprep.subr.bf16.mxu0 %v2800
  %2818 = vmatpush1.bf16.msra.mxu0 %v2799
  %2819 = vmatprep.subr.bf16.mxu0 %v2798
  %2820 = vmatpush1.bf16.msra.mxu0 %v2797
  %2821 = vmatprep.subr.bf16.mxu0 %v2796
  %2822 = vmatpush1.bf16.msra.mxu0 %v2795
  %2823 = vmatprep.subr.bf16.mxu0 %v2794
  %2824 = vmatpush1.bf16.msra.mxu0 %v2793
  %2825 = vmatprep.subr.bf16.mxu0 %v2792
  %2826 = vmatpush1.bf16.msra.mxu0 %v2791
  %2827 = vmatprep.subr.bf16.mxu0 %v2790
  %2828 = vmatpush1.bf16.msra.mxu0 %v2789
  %2829 = vmatprep.subr.bf16.mxu0 %v2788
  %2830 = vmatpush1.bf16.msra.mxu0 %v2787
  %2831 = vmatprep.subr.bf16.mxu0 %v2786
  %2832 = vmatpush1.bf16.msra.mxu0 %v2785
  %2833 = vmatprep.subr.bf16.mxu0 0
  %2834 = vmatpush2.bf16.msra.mxu0 0
  %2835 = vmatprep.subr.bf16.mxu0 0
  %2836 = vmatpush2.bf16.msra.mxu0 0
  %2837 = vmatprep.subr.bf16.mxu0 0
  %2838 = vmatpush2.bf16.msra.mxu0 0
  %2839 = vmatprep.subr.bf16.mxu0 0
  %2840 = vmatpush2.bf16.msra.mxu0 0
  %2841 = vmatprep.subr.bf16.mxu0 0
  %2842 = vmatpush2.bf16.msra.mxu0 0
  %2843 = vmatprep.subr.bf16.mxu0 0
  %2844 = vmatpush2.bf16.msra.mxu0 0
  %2845 = vmatprep.subr.bf16.mxu0 0
  %2846 = vmatpush2.bf16.msra.mxu0 0
  %2847 = vmatprep.subr.bf16.mxu0 0
  %2848 = vmatpush2.bf16.msra.mxu0 0
  %2849 = vmatprep.mubr.bf16.mxu0 0
  %2850 = vmatmul.mubr.bf16.gmra.mxu0 %v2719
  %v2851 = vpop.f32.mrf.mxu0
  %v2852 = vadd.f32 0.0, %v2851
  %v2853 = vpop.f32.mrf.mxu0
  %v2854 = vadd.f32 0.0, %v2853
  %v2855 = vpop.f32.mrf.mxu0
  %v2856 = vadd.f32 0.0, %v2855
  %v2857 = vpop.f32.mrf.mxu0
  %v2858 = vadd.f32 0.0, %v2857
  %2859 = vdwg.mxu0
  %v2860 = vadd.f32 %v2715, %v2852
  %v2861 = vadd.f32 %v2716, %v2854
  %v2862 = vadd.f32 %v2717, %v2856
  %v2863 = vadd.f32 %v2718, %v2858
  %v2864 = vpack.c.bf16 %v1253, %v1250
  %s2865 = scalar_lea.vmem %s10, 1408
  %v2866 = vld [vmem:[%s2865] sm:$0xff]
  %v2867 = vld [vmem:[%s2865 + $0x8] sm:$0xff]
  %v2868 = vld [vmem:[%s2865 + $0x10] sm:$0xff]
  %v2869 = vld [vmem:[%s2865 + $0x18] sm:$0xff]
  %v2870 = vld [vmem:[%s2865 + $0x20] sm:$0xff]
  %v2871 = vld [vmem:[%s2865 + $0x28] sm:$0xff]
  %v2872 = vld [vmem:[%s2865 + $0x30] sm:$0xff]
  %v2873 = vld [vmem:[%s2865 + $0x38] sm:$0xff]
  %v2874 = vld [vmem:[%s2865 + $0x40] sm:$0xff]
  %v2875 = vld [vmem:[%s2865 + $0x48] sm:$0xff]
  %v2876 = vld [vmem:[%s2865 + $0x50] sm:$0xff]
  %v2877 = vld [vmem:[%s2865 + $0x58] sm:$0xff]
  %v2878 = vld [vmem:[%s2865 + $0x60] sm:$0xff]
  %v2879 = vld [vmem:[%s2865 + $0x68] sm:$0xff]
  %v2880 = vld [vmem:[%s2865 + $0x70] sm:$0xff]
  %v2881 = vld [vmem:[%s2865 + $0x78] sm:$0xff]
  %v2898 = vunpack.c.l.b16 %v2866
  %v2899 = vunpack.c.h.b16 %v2866
  %v2900 = vunpack.c.l.b16 %v2867
  %v2901 = vunpack.c.h.b16 %v2867
  %v2902 = vunpack.c.l.b16 %v2868
  %v2903 = vunpack.c.h.b16 %v2868
  %v2904 = vunpack.c.l.b16 %v2869
  %v2905 = vunpack.c.h.b16 %v2869
  %v2906 = vunpack.c.l.b16 %v2870
  %v2907 = vunpack.c.h.b16 %v2870
  %v2908 = vunpack.c.l.b16 %v2871
  %v2909 = vunpack.c.h.b16 %v2871
  %v2910 = vunpack.c.l.b16 %v2872
  %v2911 = vunpack.c.h.b16 %v2872
  %v2912 = vunpack.c.l.b16 %v2873
  %v2913 = vunpack.c.h.b16 %v2873
  %v2914 = vunpack.c.l.b16 %v2874
  %v2915 = vunpack.c.h.b16 %v2874
  %v2916 = vunpack.c.l.b16 %v2875
  %v2917 = vunpack.c.h.b16 %v2875
  %v2918 = vunpack.c.l.b16 %v2876
  %v2919 = vunpack.c.h.b16 %v2876
  %v2920 = vunpack.c.l.b16 %v2877
  %v2921 = vunpack.c.h.b16 %v2877
  %v2922 = vunpack.c.l.b16 %v2878
  %v2923 = vunpack.c.h.b16 %v2878
  %v2924 = vunpack.c.l.b16 %v2879
  %v2925 = vunpack.c.h.b16 %v2879
  %v2926 = vunpack.c.l.b16 %v2880
  %v2927 = vunpack.c.h.b16 %v2880
  %v2928 = vunpack.c.l.b16 %v2881
  %v2929 = vunpack.c.h.b16 %v2881
  %v2930 = vpack.c.b16 %v2900, %v2898
  %v2931 = vpack.c.b16 %v2901, %v2899
  %v2932 = vpack.c.b16 %v2904, %v2902
  %v2933 = vpack.c.b16 %v2905, %v2903
  %v2934 = vpack.c.b16 %v2908, %v2906
  %v2935 = vpack.c.b16 %v2909, %v2907
  %v2936 = vpack.c.b16 %v2912, %v2910
  %v2937 = vpack.c.b16 %v2913, %v2911
  %v2938 = vpack.c.b16 %v2916, %v2914
  %v2939 = vpack.c.b16 %v2917, %v2915
  %v2940 = vpack.c.b16 %v2920, %v2918
  %v2941 = vpack.c.b16 %v2921, %v2919
  %v2942 = vpack.c.b16 %v2924, %v2922
  %v2943 = vpack.c.b16 %v2925, %v2923
  %v2944 = vpack.c.b16 %v2928, %v2926
  %v2945 = vpack.c.b16 %v2929, %v2927
  %2962 = vmatprep.subr.bf16.mxu0 %v2945
  %2963 = vmatpush1.bf16.msra.mxu0 %v2944
  %2964 = vmatprep.subr.bf16.mxu0 %v2943
  %2965 = vmatpush1.bf16.msra.mxu0 %v2942
  %2966 = vmatprep.subr.bf16.mxu0 %v2941
  %2967 = vmatpush1.bf16.msra.mxu0 %v2940
  %2968 = vmatprep.subr.bf16.mxu0 %v2939
  %2969 = vmatpush1.bf16.msra.mxu0 %v2938
  %2970 = vmatprep.subr.bf16.mxu0 %v2937
  %2971 = vmatpush1.bf16.msra.mxu0 %v2936
  %2972 = vmatprep.subr.bf16.mxu0 %v2935
  %2973 = vmatpush1.bf16.msra.mxu0 %v2934
  %2974 = vmatprep.subr.bf16.mxu0 %v2933
  %2975 = vmatpush1.bf16.msra.mxu0 %v2932
  %2976 = vmatprep.subr.bf16.mxu0 %v2931
  %2977 = vmatpush1.bf16.msra.mxu0 %v2930
  %2978 = vmatprep.subr.bf16.mxu0 0
  %2979 = vmatpush2.bf16.msra.mxu0 0
  %2980 = vmatprep.subr.bf16.mxu0 0
  %2981 = vmatpush2.bf16.msra.mxu0 0
  %2982 = vmatprep.subr.bf16.mxu0 0
  %2983 = vmatpush2.bf16.msra.mxu0 0
  %2984 = vmatprep.subr.bf16.mxu0 0
  %2985 = vmatpush2.bf16.msra.mxu0 0
  %2986 = vmatprep.subr.bf16.mxu0 0
  %2987 = vmatpush2.bf16.msra.mxu0 0
  %2988 = vmatprep.subr.bf16.mxu0 0
  %2989 = vmatpush2.bf16.msra.mxu0 0
  %2990 = vmatprep.subr.bf16.mxu0 0
  %2991 = vmatpush2.bf16.msra.mxu0 0
  %2992 = vmatprep.subr.bf16.mxu0 0
  %2993 = vmatpush2.bf16.msra.mxu0 0
  %2994 = vmatprep.mubr.bf16.mxu0 0
  %2995 = vmatmul.mubr.bf16.gmra.mxu0 %v2864
  %v2996 = vpop.f32.mrf.mxu0
  %v2997 = vadd.f32 0.0, %v2996
  %v2998 = vpop.f32.mrf.mxu0
  %v2999 = vadd.f32 0.0, %v2998
  %v3000 = vpop.f32.mrf.mxu0
  %v3001 = vadd.f32 0.0, %v3000
  %v3002 = vpop.f32.mrf.mxu0
  %v3003 = vadd.f32 0.0, %v3002
  %3004 = vdwg.mxu0
  %v3005 = vadd.f32 %v2860, %v2997
  %v3006 = vadd.f32 %v2861, %v2999
  %v3007 = vadd.f32 %v2862, %v3001
  %v3008 = vadd.f32 %v2863, %v3003
  %v3009 = vpack.c.bf16 %v1259, %v1256
  %s3010 = scalar_lea.vmem %s10, 1536
  %v3011 = vld [vmem:[%s3010] sm:$0xff]
  %v3012 = vld [vmem:[%s3010 + $0x8] sm:$0xff]
  %v3013 = vld [vmem:[%s3010 + $0x10] sm:$0xff]
  %v3014 = vld [vmem:[%s3010 + $0x18] sm:$0xff]
  %v3015 = vld [vmem:[%s3010 + $0x20] sm:$0xff]
  %v3016 = vld [vmem:[%s3010 + $0x28] sm:$0xff]
  %v3017 = vld [vmem:[%s3010 + $0x30] sm:$0xff]
  %v3018 = vld [vmem:[%s3010 + $0x38] sm:$0xff]
  %v3019 = vld [vmem:[%s3010 + $0x40] sm:$0xff]
  %v3020 = vld [vmem:[%s3010 + $0x48] sm:$0xff]
  %v3021 = vld [vmem:[%s3010 + $0x50] sm:$0xff]
  %v3022 = vld [vmem:[%s3010 + $0x58] sm:$0xff]
  %v3023 = vld [vmem:[%s3010 + $0x60] sm:$0xff]
  %v3024 = vld [vmem:[%s3010 + $0x68] sm:$0xff]
  %v3025 = vld [vmem:[%s3010 + $0x70] sm:$0xff]
  %v3026 = vld [vmem:[%s3010 + $0x78] sm:$0xff]
  %v3043 = vunpack.c.l.b16 %v3011
  %v3044 = vunpack.c.h.b16 %v3011
  %v3045 = vunpack.c.l.b16 %v3012
  %v3046 = vunpack.c.h.b16 %v3012
  %v3047 = vunpack.c.l.b16 %v3013
  %v3048 = vunpack.c.h.b16 %v3013
  %v3049 = vunpack.c.l.b16 %v3014
  %v3050 = vunpack.c.h.b16 %v3014
  %v3051 = vunpack.c.l.b16 %v3015
  %v3052 = vunpack.c.h.b16 %v3015
  %v3053 = vunpack.c.l.b16 %v3016
  %v3054 = vunpack.c.h.b16 %v3016
  %v3055 = vunpack.c.l.b16 %v3017
  %v3056 = vunpack.c.h.b16 %v3017
  %v3057 = vunpack.c.l.b16 %v3018
  %v3058 = vunpack.c.h.b16 %v3018
  %v3059 = vunpack.c.l.b16 %v3019
  %v3060 = vunpack.c.h.b16 %v3019
  %v3061 = vunpack.c.l.b16 %v3020
  %v3062 = vunpack.c.h.b16 %v3020
  %v3063 = vunpack.c.l.b16 %v3021
  %v3064 = vunpack.c.h.b16 %v3021
  %v3065 = vunpack.c.l.b16 %v3022
  %v3066 = vunpack.c.h.b16 %v3022
  %v3067 = vunpack.c.l.b16 %v3023
  %v3068 = vunpack.c.h.b16 %v3023
  %v3069 = vunpack.c.l.b16 %v3024
  %v3070 = vunpack.c.h.b16 %v3024
  %v3071 = vunpack.c.l.b16 %v3025
  %v3072 = vunpack.c.h.b16 %v3025
  %v3073 = vunpack.c.l.b16 %v3026
  %v3074 = vunpack.c.h.b16 %v3026
  %v3075 = vpack.c.b16 %v3045, %v3043
  %v3076 = vpack.c.b16 %v3046, %v3044
  %v3077 = vpack.c.b16 %v3049, %v3047
  %v3078 = vpack.c.b16 %v3050, %v3048
  %v3079 = vpack.c.b16 %v3053, %v3051
  %v3080 = vpack.c.b16 %v3054, %v3052
  %v3081 = vpack.c.b16 %v3057, %v3055
  %v3082 = vpack.c.b16 %v3058, %v3056
  %v3083 = vpack.c.b16 %v3061, %v3059
  %v3084 = vpack.c.b16 %v3062, %v3060
  %v3085 = vpack.c.b16 %v3065, %v3063
  %v3086 = vpack.c.b16 %v3066, %v3064
  %v3087 = vpack.c.b16 %v3069, %v3067
  %v3088 = vpack.c.b16 %v3070, %v3068
  %v3089 = vpack.c.b16 %v3073, %v3071
  %v3090 = vpack.c.b16 %v3074, %v3072
  %3107 = vmatprep.subr.bf16.mxu0 %v3090
  %3108 = vmatpush1.bf16.msra.mxu0 %v3089
  %3109 = vmatprep.subr.bf16.mxu0 %v3088
  %3110 = vmatpush1.bf16.msra.mxu0 %v3087
  %3111 = vmatprep.subr.bf16.mxu0 %v3086
  %3112 = vmatpush1.bf16.msra.mxu0 %v3085
  %3113 = vmatprep.subr.bf16.mxu0 %v3084
  %3114 = vmatpush1.bf16.msra.mxu0 %v3083
  %3115 = vmatprep.subr.bf16.mxu0 %v3082
  %3116 = vmatpush1.bf16.msra.mxu0 %v3081
  %3117 = vmatprep.subr.bf16.mxu0 %v3080
  %3118 = vmatpush1.bf16.msra.mxu0 %v3079
  %3119 = vmatprep.subr.bf16.mxu0 %v3078
  %3120 = vmatpush1.bf16.msra.mxu0 %v3077
  %3121 = vmatprep.subr.bf16.mxu0 %v3076
  %3122 = vmatpush1.bf16.msra.mxu0 %v3075
  %3123 = vmatprep.subr.bf16.mxu0 0
  %3124 = vmatpush2.bf16.msra.mxu0 0
  %3125 = vmatprep.subr.bf16.mxu0 0
  %3126 = vmatpush2.bf16.msra.mxu0 0
  %3127 = vmatprep.subr.bf16.mxu0 0
  %3128 = vmatpush2.bf16.msra.mxu0 0
  %3129 = vmatprep.subr.bf16.mxu0 0
  %3130 = vmatpush2.bf16.msra.mxu0 0
  %3131 = vmatprep.subr.bf16.mxu0 0
  %3132 = vmatpush2.bf16.msra.mxu0 0
  %3133 = vmatprep.subr.bf16.mxu0 0
  %3134 = vmatpush2.bf16.msra.mxu0 0
  %3135 = vmatprep.subr.bf16.mxu0 0
  %3136 = vmatpush2.bf16.msra.mxu0 0
  %3137 = vmatprep.subr.bf16.mxu0 0
  %3138 = vmatpush2.bf16.msra.mxu0 0
  %3139 = vmatprep.mubr.bf16.mxu0 0
  %3140 = vmatmul.mubr.bf16.gmra.mxu0 %v3009
  %v3141 = vpop.f32.mrf.mxu0
  %v3142 = vadd.f32 0.0, %v3141
  %v3143 = vpop.f32.mrf.mxu0
  %v3144 = vadd.f32 0.0, %v3143
  %v3145 = vpop.f32.mrf.mxu0
  %v3146 = vadd.f32 0.0, %v3145
  %v3147 = vpop.f32.mrf.mxu0
  %v3148 = vadd.f32 0.0, %v3147
  %3149 = vdwg.mxu0
  %v3150 = vadd.f32 %v3005, %v3142
  %v3151 = vadd.f32 %v3006, %v3144
  %v3152 = vadd.f32 %v3007, %v3146
  %v3153 = vadd.f32 %v3008, %v3148
  %v3154 = vpack.c.bf16 %v1265, %v1262
  %s3155 = scalar_lea.vmem %s10, 1664
  %v3156 = vld [vmem:[%s3155] sm:$0xff]
  %v3157 = vld [vmem:[%s3155 + $0x8] sm:$0xff]
  %v3158 = vld [vmem:[%s3155 + $0x10] sm:$0xff]
  %v3159 = vld [vmem:[%s3155 + $0x18] sm:$0xff]
  %v3160 = vld [vmem:[%s3155 + $0x20] sm:$0xff]
  %v3161 = vld [vmem:[%s3155 + $0x28] sm:$0xff]
  %v3162 = vld [vmem:[%s3155 + $0x30] sm:$0xff]
  %v3163 = vld [vmem:[%s3155 + $0x38] sm:$0xff]
  %v3164 = vld [vmem:[%s3155 + $0x40] sm:$0xff]
  %v3165 = vld [vmem:[%s3155 + $0x48] sm:$0xff]
  %v3166 = vld [vmem:[%s3155 + $0x50] sm:$0xff]
  %v3167 = vld [vmem:[%s3155 + $0x58] sm:$0xff]
  %v3168 = vld [vmem:[%s3155 + $0x60] sm:$0xff]
  %v3169 = vld [vmem:[%s3155 + $0x68] sm:$0xff]
  %v3170 = vld [vmem:[%s3155 + $0x70] sm:$0xff]
  %v3171 = vld [vmem:[%s3155 + $0x78] sm:$0xff]
  %v3188 = vunpack.c.l.b16 %v3156
  %v3189 = vunpack.c.h.b16 %v3156
  %v3190 = vunpack.c.l.b16 %v3157
  %v3191 = vunpack.c.h.b16 %v3157
  %v3192 = vunpack.c.l.b16 %v3158
  %v3193 = vunpack.c.h.b16 %v3158
  %v3194 = vunpack.c.l.b16 %v3159
  %v3195 = vunpack.c.h.b16 %v3159
  %v3196 = vunpack.c.l.b16 %v3160
  %v3197 = vunpack.c.h.b16 %v3160
  %v3198 = vunpack.c.l.b16 %v3161
  %v3199 = vunpack.c.h.b16 %v3161
  %v3200 = vunpack.c.l.b16 %v3162
  %v3201 = vunpack.c.h.b16 %v3162
  %v3202 = vunpack.c.l.b16 %v3163
  %v3203 = vunpack.c.h.b16 %v3163
  %v3204 = vunpack.c.l.b16 %v3164
  %v3205 = vunpack.c.h.b16 %v3164
  %v3206 = vunpack.c.l.b16 %v3165
  %v3207 = vunpack.c.h.b16 %v3165
  %v3208 = vunpack.c.l.b16 %v3166
  %v3209 = vunpack.c.h.b16 %v3166
  %v3210 = vunpack.c.l.b16 %v3167
  %v3211 = vunpack.c.h.b16 %v3167
  %v3212 = vunpack.c.l.b16 %v3168
  %v3213 = vunpack.c.h.b16 %v3168
  %v3214 = vunpack.c.l.b16 %v3169
  %v3215 = vunpack.c.h.b16 %v3169
  %v3216 = vunpack.c.l.b16 %v3170
  %v3217 = vunpack.c.h.b16 %v3170
  %v3218 = vunpack.c.l.b16 %v3171
  %v3219 = vunpack.c.h.b16 %v3171
  %v3220 = vpack.c.b16 %v3190, %v3188
  %v3221 = vpack.c.b16 %v3191, %v3189
  %v3222 = vpack.c.b16 %v3194, %v3192
  %v3223 = vpack.c.b16 %v3195, %v3193
  %v3224 = vpack.c.b16 %v3198, %v3196
  %v3225 = vpack.c.b16 %v3199, %v3197
  %v3226 = vpack.c.b16 %v3202, %v3200
  %v3227 = vpack.c.b16 %v3203, %v3201
  %v3228 = vpack.c.b16 %v3206, %v3204
  %v3229 = vpack.c.b16 %v3207, %v3205
  %v3230 = vpack.c.b16 %v3210, %v3208
  %v3231 = vpack.c.b16 %v3211, %v3209
  %v3232 = vpack.c.b16 %v3214, %v3212
  %v3233 = vpack.c.b16 %v3215, %v3213
  %v3234 = vpack.c.b16 %v3218, %v3216
  %v3235 = vpack.c.b16 %v3219, %v3217
  %3252 = vmatprep.subr.bf16.mxu0 %v3235
  %3253 = vmatpush1.bf16.msra.mxu0 %v3234
  %3254 = vmatprep.subr.bf16.mxu0 %v3233
  %3255 = vmatpush1.bf16.msra.mxu0 %v3232
  %3256 = vmatprep.subr.bf16.mxu0 %v3231
  %3257 = vmatpush1.bf16.msra.mxu0 %v3230
  %3258 = vmatprep.subr.bf16.mxu0 %v3229
  %3259 = vmatpush1.bf16.msra.mxu0 %v3228
  %3260 = vmatprep.subr.bf16.mxu0 %v3227
  %3261 = vmatpush1.bf16.msra.mxu0 %v3226
  %3262 = vmatprep.subr.bf16.mxu0 %v3225
  %3263 = vmatpush1.bf16.msra.mxu0 %v3224
  %3264 = vmatprep.subr.bf16.mxu0 %v3223
  %3265 = vmatpush1.bf16.msra.mxu0 %v3222
  %3266 = vmatprep.subr.bf16.mxu0 %v3221
  %3267 = vmatpush1.bf16.msra.mxu0 %v3220
  %3268 = vmatprep.subr.bf16.mxu0 0
  %3269 = vmatpush2.bf16.msra.mxu0 0
  %3270 = vmatprep.subr.bf16.mxu0 0
  %3271 = vmatpush2.bf16.msra.mxu0 0
  %3272 = vmatprep.subr.bf16.mxu0 0
  %3273 = vmatpush2.bf16.msra.mxu0 0
  %3274 = vmatprep.subr.bf16.mxu0 0
  %3275 = vmatpush2.bf16.msra.mxu0 0
  %3276 = vmatprep.subr.bf16.mxu0 0
  %3277 = vmatpush2.bf16.msra.mxu0 0
  %3278 = vmatprep.subr.bf16.mxu0 0
  %3279 = vmatpush2.bf16.msra.mxu0 0
  %3280 = vmatprep.subr.bf16.mxu0 0
  %3281 = vmatpush2.bf16.msra.mxu0 0
  %3282 = vmatprep.subr.bf16.mxu0 0
  %3283 = vmatpush2.bf16.msra.mxu0 0
  %3284 = vmatprep.mubr.bf16.mxu0 0
  %3285 = vmatmul.mubr.bf16.gmra.mxu0 %v3154
  %v3286 = vpop.f32.mrf.mxu0
  %v3287 = vadd.f32 0.0, %v3286
  %v3288 = vpop.f32.mrf.mxu0
  %v3289 = vadd.f32 0.0, %v3288
  %v3290 = vpop.f32.mrf.mxu0
  %v3291 = vadd.f32 0.0, %v3290
  %v3292 = vpop.f32.mrf.mxu0
  %v3293 = vadd.f32 0.0, %v3292
  %3294 = vdwg.mxu0
  %v3295 = vadd.f32 %v3150, %v3287
  %v3296 = vadd.f32 %v3151, %v3289
  %v3297 = vadd.f32 %v3152, %v3291
  %v3298 = vadd.f32 %v3153, %v3293
  %v3299 = vpack.c.bf16 %v1271, %v1268
  %s3300 = scalar_lea.vmem %s10, 1792
  %v3301 = vld [vmem:[%s3300] sm:$0xff]
  %v3302 = vld [vmem:[%s3300 + $0x8] sm:$0xff]
  %v3303 = vld [vmem:[%s3300 + $0x10] sm:$0xff]
  %v3304 = vld [vmem:[%s3300 + $0x18] sm:$0xff]
  %v3305 = vld [vmem:[%s3300 + $0x20] sm:$0xff]
  %v3306 = vld [vmem:[%s3300 + $0x28] sm:$0xff]
  %v3307 = vld [vmem:[%s3300 + $0x30] sm:$0xff]
  %v3308 = vld [vmem:[%s3300 + $0x38] sm:$0xff]
  %v3309 = vld [vmem:[%s3300 + $0x40] sm:$0xff]
  %v3310 = vld [vmem:[%s3300 + $0x48] sm:$0xff]
  %v3311 = vld [vmem:[%s3300 + $0x50] sm:$0xff]
  %v3312 = vld [vmem:[%s3300 + $0x58] sm:$0xff]
  %v3313 = vld [vmem:[%s3300 + $0x60] sm:$0xff]
  %v3314 = vld [vmem:[%s3300 + $0x68] sm:$0xff]
  %v3315 = vld [vmem:[%s3300 + $0x70] sm:$0xff]
  %v3316 = vld [vmem:[%s3300 + $0x78] sm:$0xff]
  %v3333 = vunpack.c.l.b16 %v3301
  %v3334 = vunpack.c.h.b16 %v3301
  %v3335 = vunpack.c.l.b16 %v3302
  %v3336 = vunpack.c.h.b16 %v3302
  %v3337 = vunpack.c.l.b16 %v3303
  %v3338 = vunpack.c.h.b16 %v3303
  %v3339 = vunpack.c.l.b16 %v3304
  %v3340 = vunpack.c.h.b16 %v3304
  %v3341 = vunpack.c.l.b16 %v3305
  %v3342 = vunpack.c.h.b16 %v3305
  %v3343 = vunpack.c.l.b16 %v3306
  %v3344 = vunpack.c.h.b16 %v3306
  %v3345 = vunpack.c.l.b16 %v3307
  %v3346 = vunpack.c.h.b16 %v3307
  %v3347 = vunpack.c.l.b16 %v3308
  %v3348 = vunpack.c.h.b16 %v3308
  %v3349 = vunpack.c.l.b16 %v3309
  %v3350 = vunpack.c.h.b16 %v3309
  %v3351 = vunpack.c.l.b16 %v3310
  %v3352 = vunpack.c.h.b16 %v3310
  %v3353 = vunpack.c.l.b16 %v3311
  %v3354 = vunpack.c.h.b16 %v3311
  %v3355 = vunpack.c.l.b16 %v3312
  %v3356 = vunpack.c.h.b16 %v3312
  %v3357 = vunpack.c.l.b16 %v3313
  %v3358 = vunpack.c.h.b16 %v3313
  %v3359 = vunpack.c.l.b16 %v3314
  %v3360 = vunpack.c.h.b16 %v3314
  %v3361 = vunpack.c.l.b16 %v3315
  %v3362 = vunpack.c.h.b16 %v3315
  %v3363 = vunpack.c.l.b16 %v3316
  %v3364 = vunpack.c.h.b16 %v3316
  %v3365 = vpack.c.b16 %v3335, %v3333
  %v3366 = vpack.c.b16 %v3336, %v3334
  %v3367 = vpack.c.b16 %v3339, %v3337
  %v3368 = vpack.c.b16 %v3340, %v3338
  %v3369 = vpack.c.b16 %v3343, %v3341
  %v3370 = vpack.c.b16 %v3344, %v3342
  %v3371 = vpack.c.b16 %v3347, %v3345
  %v3372 = vpack.c.b16 %v3348, %v3346
  %v3373 = vpack.c.b16 %v3351, %v3349
  %v3374 = vpack.c.b16 %v3352, %v3350
  %v3375 = vpack.c.b16 %v3355, %v3353
  %v3376 = vpack.c.b16 %v3356, %v3354
  %v3377 = vpack.c.b16 %v3359, %v3357
  %v3378 = vpack.c.b16 %v3360, %v3358
  %v3379 = vpack.c.b16 %v3363, %v3361
  %v3380 = vpack.c.b16 %v3364, %v3362
  %3397 = vmatprep.subr.bf16.mxu0 %v3380
  %3398 = vmatpush1.bf16.msra.mxu0 %v3379
  %3399 = vmatprep.subr.bf16.mxu0 %v3378
  %3400 = vmatpush1.bf16.msra.mxu0 %v3377
  %3401 = vmatprep.subr.bf16.mxu0 %v3376
  %3402 = vmatpush1.bf16.msra.mxu0 %v3375
  %3403 = vmatprep.subr.bf16.mxu0 %v3374
  %3404 = vmatpush1.bf16.msra.mxu0 %v3373
  %3405 = vmatprep.subr.bf16.mxu0 %v3372
  %3406 = vmatpush1.bf16.msra.mxu0 %v3371
  %3407 = vmatprep.subr.bf16.mxu0 %v3370
  %3408 = vmatpush1.bf16.msra.mxu0 %v3369
  %3409 = vmatprep.subr.bf16.mxu0 %v3368
  %3410 = vmatpush1.bf16.msra.mxu0 %v3367
  %3411 = vmatprep.subr.bf16.mxu0 %v3366
  %3412 = vmatpush1.bf16.msra.mxu0 %v3365
  %3413 = vmatprep.subr.bf16.mxu0 0
  %3414 = vmatpush2.bf16.msra.mxu0 0
  %3415 = vmatprep.subr.bf16.mxu0 0
  %3416 = vmatpush2.bf16.msra.mxu0 0
  %3417 = vmatprep.subr.bf16.mxu0 0
  %3418 = vmatpush2.bf16.msra.mxu0 0
  %3419 = vmatprep.subr.bf16.mxu0 0
  %3420 = vmatpush2.bf16.msra.mxu0 0
  %3421 = vmatprep.subr.bf16.mxu0 0
  %3422 = vmatpush2.bf16.msra.mxu0 0
  %3423 = vmatprep.subr.bf16.mxu0 0
  %3424 = vmatpush2.bf16.msra.mxu0 0
  %3425 = vmatprep.subr.bf16.mxu0 0
  %3426 = vmatpush2.bf16.msra.mxu0 0
  %3427 = vmatprep.subr.bf16.mxu0 0
  %3428 = vmatpush2.bf16.msra.mxu0 0
  %3429 = vmatprep.mubr.bf16.mxu0 0
  %3430 = vmatmul.mubr.bf16.gmra.mxu0 %v3299
  %v3431 = vpop.f32.mrf.mxu0
  %v3432 = vadd.f32 0.0, %v3431
  %v3433 = vpop.f32.mrf.mxu0
  %v3434 = vadd.f32 0.0, %v3433
  %v3435 = vpop.f32.mrf.mxu0
  %v3436 = vadd.f32 0.0, %v3435
  %v3437 = vpop.f32.mrf.mxu0
  %v3438 = vadd.f32 0.0, %v3437
  %3439 = vdwg.mxu0
  %v3440 = vadd.f32 %v3295, %v3432
  %v3441 = vadd.f32 %v3296, %v3434
  %v3442 = vadd.f32 %v3297, %v3436
  %v3443 = vadd.f32 %v3298, %v3438
  %v3444 = vpack.c.bf16 %v1277, %v1274
  %s3445 = scalar_lea.vmem %s10, 1920
  %v3446 = vld [vmem:[%s3445] sm:$0xff]
  %v3447 = vld [vmem:[%s3445 + $0x8] sm:$0xff]
  %v3448 = vld [vmem:[%s3445 + $0x10] sm:$0xff]
  %v3449 = vld [vmem:[%s3445 + $0x18] sm:$0xff]
  %v3450 = vld [vmem:[%s3445 + $0x20] sm:$0xff]
  %v3451 = vld [vmem:[%s3445 + $0x28] sm:$0xff]
  %v3452 = vld [vmem:[%s3445 + $0x30] sm:$0xff]
  %v3453 = vld [vmem:[%s3445 + $0x38] sm:$0xff]
  %v3454 = vld [vmem:[%s3445 + $0x40] sm:$0xff]
  %v3455 = vld [vmem:[%s3445 + $0x48] sm:$0xff]
  %v3456 = vld [vmem:[%s3445 + $0x50] sm:$0xff]
  %v3457 = vld [vmem:[%s3445 + $0x58] sm:$0xff]
  %v3458 = vld [vmem:[%s3445 + $0x60] sm:$0xff]
  %v3459 = vld [vmem:[%s3445 + $0x68] sm:$0xff]
  %v3460 = vld [vmem:[%s3445 + $0x70] sm:$0xff]
  %v3461 = vld [vmem:[%s3445 + $0x78] sm:$0xff]
  %v3478 = vunpack.c.l.b16 %v3446
  %v3479 = vunpack.c.h.b16 %v3446
  %v3480 = vunpack.c.l.b16 %v3447
  %v3481 = vunpack.c.h.b16 %v3447
  %v3482 = vunpack.c.l.b16 %v3448
  %v3483 = vunpack.c.h.b16 %v3448
  %v3484 = vunpack.c.l.b16 %v3449
  %v3485 = vunpack.c.h.b16 %v3449
  %v3486 = vunpack.c.l.b16 %v3450
  %v3487 = vunpack.c.h.b16 %v3450
  %v3488 = vunpack.c.l.b16 %v3451
  %v3489 = vunpack.c.h.b16 %v3451
  %v3490 = vunpack.c.l.b16 %v3452
  %v3491 = vunpack.c.h.b16 %v3452
  %v3492 = vunpack.c.l.b16 %v3453
  %v3493 = vunpack.c.h.b16 %v3453
  %v3494 = vunpack.c.l.b16 %v3454
  %v3495 = vunpack.c.h.b16 %v3454
  %v3496 = vunpack.c.l.b16 %v3455
  %v3497 = vunpack.c.h.b16 %v3455
  %v3498 = vunpack.c.l.b16 %v3456
  %v3499 = vunpack.c.h.b16 %v3456
  %v3500 = vunpack.c.l.b16 %v3457
  %v3501 = vunpack.c.h.b16 %v3457
  %v3502 = vunpack.c.l.b16 %v3458
  %v3503 = vunpack.c.h.b16 %v3458
  %v3504 = vunpack.c.l.b16 %v3459
  %v3505 = vunpack.c.h.b16 %v3459
  %v3506 = vunpack.c.l.b16 %v3460
  %v3507 = vunpack.c.h.b16 %v3460
  %v3508 = vunpack.c.l.b16 %v3461
  %v3509 = vunpack.c.h.b16 %v3461
  %v3510 = vpack.c.b16 %v3480, %v3478
  %v3511 = vpack.c.b16 %v3481, %v3479
  %v3512 = vpack.c.b16 %v3484, %v3482
  %v3513 = vpack.c.b16 %v3485, %v3483
  %v3514 = vpack.c.b16 %v3488, %v3486
  %v3515 = vpack.c.b16 %v3489, %v3487
  %v3516 = vpack.c.b16 %v3492, %v3490
  %v3517 = vpack.c.b16 %v3493, %v3491
  %v3518 = vpack.c.b16 %v3496, %v3494
  %v3519 = vpack.c.b16 %v3497, %v3495
  %v3520 = vpack.c.b16 %v3500, %v3498
  %v3521 = vpack.c.b16 %v3501, %v3499
  %v3522 = vpack.c.b16 %v3504, %v3502
  %v3523 = vpack.c.b16 %v3505, %v3503
  %v3524 = vpack.c.b16 %v3508, %v3506
  %v3525 = vpack.c.b16 %v3509, %v3507
  %3542 = vmatprep.subr.bf16.mxu0 %v3525
  %3543 = vmatpush1.bf16.msra.mxu0 %v3524
  %3544 = vmatprep.subr.bf16.mxu0 %v3523
  %3545 = vmatpush1.bf16.msra.mxu0 %v3522
  %3546 = vmatprep.subr.bf16.mxu0 %v3521
  %3547 = vmatpush1.bf16.msra.mxu0 %v3520
  %3548 = vmatprep.subr.bf16.mxu0 %v3519
  %3549 = vmatpush1.bf16.msra.mxu0 %v3518
  %3550 = vmatprep.subr.bf16.mxu0 %v3517
  %3551 = vmatpush1.bf16.msra.mxu0 %v3516
  %3552 = vmatprep.subr.bf16.mxu0 %v3515
  %3553 = vmatpush1.bf16.msra.mxu0 %v3514
  %3554 = vmatprep.subr.bf16.mxu0 %v3513
  %3555 = vmatpush1.bf16.msra.mxu0 %v3512
  %3556 = vmatprep.subr.bf16.mxu0 %v3511
  %3557 = vmatpush1.bf16.msra.mxu0 %v3510
  %3558 = vmatprep.subr.bf16.mxu0 0
  %3559 = vmatpush2.bf16.msra.mxu0 0
  %3560 = vmatprep.subr.bf16.mxu0 0
  %3561 = vmatpush2.bf16.msra.mxu0 0
  %3562 = vmatprep.subr.bf16.mxu0 0
  %3563 = vmatpush2.bf16.msra.mxu0 0
  %3564 = vmatprep.subr.bf16.mxu0 0
  %3565 = vmatpush2.bf16.msra.mxu0 0
  %3566 = vmatprep.subr.bf16.mxu0 0
  %3567 = vmatpush2.bf16.msra.mxu0 0
  %3568 = vmatprep.subr.bf16.mxu0 0
  %3569 = vmatpush2.bf16.msra.mxu0 0
  %3570 = vmatprep.subr.bf16.mxu0 0
  %3571 = vmatpush2.bf16.msra.mxu0 0
  %3572 = vmatprep.subr.bf16.mxu0 0
  %3573 = vmatpush2.bf16.msra.mxu0 0
  %3574 = vmatprep.mubr.bf16.mxu0 0
  %3575 = vmatmul.mubr.bf16.gmra.mxu0 %v3444
  %v3576 = vpop.f32.mrf.mxu0
  %v3577 = vadd.f32 0.0, %v3576
  %v3578 = vpop.f32.mrf.mxu0
  %v3579 = vadd.f32 0.0, %v3578
  %v3580 = vpop.f32.mrf.mxu0
  %v3581 = vadd.f32 0.0, %v3580
  %v3582 = vpop.f32.mrf.mxu0
  %v3583 = vadd.f32 0.0, %v3582
  %3584 = vdwg.mxu0
  %v3585 = vadd.f32 %v3440, %v3577
  %v3586 = vadd.f32 %v3441, %v3579
  %v3587 = vadd.f32 %v3442, %v3581
  %v3588 = vadd.f32 %v3443, %v3583
  %v3589 = vld [vmem:[%s11] sm:$0x3]
  %v3591 = vlaneseq
  %v3592 = vshrl.u32 %v3591, 7
  %v3593 = vsub.s32 0, %v3592
  %v3594 = vrot.slane %v3589, %v3593
  %v3595 = vlaneseq
  %v3596 = vshrl.u32 %v3595, 7
  %v3597 = vsub.s32 1, %v3596
  %v3598 = vrot.slane %v3589, %v3597
  %v3601 = vadd.f32 %v3585, %v3594
  %v3602 = vadd.f32 %v3586, %v3598
  %v3603 = vadd.f32 %v3587, %v3594
  %v3604 = vadd.f32 %v3588, %v3598
  %v3605 = vld [vmem:[%s1] sm:$0xf]
  %v3606 = vld [vmem:[%s1 + $0x4] sm:$0xf]
  %v3607 = vld [vmem:[%s1 + $0x8] sm:$0xf]
  %v3608 = vld [vmem:[%s1 + $0xc] sm:$0xf]
  %v3609 = vld [vmem:[%s1 + $0x10] sm:$0xf]
  %v3610 = vld [vmem:[%s1 + $0x14] sm:$0xf]
  %v3611 = vld [vmem:[%s1 + $0x18] sm:$0xf]
  %v3612 = vld [vmem:[%s1 + $0x1c] sm:$0xf]
  %v3613 = vld [vmem:[%s1 + $0x20] sm:$0xf]
  %v3614 = vld [vmem:[%s1 + $0x24] sm:$0xf]
  %v3615 = vld [vmem:[%s1 + $0x28] sm:$0xf]
  %v3616 = vld [vmem:[%s1 + $0x2c] sm:$0xf]
  %v3617 = vld [vmem:[%s1 + $0x30] sm:$0xf]
  %v3618 = vld [vmem:[%s1 + $0x34] sm:$0xf]
  %v3619 = vld [vmem:[%s1 + $0x38] sm:$0xf]
  %v3620 = vld [vmem:[%s1 + $0x3c] sm:$0xf]
  %v3621 = vld [vmem:[%s1 + $0x40] sm:$0xf]
  %v3622 = vld [vmem:[%s1 + $0x44] sm:$0xf]
  %v3623 = vld [vmem:[%s1 + $0x48] sm:$0xf]
  %v3624 = vld [vmem:[%s1 + $0x4c] sm:$0xf]
  %v3625 = vld [vmem:[%s1 + $0x50] sm:$0xf]
  %v3626 = vld [vmem:[%s1 + $0x54] sm:$0xf]
  %v3627 = vld [vmem:[%s1 + $0x58] sm:$0xf]
  %v3628 = vld [vmem:[%s1 + $0x5c] sm:$0xf]
  %v3629 = vld [vmem:[%s1 + $0x60] sm:$0xf]
  %v3630 = vld [vmem:[%s1 + $0x64] sm:$0xf]
  %v3631 = vld [vmem:[%s1 + $0x68] sm:$0xf]
  %v3632 = vld [vmem:[%s1 + $0x6c] sm:$0xf]
  %v3633 = vld [vmem:[%s1 + $0x70] sm:$0xf]
  %v3634 = vld [vmem:[%s1 + $0x74] sm:$0xf]
  %v3635 = vld [vmem:[%s1 + $0x78] sm:$0xf]
  %v3636 = vld [vmem:[%s1 + $0x7c] sm:$0xf]
  %v3637 = vunpack.c.l.bf16 %v3605
  %v3638 = vunpack.c.l.bf16 %v3606
  %v3639 = vunpack.c.l.bf16 %v3607
  %v3640 = vunpack.c.l.bf16 %v3608
  %v3641 = vunpack.c.l.bf16 %v3609
  %v3642 = vunpack.c.l.bf16 %v3610
  %v3643 = vunpack.c.l.bf16 %v3611
  %v3644 = vunpack.c.l.bf16 %v3612
  %v3645 = vunpack.c.l.bf16 %v3613
  %v3646 = vunpack.c.l.bf16 %v3614
  %v3647 = vunpack.c.l.bf16 %v3615
  %v3648 = vunpack.c.l.bf16 %v3616
  %v3649 = vunpack.c.l.bf16 %v3617
  %v3650 = vunpack.c.l.bf16 %v3618
  %v3651 = vunpack.c.l.bf16 %v3619
  %v3652 = vunpack.c.l.bf16 %v3620
  %v3653 = vunpack.c.l.bf16 %v3621
  %v3654 = vunpack.c.l.bf16 %v3622
  %v3655 = vunpack.c.l.bf16 %v3623
  %v3656 = vunpack.c.l.bf16 %v3624
  %v3657 = vunpack.c.l.bf16 %v3625
  %v3658 = vunpack.c.l.bf16 %v3626
  %v3659 = vunpack.c.l.bf16 %v3627
  %v3660 = vunpack.c.l.bf16 %v3628
  %v3661 = vunpack.c.l.bf16 %v3629
  %v3662 = vunpack.c.l.bf16 %v3630
  %v3663 = vunpack.c.l.bf16 %v3631
  %v3664 = vunpack.c.l.bf16 %v3632
  %v3665 = vunpack.c.l.bf16 %v3633
  %v3666 = vunpack.c.l.bf16 %v3634
  %v3667 = vunpack.c.l.bf16 %v3635
  %v3668 = vunpack.c.l.bf16 %v3636
  %v3669 = vadd.f32 %v3637, %v1184
  %v3670 = vadd.f32 %v3638, %v1187
  %v3671 = vadd.f32 %v3639, %v1190
  %v3672 = vadd.f32 %v3640, %v1193
  %v3673 = vadd.f32 %v3641, %v1196
  %v3674 = vadd.f32 %v3642, %v1199
  %v3675 = vadd.f32 %v3643, %v1202
  %v3676 = vadd.f32 %v3644, %v1205
  %v3677 = vadd.f32 %v3645, %v1208
  %v3678 = vadd.f32 %v3646, %v1211
  %v3679 = vadd.f32 %v3647, %v1214
  %v3680 = vadd.f32 %v3648, %v1217
  %v3681 = vadd.f32 %v3649, %v1220
  %v3682 = vadd.f32 %v3650, %v1223
  %v3683 = vadd.f32 %v3651, %v1226
  %v3684 = vadd.f32 %v3652, %v1229
  %v3685 = vadd.f32 %v3653, %v1232
  %v3686 = vadd.f32 %v3654, %v1235
  %v3687 = vadd.f32 %v3655, %v1238
  %v3688 = vadd.f32 %v3656, %v1241
  %v3689 = vadd.f32 %v3657, %v1244
  %v3690 = vadd.f32 %v3658, %v1247
  %v3691 = vadd.f32 %v3659, %v1250
  %v3692 = vadd.f32 %v3660, %v1253
  %v3693 = vadd.f32 %v3661, %v1256
  %v3694 = vadd.f32 %v3662, %v1259
  %v3695 = vadd.f32 %v3663, %v1262
  %v3696 = vadd.f32 %v3664, %v1265
  %v3697 = vadd.f32 %v3665, %v1268
  %v3698 = vadd.f32 %v3666, %v1271
  %v3699 = vadd.f32 %v3667, %v1274
  %v3700 = vadd.f32 %v3668, %v1277
  %v3701 = vpack.c.bf16 %v3670, %v3669
  %v3702 = vpack.c.bf16 %v3672, %v3671
  %v3703 = vpack.c.bf16 %v3674, %v3673
  %v3704 = vpack.c.bf16 %v3676, %v3675
  %v3705 = vpack.c.bf16 %v3678, %v3677
  %v3706 = vpack.c.bf16 %v3680, %v3679
  %v3707 = vpack.c.bf16 %v3682, %v3681
  %v3708 = vpack.c.bf16 %v3684, %v3683
  %v3709 = vpack.c.bf16 %v3686, %v3685
  %v3710 = vpack.c.bf16 %v3688, %v3687
  %v3711 = vpack.c.bf16 %v3690, %v3689
  %v3712 = vpack.c.bf16 %v3692, %v3691
  %v3713 = vpack.c.bf16 %v3694, %v3693
  %v3714 = vpack.c.bf16 %v3696, %v3695
  %v3715 = vpack.c.bf16 %v3698, %v3697
  %v3716 = vpack.c.bf16 %v3700, %v3699
  %v3717 = vld [vmem:[%s6] sm:$0xff]
  %v3718 = vld [vmem:[%s6 + $0x8] sm:$0xff]
  %v3719 = vld [vmem:[%s6 + $0x10] sm:$0xff]
  %v3720 = vld [vmem:[%s6 + $0x18] sm:$0xff]
  %v3721 = vld [vmem:[%s6 + $0x20] sm:$0xff]
  %v3722 = vld [vmem:[%s6 + $0x28] sm:$0xff]
  %v3723 = vld [vmem:[%s6 + $0x30] sm:$0xff]
  %v3724 = vld [vmem:[%s6 + $0x38] sm:$0xff]
  %v3725 = vld [vmem:[%s6 + $0x40] sm:$0xff]
  %v3726 = vld [vmem:[%s6 + $0x48] sm:$0xff]
  %v3727 = vld [vmem:[%s6 + $0x50] sm:$0xff]
  %v3728 = vld [vmem:[%s6 + $0x58] sm:$0xff]
  %v3729 = vld [vmem:[%s6 + $0x60] sm:$0xff]
  %v3730 = vld [vmem:[%s6 + $0x68] sm:$0xff]
  %v3731 = vld [vmem:[%s6 + $0x70] sm:$0xff]
  %v3732 = vld [vmem:[%s6 + $0x78] sm:$0xff]
  %v3733 = vld [vmem:[%s7] sm:$0x3]
  %v3735 = vlaneseq
  %v3736 = vshrl.u32 %v3735, 7
  %v3737 = vsub.s32 0, %v3736
  %v3738 = vrot.slane %v3733, %v3737
  %v3739 = vlaneseq
  %v3740 = vshrl.u32 %v3739, 7
  %v3741 = vsub.s32 1, %v3740
  %v3742 = vrot.slane %v3733, %v3741
  %v3761 = vunpack.c.l.b16 %v3717
  %v3762 = vunpack.c.h.b16 %v3717
  %v3763 = vunpack.c.l.b16 %v3718
  %v3764 = vunpack.c.h.b16 %v3718
  %v3765 = vunpack.c.l.b16 %v3719
  %v3766 = vunpack.c.h.b16 %v3719
  %v3767 = vunpack.c.l.b16 %v3720
  %v3768 = vunpack.c.h.b16 %v3720
  %v3769 = vunpack.c.l.b16 %v3721
  %v3770 = vunpack.c.h.b16 %v3721
  %v3771 = vunpack.c.l.b16 %v3722
  %v3772 = vunpack.c.h.b16 %v3722
  %v3773 = vunpack.c.l.b16 %v3723
  %v3774 = vunpack.c.h.b16 %v3723
  %v3775 = vunpack.c.l.b16 %v3724
  %v3776 = vunpack.c.h.b16 %v3724
  %v3777 = vunpack.c.l.b16 %v3725
  %v3778 = vunpack.c.h.b16 %v3725
  %v3779 = vunpack.c.l.b16 %v3726
  %v3780 = vunpack.c.h.b16 %v3726
  %v3781 = vunpack.c.l.b16 %v3727
  %v3782 = vunpack.c.h.b16 %v3727
  %v3783 = vunpack.c.l.b16 %v3728
  %v3784 = vunpack.c.h.b16 %v3728
  %v3785 = vunpack.c.l.b16 %v3729
  %v3786 = vunpack.c.h.b16 %v3729
  %v3787 = vunpack.c.l.b16 %v3730
  %v3788 = vunpack.c.h.b16 %v3730
  %v3789 = vunpack.c.l.b16 %v3731
  %v3790 = vunpack.c.h.b16 %v3731
  %v3791 = vunpack.c.l.b16 %v3732
  %v3792 = vunpack.c.h.b16 %v3732
  %v3793 = vpack.c.b16 %v3763, %v3761
  %v3794 = vpack.c.b16 %v3764, %v3762
  %v3795 = vpack.c.b16 %v3767, %v3765
  %v3796 = vpack.c.b16 %v3768, %v3766
  %v3797 = vpack.c.b16 %v3771, %v3769
  %v3798 = vpack.c.b16 %v3772, %v3770
  %v3799 = vpack.c.b16 %v3775, %v3773
  %v3800 = vpack.c.b16 %v3776, %v3774
  %v3801 = vpack.c.b16 %v3779, %v3777
  %v3802 = vpack.c.b16 %v3780, %v3778
  %v3803 = vpack.c.b16 %v3783, %v3781
  %v3804 = vpack.c.b16 %v3784, %v3782
  %v3805 = vpack.c.b16 %v3787, %v3785
  %v3806 = vpack.c.b16 %v3788, %v3786
  %v3807 = vpack.c.b16 %v3791, %v3789
  %v3808 = vpack.c.b16 %v3792, %v3790
  %3825 = vmatprep.subr.bf16.mxu0 %v3808
  %3826 = vmatpush1.bf16.msra.mxu0 %v3807
  %3827 = vmatprep.subr.bf16.mxu0 %v3806
  %3828 = vmatpush1.bf16.msra.mxu0 %v3805
  %3829 = vmatprep.subr.bf16.mxu0 %v3804
  %3830 = vmatpush1.bf16.msra.mxu0 %v3803
  %3831 = vmatprep.subr.bf16.mxu0 %v3802
  %3832 = vmatpush1.bf16.msra.mxu0 %v3801
  %3833 = vmatprep.subr.bf16.mxu0 %v3800
  %3834 = vmatpush1.bf16.msra.mxu0 %v3799
  %3835 = vmatprep.subr.bf16.mxu0 %v3798
  %3836 = vmatpush1.bf16.msra.mxu0 %v3797
  %3837 = vmatprep.subr.bf16.mxu0 %v3796
  %3838 = vmatpush1.bf16.msra.mxu0 %v3795
  %3839 = vmatprep.subr.bf16.mxu0 %v3794
  %3840 = vmatpush1.bf16.msra.mxu0 %v3793
  %3841 = vmatprep.subr.bf16.mxu0 0
  %3842 = vmatpush2.bf16.msra.mxu0 0
  %3843 = vmatprep.subr.bf16.mxu0 0
  %3844 = vmatpush2.bf16.msra.mxu0 0
  %3845 = vmatprep.subr.bf16.mxu0 0
  %3846 = vmatpush2.bf16.msra.mxu0 0
  %3847 = vmatprep.subr.bf16.mxu0 0
  %3848 = vmatpush2.bf16.msra.mxu0 0
  %3849 = vmatprep.subr.bf16.mxu0 0
  %3850 = vmatpush2.bf16.msra.mxu0 0
  %3851 = vmatprep.subr.bf16.mxu0 0
  %3852 = vmatpush2.bf16.msra.mxu0 0
  %3853 = vmatprep.subr.bf16.mxu0 0
  %3854 = vmatpush2.bf16.msra.mxu0 0
  %3855 = vmatprep.subr.bf16.mxu0 0
  %3856 = vmatpush2.bf16.msra.mxu0 0
  %3857 = vmatprep.mubr.bf16.mxu0 0
  %3858 = vmatmul.mubr.bf16.gmra.mxu0 %v3701
  %v3859 = vpop.f32.mrf.mxu0
  %v3860 = vadd.f32 %v3738, %v3859
  %v3861 = vpop.f32.mrf.mxu0
  %v3862 = vadd.f32 %v3742, %v3861
  %v3863 = vpop.f32.mrf.mxu0
  %v3864 = vadd.f32 %v3738, %v3863
  %v3865 = vpop.f32.mrf.mxu0
  %v3866 = vadd.f32 %v3742, %v3865
  %3867 = vmatprep.mubr.bf16.mxu0 0
  %3868 = vmatmul.mubr.bf16.gmra.mxu0 %v3702
  %v3869 = vpop.f32.mrf.mxu0
  %v3870 = vadd.f32 %v3738, %v3869
  %v3871 = vpop.f32.mrf.mxu0
  %v3872 = vadd.f32 %v3742, %v3871
  %v3873 = vpop.f32.mrf.mxu0
  %v3874 = vadd.f32 %v3738, %v3873
  %v3875 = vpop.f32.mrf.mxu0
  %v3876 = vadd.f32 %v3742, %v3875
  %3877 = vmatprep.mubr.bf16.mxu0 0
  %3878 = vmatmul.mubr.bf16.gmra.mxu0 %v3703
  %v3879 = vpop.f32.mrf.mxu0
  %v3880 = vadd.f32 %v3738, %v3879
  %v3881 = vpop.f32.mrf.mxu0
  %v3882 = vadd.f32 %v3742, %v3881
  %v3883 = vpop.f32.mrf.mxu0
  %v3884 = vadd.f32 %v3738, %v3883
  %v3885 = vpop.f32.mrf.mxu0
  %v3886 = vadd.f32 %v3742, %v3885
  %3887 = vmatprep.mubr.bf16.mxu0 0
  %3888 = vmatmul.mubr.bf16.gmra.mxu0 %v3704
  %v3889 = vpop.f32.mrf.mxu0
  %v3890 = vadd.f32 %v3738, %v3889
  %v3891 = vpop.f32.mrf.mxu0
  %v3892 = vadd.f32 %v3742, %v3891
  %v3893 = vpop.f32.mrf.mxu0
  %v3894 = vadd.f32 %v3738, %v3893
  %v3895 = vpop.f32.mrf.mxu0
  %v3896 = vadd.f32 %v3742, %v3895
  %3897 = vmatprep.mubr.bf16.mxu0 0
  %3898 = vmatmul.mubr.bf16.gmra.mxu0 %v3705
  %v3899 = vpop.f32.mrf.mxu0
  %v3900 = vadd.f32 %v3738, %v3899
  %v3901 = vpop.f32.mrf.mxu0
  %v3902 = vadd.f32 %v3742, %v3901
  %v3903 = vpop.f32.mrf.mxu0
  %v3904 = vadd.f32 %v3738, %v3903
  %v3905 = vpop.f32.mrf.mxu0
  %v3906 = vadd.f32 %v3742, %v3905
  %3907 = vmatprep.mubr.bf16.mxu0 0
  %3908 = vmatmul.mubr.bf16.gmra.mxu0 %v3706
  %v3909 = vpop.f32.mrf.mxu0
  %v3910 = vadd.f32 %v3738, %v3909
  %v3911 = vpop.f32.mrf.mxu0
  %v3912 = vadd.f32 %v3742, %v3911
  %v3913 = vpop.f32.mrf.mxu0
  %v3914 = vadd.f32 %v3738, %v3913
  %v3915 = vpop.f32.mrf.mxu0
  %v3916 = vadd.f32 %v3742, %v3915
  %3917 = vmatprep.mubr.bf16.mxu0 0
  %3918 = vmatmul.mubr.bf16.gmra.mxu0 %v3707
  %v3919 = vpop.f32.mrf.mxu0
  %v3920 = vadd.f32 %v3738, %v3919
  %v3921 = vpop.f32.mrf.mxu0
  %v3922 = vadd.f32 %v3742, %v3921
  %v3923 = vpop.f32.mrf.mxu0
  %v3924 = vadd.f32 %v3738, %v3923
  %v3925 = vpop.f32.mrf.mxu0
  %v3926 = vadd.f32 %v3742, %v3925
  %3927 = vmatprep.mubr.bf16.mxu0 0
  %3928 = vmatmul.mubr.bf16.gmra.mxu0 %v3708
  %v3929 = vpop.f32.mrf.mxu0
  %v3930 = vadd.f32 %v3738, %v3929
  %v3931 = vpop.f32.mrf.mxu0
  %v3932 = vadd.f32 %v3742, %v3931
  %v3933 = vpop.f32.mrf.mxu0
  %v3934 = vadd.f32 %v3738, %v3933
  %v3935 = vpop.f32.mrf.mxu0
  %v3936 = vadd.f32 %v3742, %v3935
  %3937 = vmatprep.mubr.bf16.mxu0 0
  %3938 = vmatmul.mubr.bf16.gmra.mxu0 %v3709
  %v3939 = vpop.f32.mrf.mxu0
  %v3940 = vadd.f32 %v3738, %v3939
  %v3941 = vpop.f32.mrf.mxu0
  %v3942 = vadd.f32 %v3742, %v3941
  %v3943 = vpop.f32.mrf.mxu0
  %v3944 = vadd.f32 %v3738, %v3943
  %v3945 = vpop.f32.mrf.mxu0
  %v3946 = vadd.f32 %v3742, %v3945
  %3947 = vmatprep.mubr.bf16.mxu0 0
  %3948 = vmatmul.mubr.bf16.gmra.mxu0 %v3710
  %v3949 = vpop.f32.mrf.mxu0
  %v3950 = vadd.f32 %v3738, %v3949
  %v3951 = vpop.f32.mrf.mxu0
  %v3952 = vadd.f32 %v3742, %v3951
  %v3953 = vpop.f32.mrf.mxu0
  %v3954 = vadd.f32 %v3738, %v3953
  %v3955 = vpop.f32.mrf.mxu0
  %v3956 = vadd.f32 %v3742, %v3955
  %3957 = vmatprep.mubr.bf16.mxu0 0
  %3958 = vmatmul.mubr.bf16.gmra.mxu0 %v3711
  %v3959 = vpop.f32.mrf.mxu0
  %v3960 = vadd.f32 %v3738, %v3959
  %v3961 = vpop.f32.mrf.mxu0
  %v3962 = vadd.f32 %v3742, %v3961
  %v3963 = vpop.f32.mrf.mxu0
  %v3964 = vadd.f32 %v3738, %v3963
  %v3965 = vpop.f32.mrf.mxu0
  %v3966 = vadd.f32 %v3742, %v3965
  %3967 = vmatprep.mubr.bf16.mxu0 0
  %3968 = vmatmul.mubr.bf16.gmra.mxu0 %v3712
  %v3969 = vpop.f32.mrf.mxu0
  %v3970 = vadd.f32 %v3738, %v3969
  %v3971 = vpop.f32.mrf.mxu0
  %v3972 = vadd.f32 %v3742, %v3971
  %v3973 = vpop.f32.mrf.mxu0
  %v3974 = vadd.f32 %v3738, %v3973
  %v3975 = vpop.f32.mrf.mxu0
  %v3976 = vadd.f32 %v3742, %v3975
  %3977 = vmatprep.mubr.bf16.mxu0 0
  %3978 = vmatmul.mubr.bf16.gmra.mxu0 %v3713
  %v3979 = vpop.f32.mrf.mxu0
  %v3980 = vadd.f32 %v3738, %v3979
  %v3981 = vpop.f32.mrf.mxu0
  %v3982 = vadd.f32 %v3742, %v3981
  %v3983 = vpop.f32.mrf.mxu0
  %v3984 = vadd.f32 %v3738, %v3983
  %v3985 = vpop.f32.mrf.mxu0
  %v3986 = vadd.f32 %v3742, %v3985
  %3987 = vmatprep.mubr.bf16.mxu0 0
  %3988 = vmatmul.mubr.bf16.gmra.mxu0 %v3714
  %v3989 = vpop.f32.mrf.mxu0
  %v3990 = vadd.f32 %v3738, %v3989
  %v3991 = vpop.f32.mrf.mxu0
  %v3992 = vadd.f32 %v3742, %v3991
  %v3993 = vpop.f32.mrf.mxu0
  %v3994 = vadd.f32 %v3738, %v3993
  %v3995 = vpop.f32.mrf.mxu0
  %v3996 = vadd.f32 %v3742, %v3995
  %3997 = vmatprep.mubr.bf16.mxu0 0
  %3998 = vmatmul.mubr.bf16.gmra.mxu0 %v3715
  %v3999 = vpop.f32.mrf.mxu0
  %v4000 = vadd.f32 %v3738, %v3999
  %v4001 = vpop.f32.mrf.mxu0
  %v4002 = vadd.f32 %v3742, %v4001
  %v4003 = vpop.f32.mrf.mxu0
  %v4004 = vadd.f32 %v3738, %v4003
  %v4005 = vpop.f32.mrf.mxu0
  %v4006 = vadd.f32 %v3742, %v4005
  %4007 = vmatprep.mubr.bf16.mxu0 0
  %4008 = vmatmul.mubr.bf16.gmra.mxu0 %v3716
  %v4009 = vpop.f32.mrf.mxu0
  %v4010 = vadd.f32 %v3738, %v4009
  %v4011 = vpop.f32.mrf.mxu0
  %v4012 = vadd.f32 %v3742, %v4011
  %v4013 = vpop.f32.mrf.mxu0
  %v4014 = vadd.f32 %v3738, %v4013
  %v4015 = vpop.f32.mrf.mxu0
  %v4016 = vadd.f32 %v3742, %v4015
  %4017 = vdwg.mxu0
  %v4018 = vmax.f32 %v3860, %v3870
  %v4019 = vmax.f32 %v4018, %v3880
  %v4020 = vmax.f32 %v4019, %v3890
  %v4021 = vmax.f32 %v3862, %v3872
  %v4022 = vmax.f32 %v4021, %v3882
  %v4023 = vmax.f32 %v4022, %v3892
  %v4024 = vmax.f32 %v3864, %v3874
  %v4025 = vmax.f32 %v4024, %v3884
  %v4026 = vmax.f32 %v4025, %v3894
  %v4027 = vmax.f32 %v3866, %v3876
  %v4028 = vmax.f32 %v4027, %v3886
  %v4029 = vmax.f32 %v4028, %v3896
  %v4030 = vmax.f32 %v3900, %v3910
  %v4031 = vmax.f32 %v4030, %v3920
  %v4032 = vmax.f32 %v4031, %v3930
  %v4033 = vmax.f32 %v3902, %v3912
  %v4034 = vmax.f32 %v4033, %v3922
  %v4035 = vmax.f32 %v4034, %v3932
  %v4036 = vmax.f32 %v3904, %v3914
  %v4037 = vmax.f32 %v4036, %v3924
  %v4038 = vmax.f32 %v4037, %v3934
  %v4039 = vmax.f32 %v3906, %v3916
  %v4040 = vmax.f32 %v4039, %v3926
  %v4041 = vmax.f32 %v4040, %v3936
  %v4042 = vmax.f32 %v3940, %v3950
  %v4043 = vmax.f32 %v4042, %v3960
  %v4044 = vmax.f32 %v4043, %v3970
  %v4045 = vmax.f32 %v3942, %v3952
  %v4046 = vmax.f32 %v4045, %v3962
  %v4047 = vmax.f32 %v4046, %v3972
  %v4048 = vmax.f32 %v3944, %v3954
  %v4049 = vmax.f32 %v4048, %v3964
  %v4050 = vmax.f32 %v4049, %v3974
  %v4051 = vmax.f32 %v3946, %v3956
  %v4052 = vmax.f32 %v4051, %v3966
  %v4053 = vmax.f32 %v4052, %v3976
  %v4054 = vmax.f32 %v3980, %v3990
  %v4055 = vmax.f32 %v4054, %v4000
  %v4056 = vmax.f32 %v4055, %v4010
  %v4057 = vmax.f32 %v3982, %v3992
  %v4058 = vmax.f32 %v4057, %v4002
  %v4059 = vmax.f32 %v4058, %v4012
  %v4060 = vmax.f32 %v3984, %v3994
  %v4061 = vmax.f32 %v4060, %v4004
  %v4062 = vmax.f32 %v4061, %v4014
  %v4063 = vmax.f32 %v3986, %v3996
  %v4064 = vmax.f32 %v4063, %v4006
  %v4065 = vmax.f32 %v4064, %v4016
  %v4066 = vpack.c.bf16 %v4026, %v4020
  %v4067 = vpack.c.bf16 %v4029, %v4023
  %v4068 = vld [vmem:[%s12] sm:$0xff]
  %v4069 = vld [vmem:[%s12 + $0x8] sm:$0xff]
  %v4070 = vld [vmem:[%s12 + $0x10] sm:$0xff]
  %v4071 = vld [vmem:[%s12 + $0x18] sm:$0xff]
  %v4072 = vld [vmem:[%s12 + $0x20] sm:$0xff]
  %v4073 = vld [vmem:[%s12 + $0x28] sm:$0xff]
  %v4074 = vld [vmem:[%s12 + $0x30] sm:$0xff]
  %v4075 = vld [vmem:[%s12 + $0x38] sm:$0xff]
  %v4076 = vld [vmem:[%s12 + $0x40] sm:$0xff]
  %v4077 = vld [vmem:[%s12 + $0x48] sm:$0xff]
  %v4078 = vld [vmem:[%s12 + $0x50] sm:$0xff]
  %v4079 = vld [vmem:[%s12 + $0x58] sm:$0xff]
  %v4080 = vld [vmem:[%s12 + $0x60] sm:$0xff]
  %v4081 = vld [vmem:[%s12 + $0x68] sm:$0xff]
  %v4082 = vld [vmem:[%s12 + $0x70] sm:$0xff]
  %v4083 = vld [vmem:[%s12 + $0x78] sm:$0xff]
  %v4084 = vld [vmem:[%s12 + $0x80] sm:$0xff]
  %v4085 = vld [vmem:[%s12 + $0x88] sm:$0xff]
  %v4086 = vld [vmem:[%s12 + $0x90] sm:$0xff]
  %v4087 = vld [vmem:[%s12 + $0x98] sm:$0xff]
  %v4088 = vld [vmem:[%s12 + $0xa0] sm:$0xff]
  %v4089 = vld [vmem:[%s12 + $0xa8] sm:$0xff]
  %v4090 = vld [vmem:[%s12 + $0xb0] sm:$0xff]
  %v4091 = vld [vmem:[%s12 + $0xb8] sm:$0xff]
  %v4092 = vld [vmem:[%s12 + $0xc0] sm:$0xff]
  %v4093 = vld [vmem:[%s12 + $0xc8] sm:$0xff]
  %v4094 = vld [vmem:[%s12 + $0xd0] sm:$0xff]
  %v4095 = vld [vmem:[%s12 + $0xd8] sm:$0xff]
  %v4096 = vld [vmem:[%s12 + $0xe0] sm:$0xff]
  %v4097 = vld [vmem:[%s12 + $0xe8] sm:$0xff]
  %v4098 = vld [vmem:[%s12 + $0xf0] sm:$0xff]
  %v4099 = vld [vmem:[%s12 + $0xf8] sm:$0xff]
  %v4100 = vpack.c.bf16 %v4038, %v4032
  %v4101 = vpack.c.bf16 %v4041, %v4035
  %s4102 = scalar_lea.vmem %s12, 256
  %v4103 = vld [vmem:[%s4102] sm:$0xff]
  %v4104 = vld [vmem:[%s4102 + $0x8] sm:$0xff]
  %v4105 = vld [vmem:[%s4102 + $0x10] sm:$0xff]
  %v4106 = vld [vmem:[%s4102 + $0x18] sm:$0xff]
  %v4107 = vld [vmem:[%s4102 + $0x20] sm:$0xff]
  %v4108 = vld [vmem:[%s4102 + $0x28] sm:$0xff]
  %v4109 = vld [vmem:[%s4102 + $0x30] sm:$0xff]
  %v4110 = vld [vmem:[%s4102 + $0x38] sm:$0xff]
  %v4111 = vld [vmem:[%s4102 + $0x40] sm:$0xff]
  %v4112 = vld [vmem:[%s4102 + $0x48] sm:$0xff]
  %v4113 = vld [vmem:[%s4102 + $0x50] sm:$0xff]
  %v4114 = vld [vmem:[%s4102 + $0x58] sm:$0xff]
  %v4115 = vld [vmem:[%s4102 + $0x60] sm:$0xff]
  %v4116 = vld [vmem:[%s4102 + $0x68] sm:$0xff]
  %v4117 = vld [vmem:[%s4102 + $0x70] sm:$0xff]
  %v4118 = vld [vmem:[%s4102 + $0x78] sm:$0xff]
  %v4119 = vld [vmem:[%s4102 + $0x80] sm:$0xff]
  %v4120 = vld [vmem:[%s4102 + $0x88] sm:$0xff]
  %v4121 = vld [vmem:[%s4102 + $0x90] sm:$0xff]
  %v4122 = vld [vmem:[%s4102 + $0x98] sm:$0xff]
  %v4123 = vld [vmem:[%s4102 + $0xa0] sm:$0xff]
  %v4124 = vld [vmem:[%s4102 + $0xa8] sm:$0xff]
  %v4125 = vld [vmem:[%s4102 + $0xb0] sm:$0xff]
  %v4126 = vld [vmem:[%s4102 + $0xb8] sm:$0xff]
  %v4127 = vld [vmem:[%s4102 + $0xc0] sm:$0xff]
  %v4128 = vld [vmem:[%s4102 + $0xc8] sm:$0xff]
  %v4129 = vld [vmem:[%s4102 + $0xd0] sm:$0xff]
  %v4130 = vld [vmem:[%s4102 + $0xd8] sm:$0xff]
  %v4131 = vld [vmem:[%s4102 + $0xe0] sm:$0xff]
  %v4132 = vld [vmem:[%s4102 + $0xe8] sm:$0xff]
  %v4133 = vld [vmem:[%s4102 + $0xf0] sm:$0xff]
  %v4134 = vld [vmem:[%s4102 + $0xf8] sm:$0xff]
  %v4167 = vunpack.c.l.b16 %v4103
  %v4168 = vunpack.c.h.b16 %v4103
  %v4169 = vunpack.c.l.b16 %v4104
  %v4170 = vunpack.c.h.b16 %v4104
  %v4171 = vunpack.c.l.b16 %v4105
  %v4172 = vunpack.c.h.b16 %v4105
  %v4173 = vunpack.c.l.b16 %v4106
  %v4174 = vunpack.c.h.b16 %v4106
  %v4175 = vunpack.c.l.b16 %v4107
  %v4176 = vunpack.c.h.b16 %v4107
  %v4177 = vunpack.c.l.b16 %v4108
  %v4178 = vunpack.c.h.b16 %v4108
  %v4179 = vunpack.c.l.b16 %v4109
  %v4180 = vunpack.c.h.b16 %v4109
  %v4181 = vunpack.c.l.b16 %v4110
  %v4182 = vunpack.c.h.b16 %v4110
  %v4183 = vunpack.c.l.b16 %v4111
  %v4184 = vunpack.c.h.b16 %v4111
  %v4185 = vunpack.c.l.b16 %v4112
  %v4186 = vunpack.c.h.b16 %v4112
  %v4187 = vunpack.c.l.b16 %v4113
  %v4188 = vunpack.c.h.b16 %v4113
  %v4189 = vunpack.c.l.b16 %v4114
  %v4190 = vunpack.c.h.b16 %v4114
  %v4191 = vunpack.c.l.b16 %v4115
  %v4192 = vunpack.c.h.b16 %v4115
  %v4193 = vunpack.c.l.b16 %v4116
  %v4194 = vunpack.c.h.b16 %v4116
  %v4195 = vunpack.c.l.b16 %v4117
  %v4196 = vunpack.c.h.b16 %v4117
  %v4197 = vunpack.c.l.b16 %v4118
  %v4198 = vunpack.c.h.b16 %v4118
  %v4199 = vunpack.c.l.b16 %v4119
  %v4200 = vunpack.c.h.b16 %v4119
  %v4201 = vunpack.c.l.b16 %v4120
  %v4202 = vunpack.c.h.b16 %v4120
  %v4203 = vunpack.c.l.b16 %v4121
  %v4204 = vunpack.c.h.b16 %v4121
  %v4205 = vunpack.c.l.b16 %v4122
  %v4206 = vunpack.c.h.b16 %v4122
  %v4207 = vunpack.c.l.b16 %v4123
  %v4208 = vunpack.c.h.b16 %v4123
  %v4209 = vunpack.c.l.b16 %v4124
  %v4210 = vunpack.c.h.b16 %v4124
  %v4211 = vunpack.c.l.b16 %v4125
  %v4212 = vunpack.c.h.b16 %v4125
  %v4213 = vunpack.c.l.b16 %v4126
  %v4214 = vunpack.c.h.b16 %v4126
  %v4215 = vunpack.c.l.b16 %v4127
  %v4216 = vunpack.c.h.b16 %v4127
  %v4217 = vunpack.c.l.b16 %v4128
  %v4218 = vunpack.c.h.b16 %v4128
  %v4219 = vunpack.c.l.b16 %v4129
  %v4220 = vunpack.c.h.b16 %v4129
  %v4221 = vunpack.c.l.b16 %v4130
  %v4222 = vunpack.c.h.b16 %v4130
  %v4223 = vunpack.c.l.b16 %v4131
  %v4224 = vunpack.c.h.b16 %v4131
  %v4225 = vunpack.c.l.b16 %v4132
  %v4226 = vunpack.c.h.b16 %v4132
  %v4227 = vunpack.c.l.b16 %v4133
  %v4228 = vunpack.c.h.b16 %v4133
  %v4229 = vunpack.c.l.b16 %v4134
  %v4230 = vunpack.c.h.b16 %v4134
  %v4231 = vpack.c.b16 %v4169, %v4167
  %v4232 = vpack.c.b16 %v4170, %v4168
  %v4233 = vpack.c.b16 %v4173, %v4171
  %v4234 = vpack.c.b16 %v4174, %v4172
  %v4235 = vpack.c.b16 %v4177, %v4175
  %v4236 = vpack.c.b16 %v4178, %v4176
  %v4237 = vpack.c.b16 %v4181, %v4179
  %v4238 = vpack.c.b16 %v4182, %v4180
  %v4239 = vpack.c.b16 %v4185, %v4183
  %v4240 = vpack.c.b16 %v4186, %v4184
  %v4241 = vpack.c.b16 %v4189, %v4187
  %v4242 = vpack.c.b16 %v4190, %v4188
  %v4243 = vpack.c.b16 %v4193, %v4191
  %v4244 = vpack.c.b16 %v4194, %v4192
  %v4245 = vpack.c.b16 %v4197, %v4195
  %v4246 = vpack.c.b16 %v4198, %v4196
  %v4247 = vpack.c.b16 %v4201, %v4199
  %v4248 = vpack.c.b16 %v4202, %v4200
  %v4249 = vpack.c.b16 %v4205, %v4203
  %v4250 = vpack.c.b16 %v4206, %v4204
  %v4251 = vpack.c.b16 %v4209, %v4207
  %v4252 = vpack.c.b16 %v4210, %v4208
  %v4253 = vpack.c.b16 %v4213, %v4211
  %v4254 = vpack.c.b16 %v4214, %v4212
  %v4255 = vpack.c.b16 %v4217, %v4215
  %v4256 = vpack.c.b16 %v4218, %v4216
  %v4257 = vpack.c.b16 %v4221, %v4219
  %v4258 = vpack.c.b16 %v4222, %v4220
  %v4259 = vpack.c.b16 %v4225, %v4223
  %v4260 = vpack.c.b16 %v4226, %v4224
  %v4261 = vpack.c.b16 %v4229, %v4227
  %v4262 = vpack.c.b16 %v4230, %v4228
  %4295 = vmatprep.subr.bf16.mxu0 %v4246
  %4296 = vmatpush1.bf16.msra.mxu0 %v4245
  %4297 = vmatprep.subr.bf16.mxu0 %v4244
  %4298 = vmatpush1.bf16.msra.mxu0 %v4243
  %4299 = vmatprep.subr.bf16.mxu0 %v4242
  %4300 = vmatpush1.bf16.msra.mxu0 %v4241
  %4301 = vmatprep.subr.bf16.mxu0 %v4240
  %4302 = vmatpush1.bf16.msra.mxu0 %v4239
  %4303 = vmatprep.subr.bf16.mxu0 %v4238
  %4304 = vmatpush1.bf16.msra.mxu0 %v4237
  %4305 = vmatprep.subr.bf16.mxu0 %v4236
  %4306 = vmatpush1.bf16.msra.mxu0 %v4235
  %4307 = vmatprep.subr.bf16.mxu0 %v4234
  %4308 = vmatpush1.bf16.msra.mxu0 %v4233
  %4309 = vmatprep.subr.bf16.mxu0 %v4232
  %4310 = vmatpush1.bf16.msra.mxu0 %v4231
  %4311 = vmatprep.subr.bf16.mxu0 %v4262
  %4312 = vmatpush2.bf16.msra.mxu0 %v4261
  %4313 = vmatprep.subr.bf16.mxu0 %v4260
  %4314 = vmatpush2.bf16.msra.mxu0 %v4259
  %4315 = vmatprep.subr.bf16.mxu0 %v4258
  %4316 = vmatpush2.bf16.msra.mxu0 %v4257
  %4317 = vmatprep.subr.bf16.mxu0 %v4256
  %4318 = vmatpush2.bf16.msra.mxu0 %v4255
  %4319 = vmatprep.subr.bf16.mxu0 %v4254
  %4320 = vmatpush2.bf16.msra.mxu0 %v4253
  %4321 = vmatprep.subr.bf16.mxu0 %v4252
  %4322 = vmatpush2.bf16.msra.mxu0 %v4251
  %4323 = vmatprep.subr.bf16.mxu0 %v4250
  %4324 = vmatpush2.bf16.msra.mxu0 %v4249
  %4325 = vmatprep.subr.bf16.mxu0 %v4248
  %4326 = vmatpush2.bf16.msra.mxu0 %v4247
  %4327 = vmatprep.mubr.bf16.mxu0 %v4101
  %4328 = vmatmul.mubr.bf16.gmra.mxu0 %v4100
  %v4329 = vpop.f32.mrf.mxu0
  %v4330 = vadd.f32 0.0, %v4329
  %v4331 = vpop.f32.mrf.mxu0
  %v4332 = vadd.f32 0.0, %v4331
  %v4333 = vpop.f32.mrf.mxu0
  %v4334 = vadd.f32 0.0, %v4333
  %v4335 = vpop.f32.mrf.mxu0
  %v4336 = vadd.f32 0.0, %v4335
  %4337 = vdwg.mxu0
  %v4370 = vunpack.c.l.b16 %v4068
  %v4371 = vunpack.c.h.b16 %v4068
  %v4372 = vunpack.c.l.b16 %v4069
  %v4373 = vunpack.c.h.b16 %v4069
  %v4374 = vunpack.c.l.b16 %v4070
  %v4375 = vunpack.c.h.b16 %v4070
  %v4376 = vunpack.c.l.b16 %v4071
  %v4377 = vunpack.c.h.b16 %v4071
  %v4378 = vunpack.c.l.b16 %v4072
  %v4379 = vunpack.c.h.b16 %v4072
  %v4380 = vunpack.c.l.b16 %v4073
  %v4381 = vunpack.c.h.b16 %v4073
  %v4382 = vunpack.c.l.b16 %v4074
  %v4383 = vunpack.c.h.b16 %v4074
  %v4384 = vunpack.c.l.b16 %v4075
  %v4385 = vunpack.c.h.b16 %v4075
  %v4386 = vunpack.c.l.b16 %v4076
  %v4387 = vunpack.c.h.b16 %v4076
  %v4388 = vunpack.c.l.b16 %v4077
  %v4389 = vunpack.c.h.b16 %v4077
  %v4390 = vunpack.c.l.b16 %v4078
  %v4391 = vunpack.c.h.b16 %v4078
  %v4392 = vunpack.c.l.b16 %v4079
  %v4393 = vunpack.c.h.b16 %v4079
  %v4394 = vunpack.c.l.b16 %v4080
  %v4395 = vunpack.c.h.b16 %v4080
  %v4396 = vunpack.c.l.b16 %v4081
  %v4397 = vunpack.c.h.b16 %v4081
  %v4398 = vunpack.c.l.b16 %v4082
  %v4399 = vunpack.c.h.b16 %v4082
  %v4400 = vunpack.c.l.b16 %v4083
  %v4401 = vunpack.c.h.b16 %v4083
  %v4402 = vunpack.c.l.b16 %v4084
  %v4403 = vunpack.c.h.b16 %v4084
  %v4404 = vunpack.c.l.b16 %v4085
  %v4405 = vunpack.c.h.b16 %v4085
  %v4406 = vunpack.c.l.b16 %v4086
  %v4407 = vunpack.c.h.b16 %v4086
  %v4408 = vunpack.c.l.b16 %v4087
  %v4409 = vunpack.c.h.b16 %v4087
  %v4410 = vunpack.c.l.b16 %v4088
  %v4411 = vunpack.c.h.b16 %v4088
  %v4412 = vunpack.c.l.b16 %v4089
  %v4413 = vunpack.c.h.b16 %v4089
  %v4414 = vunpack.c.l.b16 %v4090
  %v4415 = vunpack.c.h.b16 %v4090
  %v4416 = vunpack.c.l.b16 %v4091
  %v4417 = vunpack.c.h.b16 %v4091
  %v4418 = vunpack.c.l.b16 %v4092
  %v4419 = vunpack.c.h.b16 %v4092
  %v4420 = vunpack.c.l.b16 %v4093
  %v4421 = vunpack.c.h.b16 %v4093
  %v4422 = vunpack.c.l.b16 %v4094
  %v4423 = vunpack.c.h.b16 %v4094
  %v4424 = vunpack.c.l.b16 %v4095
  %v4425 = vunpack.c.h.b16 %v4095
  %v4426 = vunpack.c.l.b16 %v4096
  %v4427 = vunpack.c.h.b16 %v4096
  %v4428 = vunpack.c.l.b16 %v4097
  %v4429 = vunpack.c.h.b16 %v4097
  %v4430 = vunpack.c.l.b16 %v4098
  %v4431 = vunpack.c.h.b16 %v4098
  %v4432 = vunpack.c.l.b16 %v4099
  %v4433 = vunpack.c.h.b16 %v4099
  %v4434 = vpack.c.b16 %v4372, %v4370
  %v4435 = vpack.c.b16 %v4373, %v4371
  %v4436 = vpack.c.b16 %v4376, %v4374
  %v4437 = vpack.c.b16 %v4377, %v4375
  %v4438 = vpack.c.b16 %v4380, %v4378
  %v4439 = vpack.c.b16 %v4381, %v4379
  %v4440 = vpack.c.b16 %v4384, %v4382
  %v4441 = vpack.c.b16 %v4385, %v4383
  %v4442 = vpack.c.b16 %v4388, %v4386
  %v4443 = vpack.c.b16 %v4389, %v4387
  %v4444 = vpack.c.b16 %v4392, %v4390
  %v4445 = vpack.c.b16 %v4393, %v4391
  %v4446 = vpack.c.b16 %v4396, %v4394
  %v4447 = vpack.c.b16 %v4397, %v4395
  %v4448 = vpack.c.b16 %v4400, %v4398
  %v4449 = vpack.c.b16 %v4401, %v4399
  %v4450 = vpack.c.b16 %v4404, %v4402
  %v4451 = vpack.c.b16 %v4405, %v4403
  %v4452 = vpack.c.b16 %v4408, %v4406
  %v4453 = vpack.c.b16 %v4409, %v4407
  %v4454 = vpack.c.b16 %v4412, %v4410
  %v4455 = vpack.c.b16 %v4413, %v4411
  %v4456 = vpack.c.b16 %v4416, %v4414
  %v4457 = vpack.c.b16 %v4417, %v4415
  %v4458 = vpack.c.b16 %v4420, %v4418
  %v4459 = vpack.c.b16 %v4421, %v4419
  %v4460 = vpack.c.b16 %v4424, %v4422
  %v4461 = vpack.c.b16 %v4425, %v4423
  %v4462 = vpack.c.b16 %v4428, %v4426
  %v4463 = vpack.c.b16 %v4429, %v4427
  %v4464 = vpack.c.b16 %v4432, %v4430
  %v4465 = vpack.c.b16 %v4433, %v4431
  %4498 = vmatprep.subr.bf16.mxu0 %v4449
  %4499 = vmatpush1.bf16.msra.mxu0 %v4448
  %4500 = vmatprep.subr.bf16.mxu0 %v4447
  %4501 = vmatpush1.bf16.msra.mxu0 %v4446
  %4502 = vmatprep.subr.bf16.mxu0 %v4445
  %4503 = vmatpush1.bf16.msra.mxu0 %v4444
  %4504 = vmatprep.subr.bf16.mxu0 %v4443
  %4505 = vmatpush1.bf16.msra.mxu0 %v4442
  %4506 = vmatprep.subr.bf16.mxu0 %v4441
  %4507 = vmatpush1.bf16.msra.mxu0 %v4440
  %4508 = vmatprep.subr.bf16.mxu0 %v4439
  %4509 = vmatpush1.bf16.msra.mxu0 %v4438
  %4510 = vmatprep.subr.bf16.mxu0 %v4437
  %4511 = vmatpush1.bf16.msra.mxu0 %v4436
  %4512 = vmatprep.subr.bf16.mxu0 %v4435
  %4513 = vmatpush1.bf16.msra.mxu0 %v4434
  %4514 = vmatprep.subr.bf16.mxu0 %v4465
  %4515 = vmatpush2.bf16.msra.mxu0 %v4464
  %4516 = vmatprep.subr.bf16.mxu0 %v4463
  %4517 = vmatpush2.bf16.msra.mxu0 %v4462
  %4518 = vmatprep.subr.bf16.mxu0 %v4461
  %4519 = vmatpush2.bf16.msra.mxu0 %v4460
  %4520 = vmatprep.subr.bf16.mxu0 %v4459
  %4521 = vmatpush2.bf16.msra.mxu0 %v4458
  %4522 = vmatprep.subr.bf16.mxu0 %v4457
  %4523 = vmatpush2.bf16.msra.mxu0 %v4456
  %4524 = vmatprep.subr.bf16.mxu0 %v4455
  %4525 = vmatpush2.bf16.msra.mxu0 %v4454
  %4526 = vmatprep.subr.bf16.mxu0 %v4453
  %4527 = vmatpush2.bf16.msra.mxu0 %v4452
  %4528 = vmatprep.subr.bf16.mxu0 %v4451
  %4529 = vmatpush2.bf16.msra.mxu0 %v4450
  %4530 = vmatprep.mubr.bf16.mxu0 %v4067
  %4531 = vmatmul.mubr.bf16.gmra.mxu0 %v4066
  %v4532 = vpop.f32.mrf.mxu0
  %v4533 = vadd.f32 %v4330, %v4532
  %v4534 = vpop.f32.mrf.mxu0
  %v4535 = vadd.f32 %v4332, %v4534
  %v4536 = vpop.f32.mrf.mxu0
  %v4537 = vadd.f32 %v4334, %v4536
  %v4538 = vpop.f32.mrf.mxu0
  %v4539 = vadd.f32 %v4336, %v4538
  %4540 = vdwg.mxu0
  %v4541 = vpack.c.bf16 %v4050, %v4044
  %v4542 = vpack.c.bf16 %v4053, %v4047
  %s4543 = scalar_lea.vmem %s12, 512
  %v4544 = vld [vmem:[%s4543] sm:$0xff]
  %v4545 = vld [vmem:[%s4543 + $0x8] sm:$0xff]
  %v4546 = vld [vmem:[%s4543 + $0x10] sm:$0xff]
  %v4547 = vld [vmem:[%s4543 + $0x18] sm:$0xff]
  %v4548 = vld [vmem:[%s4543 + $0x20] sm:$0xff]
  %v4549 = vld [vmem:[%s4543 + $0x28] sm:$0xff]
  %v4550 = vld [vmem:[%s4543 + $0x30] sm:$0xff]
  %v4551 = vld [vmem:[%s4543 + $0x38] sm:$0xff]
  %v4552 = vld [vmem:[%s4543 + $0x40] sm:$0xff]
  %v4553 = vld [vmem:[%s4543 + $0x48] sm:$0xff]
  %v4554 = vld [vmem:[%s4543 + $0x50] sm:$0xff]
  %v4555 = vld [vmem:[%s4543 + $0x58] sm:$0xff]
  %v4556 = vld [vmem:[%s4543 + $0x60] sm:$0xff]
  %v4557 = vld [vmem:[%s4543 + $0x68] sm:$0xff]
  %v4558 = vld [vmem:[%s4543 + $0x70] sm:$0xff]
  %v4559 = vld [vmem:[%s4543 + $0x78] sm:$0xff]
  %v4560 = vld [vmem:[%s4543 + $0x80] sm:$0xff]
  %v4561 = vld [vmem:[%s4543 + $0x88] sm:$0xff]
  %v4562 = vld [vmem:[%s4543 + $0x90] sm:$0xff]
  %v4563 = vld [vmem:[%s4543 + $0x98] sm:$0xff]
  %v4564 = vld [vmem:[%s4543 + $0xa0] sm:$0xff]
  %v4565 = vld [vmem:[%s4543 + $0xa8] sm:$0xff]
  %v4566 = vld [vmem:[%s4543 + $0xb0] sm:$0xff]
  %v4567 = vld [vmem:[%s4543 + $0xb8] sm:$0xff]
  %v4568 = vld [vmem:[%s4543 + $0xc0] sm:$0xff]
  %v4569 = vld [vmem:[%s4543 + $0xc8] sm:$0xff]
  %v4570 = vld [vmem:[%s4543 + $0xd0] sm:$0xff]
  %v4571 = vld [vmem:[%s4543 + $0xd8] sm:$0xff]
  %v4572 = vld [vmem:[%s4543 + $0xe0] sm:$0xff]
  %v4573 = vld [vmem:[%s4543 + $0xe8] sm:$0xff]
  %v4574 = vld [vmem:[%s4543 + $0xf0] sm:$0xff]
  %v4575 = vld [vmem:[%s4543 + $0xf8] sm:$0xff]
  %v4608 = vunpack.c.l.b16 %v4544
  %v4609 = vunpack.c.h.b16 %v4544
  %v4610 = vunpack.c.l.b16 %v4545
  %v4611 = vunpack.c.h.b16 %v4545
  %v4612 = vunpack.c.l.b16 %v4546
  %v4613 = vunpack.c.h.b16 %v4546
  %v4614 = vunpack.c.l.b16 %v4547
  %v4615 = vunpack.c.h.b16 %v4547
  %v4616 = vunpack.c.l.b16 %v4548
  %v4617 = vunpack.c.h.b16 %v4548
  %v4618 = vunpack.c.l.b16 %v4549
  %v4619 = vunpack.c.h.b16 %v4549
  %v4620 = vunpack.c.l.b16 %v4550
  %v4621 = vunpack.c.h.b16 %v4550
  %v4622 = vunpack.c.l.b16 %v4551
  %v4623 = vunpack.c.h.b16 %v4551
  %v4624 = vunpack.c.l.b16 %v4552
  %v4625 = vunpack.c.h.b16 %v4552
  %v4626 = vunpack.c.l.b16 %v4553
  %v4627 = vunpack.c.h.b16 %v4553
  %v4628 = vunpack.c.l.b16 %v4554
  %v4629 = vunpack.c.h.b16 %v4554
  %v4630 = vunpack.c.l.b16 %v4555
  %v4631 = vunpack.c.h.b16 %v4555
  %v4632 = vunpack.c.l.b16 %v4556
  %v4633 = vunpack.c.h.b16 %v4556
  %v4634 = vunpack.c.l.b16 %v4557
  %v4635 = vunpack.c.h.b16 %v4557
  %v4636 = vunpack.c.l.b16 %v4558
  %v4637 = vunpack.c.h.b16 %v4558
  %v4638 = vunpack.c.l.b16 %v4559
  %v4639 = vunpack.c.h.b16 %v4559
  %v4640 = vunpack.c.l.b16 %v4560
  %v4641 = vunpack.c.h.b16 %v4560
  %v4642 = vunpack.c.l.b16 %v4561
  %v4643 = vunpack.c.h.b16 %v4561
  %v4644 = vunpack.c.l.b16 %v4562
  %v4645 = vunpack.c.h.b16 %v4562
  %v4646 = vunpack.c.l.b16 %v4563
  %v4647 = vunpack.c.h.b16 %v4563
  %v4648 = vunpack.c.l.b16 %v4564
  %v4649 = vunpack.c.h.b16 %v4564
  %v4650 = vunpack.c.l.b16 %v4565
  %v4651 = vunpack.c.h.b16 %v4565
  %v4652 = vunpack.c.l.b16 %v4566
  %v4653 = vunpack.c.h.b16 %v4566
  %v4654 = vunpack.c.l.b16 %v4567
  %v4655 = vunpack.c.h.b16 %v4567
  %v4656 = vunpack.c.l.b16 %v4568
  %v4657 = vunpack.c.h.b16 %v4568
  %v4658 = vunpack.c.l.b16 %v4569
  %v4659 = vunpack.c.h.b16 %v4569
  %v4660 = vunpack.c.l.b16 %v4570
  %v4661 = vunpack.c.h.b16 %v4570
  %v4662 = vunpack.c.l.b16 %v4571
  %v4663 = vunpack.c.h.b16 %v4571
  %v4664 = vunpack.c.l.b16 %v4572
  %v4665 = vunpack.c.h.b16 %v4572
  %v4666 = vunpack.c.l.b16 %v4573
  %v4667 = vunpack.c.h.b16 %v4573
  %v4668 = vunpack.c.l.b16 %v4574
  %v4669 = vunpack.c.h.b16 %v4574
  %v4670 = vunpack.c.l.b16 %v4575
  %v4671 = vunpack.c.h.b16 %v4575
  %v4672 = vpack.c.b16 %v4610, %v4608
  %v4673 = vpack.c.b16 %v4611, %v4609
  %v4674 = vpack.c.b16 %v4614, %v4612
  %v4675 = vpack.c.b16 %v4615, %v4613
  %v4676 = vpack.c.b16 %v4618, %v4616
  %v4677 = vpack.c.b16 %v4619, %v4617
  %v4678 = vpack.c.b16 %v4622, %v4620
  %v4679 = vpack.c.b16 %v4623, %v4621
  %v4680 = vpack.c.b16 %v4626, %v4624
  %v4681 = vpack.c.b16 %v4627, %v4625
  %v4682 = vpack.c.b16 %v4630, %v4628
  %v4683 = vpack.c.b16 %v4631, %v4629
  %v4684 = vpack.c.b16 %v4634, %v4632
  %v4685 = vpack.c.b16 %v4635, %v4633
  %v4686 = vpack.c.b16 %v4638, %v4636
  %v4687 = vpack.c.b16 %v4639, %v4637
  %v4688 = vpack.c.b16 %v4642, %v4640
  %v4689 = vpack.c.b16 %v4643, %v4641
  %v4690 = vpack.c.b16 %v4646, %v4644
  %v4691 = vpack.c.b16 %v4647, %v4645
  %v4692 = vpack.c.b16 %v4650, %v4648
  %v4693 = vpack.c.b16 %v4651, %v4649
  %v4694 = vpack.c.b16 %v4654, %v4652
  %v4695 = vpack.c.b16 %v4655, %v4653
  %v4696 = vpack.c.b16 %v4658, %v4656
  %v4697 = vpack.c.b16 %v4659, %v4657
  %v4698 = vpack.c.b16 %v4662, %v4660
  %v4699 = vpack.c.b16 %v4663, %v4661
  %v4700 = vpack.c.b16 %v4666, %v4664
  %v4701 = vpack.c.b16 %v4667, %v4665
  %v4702 = vpack.c.b16 %v4670, %v4668
  %v4703 = vpack.c.b16 %v4671, %v4669
  %4736 = vmatprep.subr.bf16.mxu0 %v4687
  %4737 = vmatpush1.bf16.msra.mxu0 %v4686
  %4738 = vmatprep.subr.bf16.mxu0 %v4685
  %4739 = vmatpush1.bf16.msra.mxu0 %v4684
  %4740 = vmatprep.subr.bf16.mxu0 %v4683
  %4741 = vmatpush1.bf16.msra.mxu0 %v4682
  %4742 = vmatprep.subr.bf16.mxu0 %v4681
  %4743 = vmatpush1.bf16.msra.mxu0 %v4680
  %4744 = vmatprep.subr.bf16.mxu0 %v4679
  %4745 = vmatpush1.bf16.msra.mxu0 %v4678
  %4746 = vmatprep.subr.bf16.mxu0 %v4677
  %4747 = vmatpush1.bf16.msra.mxu0 %v4676
  %4748 = vmatprep.subr.bf16.mxu0 %v4675
  %4749 = vmatpush1.bf16.msra.mxu0 %v4674
  %4750 = vmatprep.subr.bf16.mxu0 %v4673
  %4751 = vmatpush1.bf16.msra.mxu0 %v4672
  %4752 = vmatprep.subr.bf16.mxu0 %v4703
  %4753 = vmatpush2.bf16.msra.mxu0 %v4702
  %4754 = vmatprep.subr.bf16.mxu0 %v4701
  %4755 = vmatpush2.bf16.msra.mxu0 %v4700
  %4756 = vmatprep.subr.bf16.mxu0 %v4699
  %4757 = vmatpush2.bf16.msra.mxu0 %v4698
  %4758 = vmatprep.subr.bf16.mxu0 %v4697
  %4759 = vmatpush2.bf16.msra.mxu0 %v4696
  %4760 = vmatprep.subr.bf16.mxu0 %v4695
  %4761 = vmatpush2.bf16.msra.mxu0 %v4694
  %4762 = vmatprep.subr.bf16.mxu0 %v4693
  %4763 = vmatpush2.bf16.msra.mxu0 %v4692
  %4764 = vmatprep.subr.bf16.mxu0 %v4691
  %4765 = vmatpush2.bf16.msra.mxu0 %v4690
  %4766 = vmatprep.subr.bf16.mxu0 %v4689
  %4767 = vmatpush2.bf16.msra.mxu0 %v4688
  %4768 = vmatprep.mubr.bf16.mxu0 %v4542
  %4769 = vmatmul.mubr.bf16.gmra.mxu0 %v4541
  %v4770 = vpop.f32.mrf.mxu0
  %v4771 = vadd.f32 0.0, %v4770
  %v4772 = vpop.f32.mrf.mxu0
  %v4773 = vadd.f32 0.0, %v4772
  %v4774 = vpop.f32.mrf.mxu0
  %v4775 = vadd.f32 0.0, %v4774
  %v4776 = vpop.f32.mrf.mxu0
  %v4777 = vadd.f32 0.0, %v4776
  %4778 = vdwg.mxu0
  %v4779 = vadd.f32 %v4533, %v4771
  %v4780 = vadd.f32 %v4535, %v4773
  %v4781 = vadd.f32 %v4537, %v4775
  %v4782 = vadd.f32 %v4539, %v4777
  %v4783 = vpack.c.bf16 %v4062, %v4056
  %v4784 = vpack.c.bf16 %v4065, %v4059
  %s4785 = scalar_lea.vmem %s12, 768
  %v4786 = vld [vmem:[%s4785] sm:$0xff]
  %v4787 = vld [vmem:[%s4785 + $0x8] sm:$0xff]
  %v4788 = vld [vmem:[%s4785 + $0x10] sm:$0xff]
  %v4789 = vld [vmem:[%s4785 + $0x18] sm:$0xff]
  %v4790 = vld [vmem:[%s4785 + $0x20] sm:$0xff]
  %v4791 = vld [vmem:[%s4785 + $0x28] sm:$0xff]
  %v4792 = vld [vmem:[%s4785 + $0x30] sm:$0xff]
  %v4793 = vld [vmem:[%s4785 + $0x38] sm:$0xff]
  %v4794 = vld [vmem:[%s4785 + $0x40] sm:$0xff]
  %v4795 = vld [vmem:[%s4785 + $0x48] sm:$0xff]
  %v4796 = vld [vmem:[%s4785 + $0x50] sm:$0xff]
  %v4797 = vld [vmem:[%s4785 + $0x58] sm:$0xff]
  %v4798 = vld [vmem:[%s4785 + $0x60] sm:$0xff]
  %v4799 = vld [vmem:[%s4785 + $0x68] sm:$0xff]
  %v4800 = vld [vmem:[%s4785 + $0x70] sm:$0xff]
  %v4801 = vld [vmem:[%s4785 + $0x78] sm:$0xff]
  %v4802 = vld [vmem:[%s4785 + $0x80] sm:$0xff]
  %v4803 = vld [vmem:[%s4785 + $0x88] sm:$0xff]
  %v4804 = vld [vmem:[%s4785 + $0x90] sm:$0xff]
  %v4805 = vld [vmem:[%s4785 + $0x98] sm:$0xff]
  %v4806 = vld [vmem:[%s4785 + $0xa0] sm:$0xff]
  %v4807 = vld [vmem:[%s4785 + $0xa8] sm:$0xff]
  %v4808 = vld [vmem:[%s4785 + $0xb0] sm:$0xff]
  %v4809 = vld [vmem:[%s4785 + $0xb8] sm:$0xff]
  %v4810 = vld [vmem:[%s4785 + $0xc0] sm:$0xff]
  %v4811 = vld [vmem:[%s4785 + $0xc8] sm:$0xff]
  %v4812 = vld [vmem:[%s4785 + $0xd0] sm:$0xff]
  %v4813 = vld [vmem:[%s4785 + $0xd8] sm:$0xff]
  %v4814 = vld [vmem:[%s4785 + $0xe0] sm:$0xff]
  %v4815 = vld [vmem:[%s4785 + $0xe8] sm:$0xff]
  %v4816 = vld [vmem:[%s4785 + $0xf0] sm:$0xff]
  %v4817 = vld [vmem:[%s4785 + $0xf8] sm:$0xff]
  %v4850 = vunpack.c.l.b16 %v4786
  %v4851 = vunpack.c.h.b16 %v4786
  %v4852 = vunpack.c.l.b16 %v4787
  %v4853 = vunpack.c.h.b16 %v4787
  %v4854 = vunpack.c.l.b16 %v4788
  %v4855 = vunpack.c.h.b16 %v4788
  %v4856 = vunpack.c.l.b16 %v4789
  %v4857 = vunpack.c.h.b16 %v4789
  %v4858 = vunpack.c.l.b16 %v4790
  %v4859 = vunpack.c.h.b16 %v4790
  %v4860 = vunpack.c.l.b16 %v4791
  %v4861 = vunpack.c.h.b16 %v4791
  %v4862 = vunpack.c.l.b16 %v4792
  %v4863 = vunpack.c.h.b16 %v4792
  %v4864 = vunpack.c.l.b16 %v4793
  %v4865 = vunpack.c.h.b16 %v4793
  %v4866 = vunpack.c.l.b16 %v4794
  %v4867 = vunpack.c.h.b16 %v4794
  %v4868 = vunpack.c.l.b16 %v4795
  %v4869 = vunpack.c.h.b16 %v4795
  %v4870 = vunpack.c.l.b16 %v4796
  %v4871 = vunpack.c.h.b16 %v4796
  %v4872 = vunpack.c.l.b16 %v4797
  %v4873 = vunpack.c.h.b16 %v4797
  %v4874 = vunpack.c.l.b16 %v4798
  %v4875 = vunpack.c.h.b16 %v4798
  %v4876 = vunpack.c.l.b16 %v4799
  %v4877 = vunpack.c.h.b16 %v4799
  %v4878 = vunpack.c.l.b16 %v4800
  %v4879 = vunpack.c.h.b16 %v4800
  %v4880 = vunpack.c.l.b16 %v4801
  %v4881 = vunpack.c.h.b16 %v4801
  %v4882 = vunpack.c.l.b16 %v4802
  %v4883 = vunpack.c.h.b16 %v4802
  %v4884 = vunpack.c.l.b16 %v4803
  %v4885 = vunpack.c.h.b16 %v4803
  %v4886 = vunpack.c.l.b16 %v4804
  %v4887 = vunpack.c.h.b16 %v4804
  %v4888 = vunpack.c.l.b16 %v4805
  %v4889 = vunpack.c.h.b16 %v4805
  %v4890 = vunpack.c.l.b16 %v4806
  %v4891 = vunpack.c.h.b16 %v4806
  %v4892 = vunpack.c.l.b16 %v4807
  %v4893 = vunpack.c.h.b16 %v4807
  %v4894 = vunpack.c.l.b16 %v4808
  %v4895 = vunpack.c.h.b16 %v4808
  %v4896 = vunpack.c.l.b16 %v4809
  %v4897 = vunpack.c.h.b16 %v4809
  %v4898 = vunpack.c.l.b16 %v4810
  %v4899 = vunpack.c.h.b16 %v4810
  %v4900 = vunpack.c.l.b16 %v4811
  %v4901 = vunpack.c.h.b16 %v4811
  %v4902 = vunpack.c.l.b16 %v4812
  %v4903 = vunpack.c.h.b16 %v4812
  %v4904 = vunpack.c.l.b16 %v4813
  %v4905 = vunpack.c.h.b16 %v4813
  %v4906 = vunpack.c.l.b16 %v4814
  %v4907 = vunpack.c.h.b16 %v4814
  %v4908 = vunpack.c.l.b16 %v4815
  %v4909 = vunpack.c.h.b16 %v4815
  %v4910 = vunpack.c.l.b16 %v4816
  %v4911 = vunpack.c.h.b16 %v4816
  %v4912 = vunpack.c.l.b16 %v4817
  %v4913 = vunpack.c.h.b16 %v4817
  %v4914 = vpack.c.b16 %v4852, %v4850
  %v4915 = vpack.c.b16 %v4853, %v4851
  %v4916 = vpack.c.b16 %v4856, %v4854
  %v4917 = vpack.c.b16 %v4857, %v4855
  %v4918 = vpack.c.b16 %v4860, %v4858
  %v4919 = vpack.c.b16 %v4861, %v4859
  %v4920 = vpack.c.b16 %v4864, %v4862
  %v4921 = vpack.c.b16 %v4865, %v4863
  %v4922 = vpack.c.b16 %v4868, %v4866
  %v4923 = vpack.c.b16 %v4869, %v4867
  %v4924 = vpack.c.b16 %v4872, %v4870
  %v4925 = vpack.c.b16 %v4873, %v4871
  %v4926 = vpack.c.b16 %v4876, %v4874
  %v4927 = vpack.c.b16 %v4877, %v4875
  %v4928 = vpack.c.b16 %v4880, %v4878
  %v4929 = vpack.c.b16 %v4881, %v4879
  %v4930 = vpack.c.b16 %v4884, %v4882
  %v4931 = vpack.c.b16 %v4885, %v4883
  %v4932 = vpack.c.b16 %v4888, %v4886
  %v4933 = vpack.c.b16 %v4889, %v4887
  %v4934 = vpack.c.b16 %v4892, %v4890
  %v4935 = vpack.c.b16 %v4893, %v4891
  %v4936 = vpack.c.b16 %v4896, %v4894
  %v4937 = vpack.c.b16 %v4897, %v4895
  %v4938 = vpack.c.b16 %v4900, %v4898
  %v4939 = vpack.c.b16 %v4901, %v4899
  %v4940 = vpack.c.b16 %v4904, %v4902
  %v4941 = vpack.c.b16 %v4905, %v4903
  %v4942 = vpack.c.b16 %v4908, %v4906
  %v4943 = vpack.c.b16 %v4909, %v4907
  %v4944 = vpack.c.b16 %v4912, %v4910
  %v4945 = vpack.c.b16 %v4913, %v4911
  %4978 = vmatprep.subr.bf16.mxu0 %v4929
  %4979 = vmatpush1.bf16.msra.mxu0 %v4928
  %4980 = vmatprep.subr.bf16.mxu0 %v4927
  %4981 = vmatpush1.bf16.msra.mxu0 %v4926
  %4982 = vmatprep.subr.bf16.mxu0 %v4925
  %4983 = vmatpush1.bf16.msra.mxu0 %v4924
  %4984 = vmatprep.subr.bf16.mxu0 %v4923
  %4985 = vmatpush1.bf16.msra.mxu0 %v4922
  %4986 = vmatprep.subr.bf16.mxu0 %v4921
  %4987 = vmatpush1.bf16.msra.mxu0 %v4920
  %4988 = vmatprep.subr.bf16.mxu0 %v4919
  %4989 = vmatpush1.bf16.msra.mxu0 %v4918
  %4990 = vmatprep.subr.bf16.mxu0 %v4917
  %4991 = vmatpush1.bf16.msra.mxu0 %v4916
  %4992 = vmatprep.subr.bf16.mxu0 %v4915
  %4993 = vmatpush1.bf16.msra.mxu0 %v4914
  %4994 = vmatprep.subr.bf16.mxu0 %v4945
  %4995 = vmatpush2.bf16.msra.mxu0 %v4944
  %4996 = vmatprep.subr.bf16.mxu0 %v4943
  %4997 = vmatpush2.bf16.msra.mxu0 %v4942
  %4998 = vmatprep.subr.bf16.mxu0 %v4941
  %4999 = vmatpush2.bf16.msra.mxu0 %v4940
  %5000 = vmatprep.subr.bf16.mxu0 %v4939
  %5001 = vmatpush2.bf16.msra.mxu0 %v4938
  %5002 = vmatprep.subr.bf16.mxu0 %v4937
  %5003 = vmatpush2.bf16.msra.mxu0 %v4936
  %5004 = vmatprep.subr.bf16.mxu0 %v4935
  %5005 = vmatpush2.bf16.msra.mxu0 %v4934
  %5006 = vmatprep.subr.bf16.mxu0 %v4933
  %5007 = vmatpush2.bf16.msra.mxu0 %v4932
  %5008 = vmatprep.subr.bf16.mxu0 %v4931
  %5009 = vmatpush2.bf16.msra.mxu0 %v4930
  %5010 = vmatprep.mubr.bf16.mxu0 %v4784
  %5011 = vmatmul.mubr.bf16.gmra.mxu0 %v4783
  %v5012 = vpop.f32.mrf.mxu0
  %v5013 = vadd.f32 0.0, %v5012
  %v5014 = vpop.f32.mrf.mxu0
  %v5015 = vadd.f32 0.0, %v5014
  %v5016 = vpop.f32.mrf.mxu0
  %v5017 = vadd.f32 0.0, %v5016
  %v5018 = vpop.f32.mrf.mxu0
  %v5019 = vadd.f32 0.0, %v5018
  %5020 = vdwg.mxu0
  %v5021 = vadd.f32 %v4779, %v5013
  %v5022 = vadd.f32 %v4780, %v5015
  %v5023 = vadd.f32 %v4781, %v5017
  %v5024 = vadd.f32 %v4782, %v5019
  %v5025 = vld [vmem:[%s13] sm:$0x3]
  %v5027 = vlaneseq
  %v5028 = vshrl.u32 %v5027, 7
  %v5029 = vsub.s32 0, %v5028
  %v5030 = vrot.slane %v5025, %v5029
  %v5031 = vlaneseq
  %v5032 = vshrl.u32 %v5031, 7
  %v5033 = vsub.s32 1, %v5032
  %v5034 = vrot.slane %v5025, %v5033
  %v5037 = vadd.f32 %v5021, %v5030
  %v5038 = vadd.f32 %v5022, %v5034
  %v5039 = vadd.f32 %v5023, %v5030
  %v5040 = vadd.f32 %v5024, %v5034
  %v5041 = vld [vmem:[%s2] sm:$0xff]
  %v5042 = vld [vmem:[%s2 + $0x8] sm:$0xff]
  %v5043 = vld [vmem:[%s2 + $0x10] sm:$0xff]
  %v5044 = vld [vmem:[%s2 + $0x18] sm:$0xff]
  %v5045 = vld [vmem:[%s2 + $0x20] sm:$0xff]
  %v5046 = vld [vmem:[%s2 + $0x28] sm:$0xff]
  %v5047 = vld [vmem:[%s2 + $0x30] sm:$0xff]
  %v5048 = vld [vmem:[%s2 + $0x38] sm:$0xff]
  %v5049 = vunpack.c.l.bf16 %v5041
  %v5050 = vunpack.c.h.bf16 %v5041
  %v5051 = vunpack.c.l.bf16 %v5042
  %v5052 = vunpack.c.h.bf16 %v5042
  %v5053 = vunpack.c.l.bf16 %v5043
  %v5054 = vunpack.c.h.bf16 %v5043
  %v5055 = vunpack.c.l.bf16 %v5044
  %v5056 = vunpack.c.h.bf16 %v5044
  %v5057 = vunpack.c.l.bf16 %v5045
  %v5058 = vunpack.c.h.bf16 %v5045
  %v5059 = vunpack.c.l.bf16 %v5046
  %v5060 = vunpack.c.h.bf16 %v5046
  %v5061 = vunpack.c.l.bf16 %v5047
  %v5062 = vunpack.c.h.bf16 %v5047
  %v5063 = vunpack.c.l.bf16 %v5048
  %v5064 = vunpack.c.h.bf16 %v5048
  %v5065 = vadd.f32 %v5049, %v4020
  %v5066 = vadd.f32 %v5050, %v4023
  %v5067 = vadd.f32 %v5051, %v4026
  %v5068 = vadd.f32 %v5052, %v4029
  %v5069 = vadd.f32 %v5053, %v4032
  %v5070 = vadd.f32 %v5054, %v4035
  %v5071 = vadd.f32 %v5055, %v4038
  %v5072 = vadd.f32 %v5056, %v4041
  %v5073 = vadd.f32 %v5057, %v4044
  %v5074 = vadd.f32 %v5058, %v4047
  %v5075 = vadd.f32 %v5059, %v4050
  %v5076 = vadd.f32 %v5060, %v4053
  %v5077 = vadd.f32 %v5061, %v4056
  %v5078 = vadd.f32 %v5062, %v4059
  %v5079 = vadd.f32 %v5063, %v4062
  %v5080 = vadd.f32 %v5064, %v4065
  %v5081 = vpack.c.bf16 %v5067, %v5065
  %v5082 = vpack.c.bf16 %v5068, %v5066
  %v5083 = vpack.c.bf16 %v5071, %v5069
  %v5084 = vpack.c.bf16 %v5072, %v5070
  %v5085 = vpack.c.bf16 %v5075, %v5073
  %v5086 = vpack.c.bf16 %v5076, %v5074
  %v5087 = vpack.c.bf16 %v5079, %v5077
  %v5088 = vpack.c.bf16 %v5080, %v5078
  %v5089 = vld [vmem:[%s8] sm:$0xff]
  %v5090 = vld [vmem:[%s8 + $0x8] sm:$0xff]
  %v5091 = vld [vmem:[%s8 + $0x10] sm:$0xff]
  %v5092 = vld [vmem:[%s8 + $0x18] sm:$0xff]
  %v5093 = vld [vmem:[%s8 + $0x20] sm:$0xff]
  %v5094 = vld [vmem:[%s8 + $0x28] sm:$0xff]
  %v5095 = vld [vmem:[%s8 + $0x30] sm:$0xff]
  %v5096 = vld [vmem:[%s8 + $0x38] sm:$0xff]
  %v5097 = vld [vmem:[%s8 + $0x40] sm:$0xff]
  %v5098 = vld [vmem:[%s8 + $0x48] sm:$0xff]
  %v5099 = vld [vmem:[%s8 + $0x50] sm:$0xff]
  %v5100 = vld [vmem:[%s8 + $0x58] sm:$0xff]
  %v5101 = vld [vmem:[%s8 + $0x60] sm:$0xff]
  %v5102 = vld [vmem:[%s8 + $0x68] sm:$0xff]
  %v5103 = vld [vmem:[%s8 + $0x70] sm:$0xff]
  %v5104 = vld [vmem:[%s8 + $0x78] sm:$0xff]
  %v5105 = vld [vmem:[%s8 + $0x80] sm:$0xff]
  %v5106 = vld [vmem:[%s8 + $0x88] sm:$0xff]
  %v5107 = vld [vmem:[%s8 + $0x90] sm:$0xff]
  %v5108 = vld [vmem:[%s8 + $0x98] sm:$0xff]
  %v5109 = vld [vmem:[%s8 + $0xa0] sm:$0xff]
  %v5110 = vld [vmem:[%s8 + $0xa8] sm:$0xff]
  %v5111 = vld [vmem:[%s8 + $0xb0] sm:$0xff]
  %v5112 = vld [vmem:[%s8 + $0xb8] sm:$0xff]
  %v5113 = vld [vmem:[%s8 + $0xc0] sm:$0xff]
  %v5114 = vld [vmem:[%s8 + $0xc8] sm:$0xff]
  %v5115 = vld [vmem:[%s8 + $0xd0] sm:$0xff]
  %v5116 = vld [vmem:[%s8 + $0xd8] sm:$0xff]
  %v5117 = vld [vmem:[%s8 + $0xe0] sm:$0xff]
  %v5118 = vld [vmem:[%s8 + $0xe8] sm:$0xff]
  %v5119 = vld [vmem:[%s8 + $0xf0] sm:$0xff]
  %v5120 = vld [vmem:[%s8 + $0xf8] sm:$0xff]
  %v5121 = vld [vmem:[%s9] sm:$0x3]
  %v5123 = vlaneseq
  %v5124 = vshrl.u32 %v5123, 7
  %v5125 = vsub.s32 0, %v5124
  %v5126 = vrot.slane %v5121, %v5125
  %v5127 = vlaneseq
  %v5128 = vshrl.u32 %v5127, 7
  %v5129 = vsub.s32 1, %v5128
  %v5130 = vrot.slane %v5121, %v5129
  %v5165 = vunpack.c.l.b16 %v5089
  %v5166 = vunpack.c.h.b16 %v5089
  %v5167 = vunpack.c.l.b16 %v5090
  %v5168 = vunpack.c.h.b16 %v5090
  %v5169 = vunpack.c.l.b16 %v5091
  %v5170 = vunpack.c.h.b16 %v5091
  %v5171 = vunpack.c.l.b16 %v5092
  %v5172 = vunpack.c.h.b16 %v5092
  %v5173 = vunpack.c.l.b16 %v5093
  %v5174 = vunpack.c.h.b16 %v5093
  %v5175 = vunpack.c.l.b16 %v5094
  %v5176 = vunpack.c.h.b16 %v5094
  %v5177 = vunpack.c.l.b16 %v5095
  %v5178 = vunpack.c.h.b16 %v5095
  %v5179 = vunpack.c.l.b16 %v5096
  %v5180 = vunpack.c.h.b16 %v5096
  %v5181 = vunpack.c.l.b16 %v5097
  %v5182 = vunpack.c.h.b16 %v5097
  %v5183 = vunpack.c.l.b16 %v5098
  %v5184 = vunpack.c.h.b16 %v5098
  %v5185 = vunpack.c.l.b16 %v5099
  %v5186 = vunpack.c.h.b16 %v5099
  %v5187 = vunpack.c.l.b16 %v5100
  %v5188 = vunpack.c.h.b16 %v5100
  %v5189 = vunpack.c.l.b16 %v5101
  %v5190 = vunpack.c.h.b16 %v5101
  %v5191 = vunpack.c.l.b16 %v5102
  %v5192 = vunpack.c.h.b16 %v5102
  %v5193 = vunpack.c.l.b16 %v5103
  %v5194 = vunpack.c.h.b16 %v5103
  %v5195 = vunpack.c.l.b16 %v5104
  %v5196 = vunpack.c.h.b16 %v5104
  %v5197 = vunpack.c.l.b16 %v5105
  %v5198 = vunpack.c.h.b16 %v5105
  %v5199 = vunpack.c.l.b16 %v5106
  %v5200 = vunpack.c.h.b16 %v5106
  %v5201 = vunpack.c.l.b16 %v5107
  %v5202 = vunpack.c.h.b16 %v5107
  %v5203 = vunpack.c.l.b16 %v5108
  %v5204 = vunpack.c.h.b16 %v5108
  %v5205 = vunpack.c.l.b16 %v5109
  %v5206 = vunpack.c.h.b16 %v5109
  %v5207 = vunpack.c.l.b16 %v5110
  %v5208 = vunpack.c.h.b16 %v5110
  %v5209 = vunpack.c.l.b16 %v5111
  %v5210 = vunpack.c.h.b16 %v5111
  %v5211 = vunpack.c.l.b16 %v5112
  %v5212 = vunpack.c.h.b16 %v5112
  %v5213 = vunpack.c.l.b16 %v5113
  %v5214 = vunpack.c.h.b16 %v5113
  %v5215 = vunpack.c.l.b16 %v5114
  %v5216 = vunpack.c.h.b16 %v5114
  %v5217 = vunpack.c.l.b16 %v5115
  %v5218 = vunpack.c.h.b16 %v5115
  %v5219 = vunpack.c.l.b16 %v5116
  %v5220 = vunpack.c.h.b16 %v5116
  %v5221 = vunpack.c.l.b16 %v5117
  %v5222 = vunpack.c.h.b16 %v5117
  %v5223 = vunpack.c.l.b16 %v5118
  %v5224 = vunpack.c.h.b16 %v5118
  %v5225 = vunpack.c.l.b16 %v5119
  %v5226 = vunpack.c.h.b16 %v5119
  %v5227 = vunpack.c.l.b16 %v5120
  %v5228 = vunpack.c.h.b16 %v5120
  %v5229 = vpack.c.b16 %v5167, %v5165
  %v5230 = vpack.c.b16 %v5168, %v5166
  %v5231 = vpack.c.b16 %v5171, %v5169
  %v5232 = vpack.c.b16 %v5172, %v5170
  %v5233 = vpack.c.b16 %v5175, %v5173
  %v5234 = vpack.c.b16 %v5176, %v5174
  %v5235 = vpack.c.b16 %v5179, %v5177
  %v5236 = vpack.c.b16 %v5180, %v5178
  %v5237 = vpack.c.b16 %v5183, %v5181
  %v5238 = vpack.c.b16 %v5184, %v5182
  %v5239 = vpack.c.b16 %v5187, %v5185
  %v5240 = vpack.c.b16 %v5188, %v5186
  %v5241 = vpack.c.b16 %v5191, %v5189
  %v5242 = vpack.c.b16 %v5192, %v5190
  %v5243 = vpack.c.b16 %v5195, %v5193
  %v5244 = vpack.c.b16 %v5196, %v5194
  %v5245 = vpack.c.b16 %v5199, %v5197
  %v5246 = vpack.c.b16 %v5200, %v5198
  %v5247 = vpack.c.b16 %v5203, %v5201
  %v5248 = vpack.c.b16 %v5204, %v5202
  %v5249 = vpack.c.b16 %v5207, %v5205
  %v5250 = vpack.c.b16 %v5208, %v5206
  %v5251 = vpack.c.b16 %v5211, %v5209
  %v5252 = vpack.c.b16 %v5212, %v5210
  %v5253 = vpack.c.b16 %v5215, %v5213
  %v5254 = vpack.c.b16 %v5216, %v5214
  %v5255 = vpack.c.b16 %v5219, %v5217
  %v5256 = vpack.c.b16 %v5220, %v5218
  %v5257 = vpack.c.b16 %v5223, %v5221
  %v5258 = vpack.c.b16 %v5224, %v5222
  %v5259 = vpack.c.b16 %v5227, %v5225
  %v5260 = vpack.c.b16 %v5228, %v5226
  %5293 = vmatprep.subr.bf16.mxu0 %v5244
  %5294 = vmatpush1.bf16.msra.mxu0 %v5243
  %5295 = vmatprep.subr.bf16.mxu0 %v5242
  %5296 = vmatpush1.bf16.msra.mxu0 %v5241
  %5297 = vmatprep.subr.bf16.mxu0 %v5240
  %5298 = vmatpush1.bf16.msra.mxu0 %v5239
  %5299 = vmatprep.subr.bf16.mxu0 %v5238
  %5300 = vmatpush1.bf16.msra.mxu0 %v5237
  %5301 = vmatprep.subr.bf16.mxu0 %v5236
  %5302 = vmatpush1.bf16.msra.mxu0 %v5235
  %5303 = vmatprep.subr.bf16.mxu0 %v5234
  %5304 = vmatpush1.bf16.msra.mxu0 %v5233
  %5305 = vmatprep.subr.bf16.mxu0 %v5232
  %5306 = vmatpush1.bf16.msra.mxu0 %v5231
  %5307 = vmatprep.subr.bf16.mxu0 %v5230
  %5308 = vmatpush1.bf16.msra.mxu0 %v5229
  %5309 = vmatprep.subr.bf16.mxu0 %v5260
  %5310 = vmatpush2.bf16.msra.mxu0 %v5259
  %5311 = vmatprep.subr.bf16.mxu0 %v5258
  %5312 = vmatpush2.bf16.msra.mxu0 %v5257
  %5313 = vmatprep.subr.bf16.mxu0 %v5256
  %5314 = vmatpush2.bf16.msra.mxu0 %v5255
  %5315 = vmatprep.subr.bf16.mxu0 %v5254
  %5316 = vmatpush2.bf16.msra.mxu0 %v5253
  %5317 = vmatprep.subr.bf16.mxu0 %v5252
  %5318 = vmatpush2.bf16.msra.mxu0 %v5251
  %5319 = vmatprep.subr.bf16.mxu0 %v5250
  %5320 = vmatpush2.bf16.msra.mxu0 %v5249
  %5321 = vmatprep.subr.bf16.mxu0 %v5248
  %5322 = vmatpush2.bf16.msra.mxu0 %v5247
  %5323 = vmatprep.subr.bf16.mxu0 %v5246
  %5324 = vmatpush2.bf16.msra.mxu0 %v5245
  %5325 = vmatprep.mubr.bf16.mxu0 %v5082
  %5326 = vmatmul.mubr.bf16.gmra.mxu0 %v5081
  %v5327 = vpop.f32.mrf.mxu0
  %v5328 = vadd.f32 %v5126, %v5327
  %v5329 = vpop.f32.mrf.mxu0
  %v5330 = vadd.f32 %v5130, %v5329
  %v5331 = vpop.f32.mrf.mxu0
  %v5332 = vadd.f32 %v5126, %v5331
  %v5333 = vpop.f32.mrf.mxu0
  %v5334 = vadd.f32 %v5130, %v5333
  %5335 = vmatprep.mubr.bf16.mxu0 %v5084
  %5336 = vmatmul.mubr.bf16.gmra.mxu0 %v5083
  %v5337 = vpop.f32.mrf.mxu0
  %v5338 = vadd.f32 %v5126, %v5337
  %v5339 = vpop.f32.mrf.mxu0
  %v5340 = vadd.f32 %v5130, %v5339
  %v5341 = vpop.f32.mrf.mxu0
  %v5342 = vadd.f32 %v5126, %v5341
  %v5343 = vpop.f32.mrf.mxu0
  %v5344 = vadd.f32 %v5130, %v5343
  %5345 = vmatprep.mubr.bf16.mxu0 %v5086
  %5346 = vmatmul.mubr.bf16.gmra.mxu0 %v5085
  %v5347 = vpop.f32.mrf.mxu0
  %v5348 = vadd.f32 %v5126, %v5347
  %v5349 = vpop.f32.mrf.mxu0
  %v5350 = vadd.f32 %v5130, %v5349
  %v5351 = vpop.f32.mrf.mxu0
  %v5352 = vadd.f32 %v5126, %v5351
  %v5353 = vpop.f32.mrf.mxu0
  %v5354 = vadd.f32 %v5130, %v5353
  %5355 = vmatprep.mubr.bf16.mxu0 %v5088
  %5356 = vmatmul.mubr.bf16.gmra.mxu0 %v5087
  %v5357 = vpop.f32.mrf.mxu0
  %v5358 = vadd.f32 %v5126, %v5357
  %v5359 = vpop.f32.mrf.mxu0
  %v5360 = vadd.f32 %v5130, %v5359
  %v5361 = vpop.f32.mrf.mxu0
  %v5362 = vadd.f32 %v5126, %v5361
  %v5363 = vpop.f32.mrf.mxu0
  %v5364 = vadd.f32 %v5130, %v5363
  %5365 = vdwg.mxu0
  %v5366 = vmax.f32 %v5328, %v5338
  %v5367 = vmax.f32 %v5366, %v5348
  %v5368 = vmax.f32 %v5367, %v5358
  %v5369 = vmax.f32 %v5330, %v5340
  %v5370 = vmax.f32 %v5369, %v5350
  %v5371 = vmax.f32 %v5370, %v5360
  %v5372 = vmax.f32 %v5332, %v5342
  %v5373 = vmax.f32 %v5372, %v5352
  %v5374 = vmax.f32 %v5373, %v5362
  %v5375 = vmax.f32 %v5334, %v5344
  %v5376 = vmax.f32 %v5375, %v5354
  %v5377 = vmax.f32 %v5376, %v5364
  %v5378 = vld [vmem:[%s3] sm:$0xff]
  %v5379 = vld [vmem:[%s3 + $0x8] sm:$0xff]
  %v5380 = vunpack.c.l.bf16 %v5378
  %v5381 = vunpack.c.h.bf16 %v5378
  %v5382 = vunpack.c.l.bf16 %v5379
  %v5383 = vunpack.c.h.bf16 %v5379
  %v5384 = vadd.f32 %v5380, %v5368
  %v5385 = vadd.f32 %v5381, %v5371
  %v5386 = vadd.f32 %v5382, %v5374
  %v5387 = vadd.f32 %v5383, %v5377
  %v5388 = vpack.c.bf16 %v5374, %v5368
  %v5389 = vpack.c.bf16 %v5377, %v5371
  %v5390 = vpack.c.bf16 %v5386, %v5384
  %v5391 = vpack.c.bf16 %v5387, %v5385
  %v5392 = vld [vmem:[%s14] sm:$0xff]
  %v5393 = vld [vmem:[%s14 + $0x8] sm:$0xff]
  %v5394 = vld [vmem:[%s14 + $0x10] sm:$0xff]
  %v5395 = vld [vmem:[%s14 + $0x18] sm:$0xff]
  %v5396 = vld [vmem:[%s14 + $0x20] sm:$0xff]
  %v5397 = vld [vmem:[%s14 + $0x28] sm:$0xff]
  %v5398 = vld [vmem:[%s14 + $0x30] sm:$0xff]
  %v5399 = vld [vmem:[%s14 + $0x38] sm:$0xff]
  %v5400 = vld [vmem:[%s14 + $0x40] sm:$0xff]
  %v5401 = vld [vmem:[%s14 + $0x48] sm:$0xff]
  %v5402 = vld [vmem:[%s14 + $0x50] sm:$0xff]
  %v5403 = vld [vmem:[%s14 + $0x58] sm:$0xff]
  %v5404 = vld [vmem:[%s14 + $0x60] sm:$0xff]
  %v5405 = vld [vmem:[%s14 + $0x68] sm:$0xff]
  %v5406 = vld [vmem:[%s14 + $0x70] sm:$0xff]
  %v5407 = vld [vmem:[%s14 + $0x78] sm:$0xff]
  %v5408 = vld [vmem:[%s14 + $0x80] sm:$0xff]
  %v5409 = vld [vmem:[%s14 + $0x88] sm:$0xff]
  %v5410 = vld [vmem:[%s14 + $0x90] sm:$0xff]
  %v5411 = vld [vmem:[%s14 + $0x98] sm:$0xff]
  %v5412 = vld [vmem:[%s14 + $0xa0] sm:$0xff]
  %v5413 = vld [vmem:[%s14 + $0xa8] sm:$0xff]
  %v5414 = vld [vmem:[%s14 + $0xb0] sm:$0xff]
  %v5415 = vld [vmem:[%s14 + $0xb8] sm:$0xff]
  %v5416 = vld [vmem:[%s14 + $0xc0] sm:$0xff]
  %v5417 = vld [vmem:[%s14 + $0xc8] sm:$0xff]
  %v5418 = vld [vmem:[%s14 + $0xd0] sm:$0xff]
  %v5419 = vld [vmem:[%s14 + $0xd8] sm:$0xff]
  %v5420 = vld [vmem:[%s14 + $0xe0] sm:$0xff]
  %v5421 = vld [vmem:[%s14 + $0xe8] sm:$0xff]
  %v5422 = vld [vmem:[%s14 + $0xf0] sm:$0xff]
  %v5423 = vld [vmem:[%s14 + $0xf8] sm:$0xff]
  %v5424 = vld [vmem:[%s14 + $0x100] sm:$0xff]
  %v5425 = vld [vmem:[%s14 + $0x108] sm:$0xff]
  %v5426 = vld [vmem:[%s14 + $0x110] sm:$0xff]
  %v5427 = vld [vmem:[%s14 + $0x118] sm:$0xff]
  %v5428 = vld [vmem:[%s14 + $0x120] sm:$0xff]
  %v5429 = vld [vmem:[%s14 + $0x128] sm:$0xff]
  %v5430 = vld [vmem:[%s14 + $0x130] sm:$0xff]
  %v5431 = vld [vmem:[%s14 + $0x138] sm:$0xff]
  %v5432 = vld [vmem:[%s14 + $0x140] sm:$0xff]
  %v5433 = vld [vmem:[%s14 + $0x148] sm:$0xff]
  %v5434 = vld [vmem:[%s14 + $0x150] sm:$0xff]
  %v5435 = vld [vmem:[%s14 + $0x158] sm:$0xff]
  %v5436 = vld [vmem:[%s14 + $0x160] sm:$0xff]
  %v5437 = vld [vmem:[%s14 + $0x168] sm:$0xff]
  %v5438 = vld [vmem:[%s14 + $0x170] sm:$0xff]
  %v5439 = vld [vmem:[%s14 + $0x178] sm:$0xff]
  %v5440 = vld [vmem:[%s14 + $0x180] sm:$0xff]
  %v5441 = vld [vmem:[%s14 + $0x188] sm:$0xff]
  %v5442 = vld [vmem:[%s14 + $0x190] sm:$0xff]
  %v5443 = vld [vmem:[%s14 + $0x198] sm:$0xff]
  %v5444 = vld [vmem:[%s14 + $0x1a0] sm:$0xff]
  %v5445 = vld [vmem:[%s14 + $0x1a8] sm:$0xff]
  %v5446 = vld [vmem:[%s14 + $0x1b0] sm:$0xff]
  %v5447 = vld [vmem:[%s14 + $0x1b8] sm:$0xff]
  %v5448 = vld [vmem:[%s14 + $0x1c0] sm:$0xff]
  %v5449 = vld [vmem:[%s14 + $0x1c8] sm:$0xff]
  %v5450 = vld [vmem:[%s14 + $0x1d0] sm:$0xff]
  %v5451 = vld [vmem:[%s14 + $0x1d8] sm:$0xff]
  %v5452 = vld [vmem:[%s14 + $0x1e0] sm:$0xff]
  %v5453 = vld [vmem:[%s14 + $0x1e8] sm:$0xff]
  %v5454 = vld [vmem:[%s14 + $0x1f0] sm:$0xff]
  %v5455 = vld [vmem:[%s14 + $0x1f8] sm:$0xff]
  %v5456 = vld [vmem:[%s15] sm:$0x3]
  %v5458 = vlaneseq
  %v5459 = vshrl.u32 %v5458, 7
  %v5460 = vsub.s32 0, %v5459
  %v5461 = vrot.slane %v5456, %v5460
  %v5462 = vlaneseq
  %v5463 = vshrl.u32 %v5462, 7
  %v5464 = vsub.s32 1, %v5463
  %v5465 = vrot.slane %v5456, %v5464
  %v5532 = vunpack.c.l.b16 %v5392
  %v5533 = vunpack.c.h.b16 %v5392
  %v5534 = vunpack.c.l.b16 %v5393
  %v5535 = vunpack.c.h.b16 %v5393
  %v5536 = vunpack.c.l.b16 %v5394
  %v5537 = vunpack.c.h.b16 %v5394
  %v5538 = vunpack.c.l.b16 %v5395
  %v5539 = vunpack.c.h.b16 %v5395
  %v5540 = vunpack.c.l.b16 %v5396
  %v5541 = vunpack.c.h.b16 %v5396
  %v5542 = vunpack.c.l.b16 %v5397
  %v5543 = vunpack.c.h.b16 %v5397
  %v5544 = vunpack.c.l.b16 %v5398
  %v5545 = vunpack.c.h.b16 %v5398
  %v5546 = vunpack.c.l.b16 %v5399
  %v5547 = vunpack.c.h.b16 %v5399
  %v5548 = vunpack.c.l.b16 %v5400
  %v5549 = vunpack.c.h.b16 %v5400
  %v5550 = vunpack.c.l.b16 %v5401
  %v5551 = vunpack.c.h.b16 %v5401
  %v5552 = vunpack.c.l.b16 %v5402
  %v5553 = vunpack.c.h.b16 %v5402
  %v5554 = vunpack.c.l.b16 %v5403
  %v5555 = vunpack.c.h.b16 %v5403
  %v5556 = vunpack.c.l.b16 %v5404
  %v5557 = vunpack.c.h.b16 %v5404
  %v5558 = vunpack.c.l.b16 %v5405
  %v5559 = vunpack.c.h.b16 %v5405
  %v5560 = vunpack.c.l.b16 %v5406
  %v5561 = vunpack.c.h.b16 %v5406
  %v5562 = vunpack.c.l.b16 %v5407
  %v5563 = vunpack.c.h.b16 %v5407
  %v5564 = vunpack.c.l.b16 %v5408
  %v5565 = vunpack.c.h.b16 %v5408
  %v5566 = vunpack.c.l.b16 %v5409
  %v5567 = vunpack.c.h.b16 %v5409
  %v5568 = vunpack.c.l.b16 %v5410
  %v5569 = vunpack.c.h.b16 %v5410
  %v5570 = vunpack.c.l.b16 %v5411
  %v5571 = vunpack.c.h.b16 %v5411
  %v5572 = vunpack.c.l.b16 %v5412
  %v5573 = vunpack.c.h.b16 %v5412
  %v5574 = vunpack.c.l.b16 %v5413
  %v5575 = vunpack.c.h.b16 %v5413
  %v5576 = vunpack.c.l.b16 %v5414
  %v5577 = vunpack.c.h.b16 %v5414
  %v5578 = vunpack.c.l.b16 %v5415
  %v5579 = vunpack.c.h.b16 %v5415
  %v5580 = vunpack.c.l.b16 %v5416
  %v5581 = vunpack.c.h.b16 %v5416
  %v5582 = vunpack.c.l.b16 %v5417
  %v5583 = vunpack.c.h.b16 %v5417
  %v5584 = vunpack.c.l.b16 %v5418
  %v5585 = vunpack.c.h.b16 %v5418
  %v5586 = vunpack.c.l.b16 %v5419
  %v5587 = vunpack.c.h.b16 %v5419
  %v5588 = vunpack.c.l.b16 %v5420
  %v5589 = vunpack.c.h.b16 %v5420
  %v5590 = vunpack.c.l.b16 %v5421
  %v5591 = vunpack.c.h.b16 %v5421
  %v5592 = vunpack.c.l.b16 %v5422
  %v5593 = vunpack.c.h.b16 %v5422
  %v5594 = vunpack.c.l.b16 %v5423
  %v5595 = vunpack.c.h.b16 %v5423
  %v5596 = vunpack.c.l.b16 %v5424
  %v5597 = vunpack.c.h.b16 %v5424
  %v5598 = vunpack.c.l.b16 %v5425
  %v5599 = vunpack.c.h.b16 %v5425
  %v5600 = vunpack.c.l.b16 %v5426
  %v5601 = vunpack.c.h.b16 %v5426
  %v5602 = vunpack.c.l.b16 %v5427
  %v5603 = vunpack.c.h.b16 %v5427
  %v5604 = vunpack.c.l.b16 %v5428
  %v5605 = vunpack.c.h.b16 %v5428
  %v5606 = vunpack.c.l.b16 %v5429
  %v5607 = vunpack.c.h.b16 %v5429
  %v5608 = vunpack.c.l.b16 %v5430
  %v5609 = vunpack.c.h.b16 %v5430
  %v5610 = vunpack.c.l.b16 %v5431
  %v5611 = vunpack.c.h.b16 %v5431
  %v5612 = vunpack.c.l.b16 %v5432
  %v5613 = vunpack.c.h.b16 %v5432
  %v5614 = vunpack.c.l.b16 %v5433
  %v5615 = vunpack.c.h.b16 %v5433
  %v5616 = vunpack.c.l.b16 %v5434
  %v5617 = vunpack.c.h.b16 %v5434
  %v5618 = vunpack.c.l.b16 %v5435
  %v5619 = vunpack.c.h.b16 %v5435
  %v5620 = vunpack.c.l.b16 %v5436
  %v5621 = vunpack.c.h.b16 %v5436
  %v5622 = vunpack.c.l.b16 %v5437
  %v5623 = vunpack.c.h.b16 %v5437
  %v5624 = vunpack.c.l.b16 %v5438
  %v5625 = vunpack.c.h.b16 %v5438
  %v5626 = vunpack.c.l.b16 %v5439
  %v5627 = vunpack.c.h.b16 %v5439
  %v5628 = vunpack.c.l.b16 %v5440
  %v5629 = vunpack.c.h.b16 %v5440
  %v5630 = vunpack.c.l.b16 %v5441
  %v5631 = vunpack.c.h.b16 %v5441
  %v5632 = vunpack.c.l.b16 %v5442
  %v5633 = vunpack.c.h.b16 %v5442
  %v5634 = vunpack.c.l.b16 %v5443
  %v5635 = vunpack.c.h.b16 %v5443
  %v5636 = vunpack.c.l.b16 %v5444
  %v5637 = vunpack.c.h.b16 %v5444
  %v5638 = vunpack.c.l.b16 %v5445
  %v5639 = vunpack.c.h.b16 %v5445
  %v5640 = vunpack.c.l.b16 %v5446
  %v5641 = vunpack.c.h.b16 %v5446
  %v5642 = vunpack.c.l.b16 %v5447
  %v5643 = vunpack.c.h.b16 %v5447
  %v5644 = vunpack.c.l.b16 %v5448
  %v5645 = vunpack.c.h.b16 %v5448
  %v5646 = vunpack.c.l.b16 %v5449
  %v5647 = vunpack.c.h.b16 %v5449
  %v5648 = vunpack.c.l.b16 %v5450
  %v5649 = vunpack.c.h.b16 %v5450
  %v5650 = vunpack.c.l.b16 %v5451
  %v5651 = vunpack.c.h.b16 %v5451
  %v5652 = vunpack.c.l.b16 %v5452
  %v5653 = vunpack.c.h.b16 %v5452
  %v5654 = vunpack.c.l.b16 %v5453
  %v5655 = vunpack.c.h.b16 %v5453
  %v5656 = vunpack.c.l.b16 %v5454
  %v5657 = vunpack.c.h.b16 %v5454
  %v5658 = vunpack.c.l.b16 %v5455
  %v5659 = vunpack.c.h.b16 %v5455
  %v5660 = vpack.c.b16 %v5534, %v5532
  %v5661 = vpack.c.b16 %v5535, %v5533
  %v5662 = vpack.c.b16 %v5538, %v5536
  %v5663 = vpack.c.b16 %v5539, %v5537
  %v5664 = vpack.c.b16 %v5542, %v5540
  %v5665 = vpack.c.b16 %v5543, %v5541
  %v5666 = vpack.c.b16 %v5546, %v5544
  %v5667 = vpack.c.b16 %v5547, %v5545
  %v5668 = vpack.c.b16 %v5550, %v5548
  %v5669 = vpack.c.b16 %v5551, %v5549
  %v5670 = vpack.c.b16 %v5554, %v5552
  %v5671 = vpack.c.b16 %v5555, %v5553
  %v5672 = vpack.c.b16 %v5558, %v5556
  %v5673 = vpack.c.b16 %v5559, %v5557
  %v5674 = vpack.c.b16 %v5562, %v5560
  %v5675 = vpack.c.b16 %v5563, %v5561
  %v5676 = vpack.c.b16 %v5566, %v5564
  %v5677 = vpack.c.b16 %v5567, %v5565
  %v5678 = vpack.c.b16 %v5570, %v5568
  %v5679 = vpack.c.b16 %v5571, %v5569
  %v5680 = vpack.c.b16 %v5574, %v5572
  %v5681 = vpack.c.b16 %v5575, %v5573
  %v5682 = vpack.c.b16 %v5578, %v5576
  %v5683 = vpack.c.b16 %v5579, %v5577
  %v5684 = vpack.c.b16 %v5582, %v5580
  %v5685 = vpack.c.b16 %v5583, %v5581
  %v5686 = vpack.c.b16 %v5586, %v5584
  %v5687 = vpack.c.b16 %v5587, %v5585
  %v5688 = vpack.c.b16 %v5590, %v5588
  %v5689 = vpack.c.b16 %v5591, %v5589
  %v5690 = vpack.c.b16 %v5594, %v5592
  %v5691 = vpack.c.b16 %v5595, %v5593
  %v5692 = vpack.c.b16 %v5598, %v5596
  %v5693 = vpack.c.b16 %v5599, %v5597
  %v5694 = vpack.c.b16 %v5602, %v5600
  %v5695 = vpack.c.b16 %v5603, %v5601
  %v5696 = vpack.c.b16 %v5606, %v5604
  %v5697 = vpack.c.b16 %v5607, %v5605
  %v5698 = vpack.c.b16 %v5610, %v5608
  %v5699 = vpack.c.b16 %v5611, %v5609
  %v5700 = vpack.c.b16 %v5614, %v5612
  %v5701 = vpack.c.b16 %v5615, %v5613
  %v5702 = vpack.c.b16 %v5618, %v5616
  %v5703 = vpack.c.b16 %v5619, %v5617
  %v5704 = vpack.c.b16 %v5622, %v5620
  %v5705 = vpack.c.b16 %v5623, %v5621
  %v5706 = vpack.c.b16 %v5626, %v5624
  %v5707 = vpack.c.b16 %v5627, %v5625
  %v5708 = vpack.c.b16 %v5630, %v5628
  %v5709 = vpack.c.b16 %v5631, %v5629
  %v5710 = vpack.c.b16 %v5634, %v5632
  %v5711 = vpack.c.b16 %v5635, %v5633
  %v5712 = vpack.c.b16 %v5638, %v5636
  %v5713 = vpack.c.b16 %v5639, %v5637
  %v5714 = vpack.c.b16 %v5642, %v5640
  %v5715 = vpack.c.b16 %v5643, %v5641
  %v5716 = vpack.c.b16 %v5646, %v5644
  %v5717 = vpack.c.b16 %v5647, %v5645
  %v5718 = vpack.c.b16 %v5650, %v5648
  %v5719 = vpack.c.b16 %v5651, %v5649
  %v5720 = vpack.c.b16 %v5654, %v5652
  %v5721 = vpack.c.b16 %v5655, %v5653
  %v5722 = vpack.c.b16 %v5658, %v5656
  %v5723 = vpack.c.b16 %v5659, %v5657
  %5788 = vmatprep.subr.bf16.mxu0 %v5675
  %5789 = vmatpush1.bf16.msra.mxu0 %v5674
  %5790 = vmatprep.subr.bf16.mxu0 %v5673
  %5791 = vmatpush1.bf16.msra.mxu0 %v5672
  %5792 = vmatprep.subr.bf16.mxu0 %v5671
  %5793 = vmatpush1.bf16.msra.mxu0 %v5670
  %5794 = vmatprep.subr.bf16.mxu0 %v5669
  %5795 = vmatpush1.bf16.msra.mxu0 %v5668
  %5796 = vmatprep.subr.bf16.mxu0 %v5667
  %5797 = vmatpush1.bf16.msra.mxu0 %v5666
  %5798 = vmatprep.subr.bf16.mxu0 %v5665
  %5799 = vmatpush1.bf16.msra.mxu0 %v5664
  %5800 = vmatprep.subr.bf16.mxu0 %v5663
  %5801 = vmatpush1.bf16.msra.mxu0 %v5662
  %5802 = vmatprep.subr.bf16.mxu0 %v5661
  %5803 = vmatpush1.bf16.msra.mxu0 %v5660
  %5804 = vmatprep.subr.bf16.mxu0 %v5691
  %5805 = vmatpush2.bf16.msra.mxu0 %v5690
  %5806 = vmatprep.subr.bf16.mxu0 %v5689
  %5807 = vmatpush2.bf16.msra.mxu0 %v5688
  %5808 = vmatprep.subr.bf16.mxu0 %v5687
  %5809 = vmatpush2.bf16.msra.mxu0 %v5686
  %5810 = vmatprep.subr.bf16.mxu0 %v5685
  %5811 = vmatpush2.bf16.msra.mxu0 %v5684
  %5812 = vmatprep.subr.bf16.mxu0 %v5683
  %5813 = vmatpush2.bf16.msra.mxu0 %v5682
  %5814 = vmatprep.subr.bf16.mxu0 %v5681
  %5815 = vmatpush2.bf16.msra.mxu0 %v5680
  %5816 = vmatprep.subr.bf16.mxu0 %v5679
  %5817 = vmatpush2.bf16.msra.mxu0 %v5678
  %5818 = vmatprep.subr.bf16.mxu0 %v5677
  %5819 = vmatpush2.bf16.msra.mxu0 %v5676
  %5820 = vmatprep.mubr.bf16.mxu0 %v5389
  %5821 = vmatmul.mubr.bf16.gmra.mxu0 %v5388
  %v5822 = vpop.f32.mrf.mxu0
  %v5823 = vadd.f32 %v5461, %v5822
  %v5824 = vpop.f32.mrf.mxu0
  %v5825 = vadd.f32 %v5465, %v5824
  %v5826 = vpop.f32.mrf.mxu0
  %v5827 = vadd.f32 %v5461, %v5826
  %v5828 = vpop.f32.mrf.mxu0
  %v5829 = vadd.f32 %v5465, %v5828
  %5830 = vdwg.mxu0
  %5831 = vmatprep.subr.bf16.mxu0 %v5707
  %5832 = vmatpush1.bf16.msra.mxu0 %v5706
  %5833 = vmatprep.subr.bf16.mxu0 %v5705
  %5834 = vmatpush1.bf16.msra.mxu0 %v5704
  %5835 = vmatprep.subr.bf16.mxu0 %v5703
  %5836 = vmatpush1.bf16.msra.mxu0 %v5702
  %5837 = vmatprep.subr.bf16.mxu0 %v5701
  %5838 = vmatpush1.bf16.msra.mxu0 %v5700
  %5839 = vmatprep.subr.bf16.mxu0 %v5699
  %5840 = vmatpush1.bf16.msra.mxu0 %v5698
  %5841 = vmatprep.subr.bf16.mxu0 %v5697
  %5842 = vmatpush1.bf16.msra.mxu0 %v5696
  %5843 = vmatprep.subr.bf16.mxu0 %v5695
  %5844 = vmatpush1.bf16.msra.mxu0 %v5694
  %5845 = vmatprep.subr.bf16.mxu0 %v5693
  %5846 = vmatpush1.bf16.msra.mxu0 %v5692
  %5847 = vmatprep.subr.bf16.mxu0 %v5723
  %5848 = vmatpush2.bf16.msra.mxu0 %v5722
  %5849 = vmatprep.subr.bf16.mxu0 %v5721
  %5850 = vmatpush2.bf16.msra.mxu0 %v5720
  %5851 = vmatprep.subr.bf16.mxu0 %v5719
  %5852 = vmatpush2.bf16.msra.mxu0 %v5718
  %5853 = vmatprep.subr.bf16.mxu0 %v5717
  %5854 = vmatpush2.bf16.msra.mxu0 %v5716
  %5855 = vmatprep.subr.bf16.mxu0 %v5715
  %5856 = vmatpush2.bf16.msra.mxu0 %v5714
  %5857 = vmatprep.subr.bf16.mxu0 %v5713
  %5858 = vmatpush2.bf16.msra.mxu0 %v5712
  %5859 = vmatprep.subr.bf16.mxu0 %v5711
  %5860 = vmatpush2.bf16.msra.mxu0 %v5710
  %5861 = vmatprep.subr.bf16.mxu0 %v5709
  %5862 = vmatpush2.bf16.msra.mxu0 %v5708
  %5863 = vmatprep.mubr.bf16.mxu0 %v5391
  %5864 = vmatmul.mubr.bf16.gmra.mxu0 %v5390
  %v5865 = vpop.f32.mrf.mxu0
  %v5866 = vadd.f32 %v5823, %v5865
  %v5867 = vpop.f32.mrf.mxu0
  %v5868 = vadd.f32 %v5825, %v5867
  %v5869 = vpop.f32.mrf.mxu0
  %v5870 = vadd.f32 %v5827, %v5869
  %v5871 = vpop.f32.mrf.mxu0
  %v5872 = vadd.f32 %v5829, %v5871
  %5873 = vdwg.mxu0
  %v5874 = vadd.f32 %v3601, %v5037
  %v5875 = vadd.f32 %v3602, %v5038
  %v5876 = vadd.f32 %v3603, %v5039
  %v5877 = vadd.f32 %v3604, %v5040
  %v5878 = vadd.f32 %v5874, %v5866
  %v5879 = vadd.f32 %v5875, %v5868
  %v5880 = vadd.f32 %v5876, %v5870
  %v5881 = vadd.f32 %v5877, %v5872
  %5882 = vst [vmem:[%s16] sm:$0xff] %v5878
  %5883 = vst [vmem:[%s16 + $0x8] sm:$0xff] %v5879
  %5884 = vst [vmem:[%s16 + $0x10] sm:$0xff] %v5880
  %5885 = vst [vmem:[%s16 + $0x18] sm:$0xff] %v5881
  // Predicated region
  $region66: #{fussion_forward.1} parent=0 // pred_check
    _
  $region67: #{fussion_forward.1} parent=0 // pred_check_branch
    %5887 = sbr.rel (0) target = $region69
  $region68: #{fussion_forward.1} parent=0 // pred_region
    _
  $region69: #{fussion_forward.1} parent=0 // pred_fallthru
    _
  // Predicated region
  $region70: #{fussion_forward.1} parent=0 // pred_check
    _
  $region71: #{fussion_forward.1} parent=0 // pred_check_branch
    %5889 = sbr.rel (0) target = $region73
  $region72: #{fussion_forward.1} parent=0 // pred_region
    _
  $region73: #{fussion_forward.1} parent=0 // pred_fallthru
    _

</llo_original>
